<compile_context>
chip_gen: v7x
topology: tpu7x:2x2x1
jax: 0.10.0
libtpu: 0.0.40
codegen_flags: <defaults>
</compile_context>

<pallas_src>
import functools
import math

import jax
import jax.numpy as jnp
from jax.experimental import pallas as pl
from jax.experimental.pallas import tpu as pltpu


# ----------------------------------------------------------------------------
# small helpers shared by kernel + reference
# ----------------------------------------------------------------------------
def _layer_norm(x, w, b, eps=1e-5):
    mu = jnp.mean(x, axis=-1, keepdims=True)
    var = jnp.mean(jnp.square(x - mu), axis=-1, keepdims=True)
    return (x - mu) * jax.lax.rsqrt(var + eps) * w + b


def _gelu(x):
    # TODO(synk): PyTorch nn.GELU() defaults to the exact erf formulation; the
    # tanh approximation is used for portable Mosaic lowering (max |diff| ~3e-3).
    return jax.nn.gelu(x, approximate=True)


# ----------------------------------------------------------------------------
# Fused Pallas kernel: [MixerBlock]*num_blocks + CombiningBlock, `bsub` batch
# elements per grid step.  Per-block weights are stacked on a leading axis and
# indexed with a *static* Python loop (the block structure is compile-time).
# ----------------------------------------------------------------------------
def fvtr_stage_kernel(x_ref, mask_ref,
                      ln1_w_ref, ln1_b_ref, wqkv_ref, bqkv_ref,
                      w_op_ref, b_op_ref,
                      ln2_w_ref, ln2_b_ref, w1_ref, w2_ref,
                      comb_w_ref, comb_b_ref,
                      out_ref, *, num_heads, permutation, height, bsub):
    bf16 = jnp.bfloat16
    _, S, C = x_ref.shape
    hd = C // num_heads
    M = bsub * S

    x = x_ref[...].reshape(M, C)                        # (M, C) f32, stays on-chip

    for blk, local in enumerate(permutation):           # static unroll over blocks
        # ---- MixerBlock (prelayer_norm=True) ----
        x1 = _layer_norm(x, ln1_w_ref[blk], ln1_b_ref[blk])

        # fused QKV projection: (M, C) @ (C, 3C); 1/sqrt(hd) folded into Q
        qkv = jnp.dot(x1.astype(bf16), wqkv_ref[blk],
                      preferred_element_type=jnp.float32) + bqkv_ref[blk]
        qkv_b = qkv.astype(bf16)                        # single cast, sliced below

        # multi-head self-attention; (S,S) scores per (batch-element, head)
        rows = []
        for b in range(bsub):
            r0 = b * S
            heads = []
            for h in range(num_heads):
                qh = qkv_b[r0:r0 + S, h * hd:(h + 1) * hd]
                kh = qkv_b[r0:r0 + S, C + h * hd:C + (h + 1) * hd]
                vh = qkv_b[r0:r0 + S, 2 * C + h * hd:2 * C + (h + 1) * hd]
                scores = jax.lax.dot_general(
                    qh, kh, (((1,), (1,)), ((), ())),
                    preferred_element_type=jnp.float32)          # (S, S) f32
                # LocalMixer ignores the mask; GlobalMixer applies it (static).
                if not local:
                    scores = scores + mask_ref[...]
                mx = jnp.max(scores, axis=-1, keepdims=True)
                e = jnp.exp(scores - mx)
                p = e * pl.reciprocal(jnp.sum(e, axis=-1, keepdims=True),
                                      approx=True)
                heads.append(jnp.dot(p.astype(bf16), vh,
                                     preferred_element_type=jnp.float32))  # (S, hd)
            rows.append(jnp.concatenate(heads, axis=-1))          # (S, C) f32
        attn = rows[0] if bsub == 1 else jnp.concatenate(rows, axis=0)

        # attention out-proj and MixerLayer.project folded on host (w_op = wo@wproj)
        mix = jnp.dot(attn.astype(bf16), w_op_ref[blk],
                      preferred_element_type=jnp.float32) + b_op_ref[blk]
        x2 = mix + x1                                    # residual onto normed x1

        # MLP branch
        x3 = _layer_norm(x2, ln2_w_ref[blk], ln2_b_ref[blk])
        h1 = _gelu(jnp.dot(x3.astype(bf16), w1_ref[blk],
                           preferred_element_type=jnp.float32))
        x = jnp.dot(h1.astype(bf16), w2_ref[blk],
                    preferred_element_type=jnp.float32) + x3

    # ---- CombiningBlock: mean over H -> Linear -> GELU ----
    Wd = S // height
    pooled = jnp.mean(x.reshape(bsub * Wd, height, C), axis=1)    # (bsub*W, C)
    y = jnp.dot(pooled.astype(bf16), comb_w_ref[...],
                preferred_element_type=jnp.float32) + comb_b_ref[...]
    out_ref[...] = _gelu(y).reshape(bsub, Wd, -1)                 # lane-dense (…,128)


# ----------------------------------------------------------------------------
# host-side parameter prep: fold scale into Q, fuse QKV, fold wo@wproj,
# stack per-block weights, cast matmul weights to bf16 (biases / LN stay f32)
# ----------------------------------------------------------------------------
_PARAM_ORDER = ("ln1_w", "ln1_b", "wqkv", "bqkv", "w_op", "b_op",
                "ln2_w", "ln2_b", "w1", "w2", "comb_w", "comb_b")


def prepare_params(block_params, comb_params, num_heads):
    C = block_params[0]["wq"].shape[0]
    hd = C // num_heads
    scale = 1.0 / math.sqrt(hd)
    bf16 = jnp.bfloat16
    hi = jax.lax.Precision.HIGHEST

    def one(p):
        wqkv = jnp.concatenate([p["wq"] * scale, p["wk"], p["wv"]], axis=1)
        bqkv = jnp.concatenate([p["bq"] * scale, p["bk"], p["bv"]], axis=1)
        # fold attention out-projection and MixerLayer.project into one matmul
        w_op = jnp.dot(p["wo"], p["wproj"], precision=hi)          # (C, C)
        b_op = jnp.dot(p["bo"], p["wproj"], precision=hi)          # (1, C)
        return dict(
            ln1_w=p["ln1_w"], ln1_b=p["ln1_b"],
            wqkv=wqkv.astype(bf16), bqkv=bqkv,
            w_op=w_op.astype(bf16), b_op=b_op,
            ln2_w=p["ln2_w"], ln2_b=p["ln2_b"],
            w1=p["w1"].astype(bf16), w2=p["w2"].astype(bf16),
        )

    per = [one(p) for p in block_params]
    stacked = {k: jnp.stack([pp[k] for pp in per], axis=0) for k in per[0]}
    stacked["comb_w"] = comb_params["w"].astype(bf16)
    stacked["comb_b"] = comb_params["b"]
    return stacked


# ----------------------------------------------------------------------------
# pallas_call wrapper
# ----------------------------------------------------------------------------
def _full_spec(shape):
    nd = len(shape)
    return pl.BlockSpec(shape, lambda g, _n=nd: (0,) * _n)


def _choose_bsub(B):
    # Fold batch into the GEMM M dimension to amortize per-grid-step and MXU
    # fill/drain overhead, but keep >= 2 grid steps whenever B >= 2 so both
    # v7x TensorCores get work (grid axis is "parallel").
    if B <= 2:
        return 1
    for cand in range(B // 2, 0, -1):
        if B % cand == 0:
            return cand
    return 1


def fvtr_stage_forward(x_nchw, attention_mask, pp, permutation, num_heads):
    B, C, H, W = x_nchw.shape
    S = W * H
    # x.transpose(-1, -3).reshape(-1, W*H, C)
    x_seq = jnp.transpose(x_nchw, (0, 3, 2, 1)).reshape(B, S, C)

    bsub = _choose_bsub(B)
    grid = (B // bsub,)

    params = [pp[k] for k in _PARAM_ORDER]
    O = pp["comb_w"].shape[1]

    in_specs = ([pl.BlockSpec((bsub, S, C), lambda g: (g, 0, 0)),
                 _full_spec(attention_mask.shape)]
                + [_full_spec(w.shape) for w in params])

    kernel = functools.partial(
        fvtr_stage_kernel, num_heads=num_heads,
        permutation=tuple(bool(p) for p in permutation),
        height=H, bsub=bsub)

    return pl.pallas_call(
        kernel,
        out_shape=jax.ShapeDtypeStruct((B, W, O), jnp.float32),
        grid=grid,
        in_specs=in_specs,
        out_specs=pl.BlockSpec((bsub, W, O), lambda g: (g, 0, 0)),
        compiler_params=pltpu.CompilerParams(dimension_semantics=("parallel",)),
    )(x_seq, attention_mask, *params)


# ----------------------------------------------------------------------------
# pure-JAX reference (same math, same prepped bf16 weights) for validation
# ----------------------------------------------------------------------------
def _mm(a, b):
    return jnp.dot(a.astype(jnp.bfloat16), b, preferred_element_type=jnp.float32)


def fvtr_stage_ref(x_nchw, attention_mask, pp, permutation, num_heads):
    B, C, H, W = x_nchw.shape
    x = jnp.transpose(x_nchw, (0, 3, 2, 1)).reshape(B, W * H, C)
    hd = C // num_heads
    for blk, local in enumerate(permutation):
        x1 = _layer_norm(x, pp["ln1_w"][blk], pp["ln1_b"][blk])
        qkv = _mm(x1, pp["wqkv"][blk]) + pp["bqkv"][blk]
        q, k, v = qkv[..., :C], qkv[..., C:2 * C], qkv[..., 2 * C:]
        heads = []
        for h in range(num_heads):
            sl = slice(h * hd, (h + 1) * hd)
            s = jnp.einsum("bqd,bkd->bqk",
                           q[..., sl].astype(jnp.bfloat16),
                           k[..., sl].astype(jnp.bfloat16),
                           preferred_element_type=jnp.float32)
            if not local:
                s = s + attention_mask
            p = jax.nn.softmax(s, axis=-1)
            heads.append(jnp.einsum("bqk,bkd->bqd",
                                    p.astype(jnp.bfloat16),
                                    v[..., sl].astype(jnp.bfloat16),
                                    preferred_element_type=jnp.float32))
        attn = jnp.concatenate(heads, axis=-1)
        x2 = _mm(attn, pp["w_op"][blk]) + pp["b_op"][blk] + x1
        x3 = _layer_norm(x2, pp["ln2_w"][blk], pp["ln2_b"][blk])
        x = _mm(_gelu(_mm(x3, pp["w1"][blk])), pp["w2"][blk]) + x3
    pooled = jnp.mean(x.reshape(B, W, H, C), axis=2)          # (B, W, C)
    return _gelu(_mm(pooled, pp["comb_w"]) + pp["comb_b"])


# ----------------------------------------------------------------------------
# deterministic parameter init
# ----------------------------------------------------------------------------
def init_block_params(key, C):
    ks = jax.random.split(key, 10)
    s = 0.05
    f32 = jnp.float32
    return {
        "ln1_w": jnp.ones((1, C), f32), "ln1_b": jnp.zeros((1, C), f32),
        "wq": s * jax.random.normal(ks[0], (C, C), f32),
        "wk": s * jax.random.normal(ks[1], (C, C), f32),
        "wv": s * jax.random.normal(ks[2], (C, C), f32),
        "bq": 0.01 * jax.random.normal(ks[3], (1, C), f32),
        "bk": 0.01 * jax.random.normal(ks[4], (1, C), f32),
        "bv": 0.01 * jax.random.normal(ks[5], (1, C), f32),
        "wo": s * jax.random.normal(ks[6], (C, C), f32),
        "bo": 0.01 * jax.random.normal(ks[7], (1, C), f32),
        "wproj": s * jax.random.normal(ks[8], (C, C), f32),
        "ln2_w": jnp.ones((1, C), f32), "ln2_b": jnp.zeros((1, C), f32),
        "w1": s * jax.random.normal(ks[9], (C, 4 * C), f32),
        "w2": s * jax.random.normal(jax.random.fold_in(key, 99), (4 * C, C), f32),
    }


if __name__ == "__main__":
    # FVTRStage(input_size=64, output_size=128, num_attention_head=2,
    #           permutation=[True, False], combine=True)
    B, C, H, W = 2, 64, 8, 16
    num_heads = 2
    output_size = 128
    permutation = [True, False]        # [LocalMixer, GlobalMixer]
    S = W * H

    key = jax.random.PRNGKey(0)
    k_x, k_comb, k_blocks = jax.random.split(key, 3)

    x = jax.random.normal(k_x, (B, C, H, W), jnp.float32)

    # additive float attention mask (S, S): banded neighborhood window
    idx = jnp.arange(S)
    attention_mask = jnp.where(
        jnp.abs(idx[:, None] - idx[None, :]) <= H, 0.0, -1e9).astype(jnp.float32)

    block_keys = jax.random.split(k_blocks, len(permutation))
    block_params = [init_block_params(bk, C) for bk in block_keys]

    kw, kb = jax.random.split(k_comb)
    comb_params = {
        "w": 0.05 * jax.random.normal(kw, (C, output_size), jnp.float32),
        "b": 0.01 * jax.random.normal(kb, (1, output_size), jnp.float32),
    }

    pp = prepare_params(block_params, comb_params, num_heads)

    out = fvtr_stage_forward(x, attention_mask, pp, permutation, num_heads)
    out = jax.block_until_ready(out)

    ref = fvtr_stage_ref(x, attention_mask, pp, permutation, num_heads)
    err = float(jnp.max(jnp.abs(out - ref)))
    assert out.shape == (B, W, output_size), out.shape
    assert err < 2e-2, f"kernel/reference mismatch: max abs err = {err}"

    print("KERNEL_OK")
</pallas_src>

<mosaic_0001>
module attributes {stable_mosaic.version = 11 : i64} {
  func.func @fvtr_stage_kernel(%arg0: i32, %arg1: memref<1x128x64xf32, #tpu.memory_space<vmem>>, %arg2: memref<128x128xf32, #tpu.memory_space<vmem>>, %arg3: memref<2x1x64xf32, #tpu.memory_space<vmem>>, %arg4: memref<2x1x64xf32, #tpu.memory_space<vmem>>, %arg5: memref<2x64x192xbf16, #tpu.memory_space<vmem>>, %arg6: memref<2x1x192xf32, #tpu.memory_space<vmem>>, %arg7: memref<2x64x64xbf16, #tpu.memory_space<vmem>>, %arg8: memref<2x1x64xf32, #tpu.memory_space<vmem>>, %arg9: memref<2x1x64xf32, #tpu.memory_space<vmem>>, %arg10: memref<2x1x64xf32, #tpu.memory_space<vmem>>, %arg11: memref<2x64x256xbf16, #tpu.memory_space<vmem>>, %arg12: memref<2x256x64xbf16, #tpu.memory_space<vmem>>, %arg13: memref<64x128xbf16, #tpu.memory_space<vmem>>, %arg14: memref<1x128xf32, #tpu.memory_space<vmem>>, %arg15: memref<1x16x128xf32, #tpu.memory_space<vmem>>) attributes {dimension_semantics = [#tpu.dimension_semantics<parallel>], iteration_bounds = array<i64: 2>, scalar_prefetch = 0 : i64, scratch_operands = 0 : i64, tpu.core_type = #tpu.core_type<tc>, window_params = [{transform_indices = @transform_0, window_bounds = array<i64: 1, 128, 64>}, {pipeline_mode = #tpu.pipeline_mode<synchronous>, transform_indices = @transform_1, window_bounds = array<i64: 128, 128>}, {pipeline_mode = #tpu.pipeline_mode<synchronous>, transform_indices = @transform_2, window_bounds = array<i64: 2, 1, 64>}, {pipeline_mode = #tpu.pipeline_mode<synchronous>, transform_indices = @transform_3, window_bounds = array<i64: 2, 1, 64>}, {pipeline_mode = #tpu.pipeline_mode<synchronous>, transform_indices = @transform_4, window_bounds = array<i64: 2, 64, 192>}, {pipeline_mode = #tpu.pipeline_mode<synchronous>, transform_indices = @transform_5, window_bounds = array<i64: 2, 1, 192>}, {pipeline_mode = #tpu.pipeline_mode<synchronous>, transform_indices = @transform_6, window_bounds = array<i64: 2, 64, 64>}, {pipeline_mode = #tpu.pipeline_mode<synchronous>, transform_indices = @transform_7, window_bounds = array<i64: 2, 1, 64>}, {pipeline_mode = #tpu.pipeline_mode<synchronous>, transform_indices = @transform_8, window_bounds = array<i64: 2, 1, 64>}, {pipeline_mode = #tpu.pipeline_mode<synchronous>, transform_indices = @transform_9, window_bounds = array<i64: 2, 1, 64>}, {pipeline_mode = #tpu.pipeline_mode<synchronous>, transform_indices = @transform_10, window_bounds = array<i64: 2, 64, 256>}, {pipeline_mode = #tpu.pipeline_mode<synchronous>, transform_indices = @transform_11, window_bounds = array<i64: 2, 256, 64>}, {pipeline_mode = #tpu.pipeline_mode<synchronous>, transform_indices = @transform_12, window_bounds = array<i64: 64, 128>}, {pipeline_mode = #tpu.pipeline_mode<synchronous>, transform_indices = @transform_13, window_bounds = array<i64: 1, 128>}, {transform_indices = @transform_14, window_bounds = array<i64: 1, 16, 128>}]} {
    %c0 = arith.constant 0 : index
    %c0_0 = arith.constant 0 : index
    %c0_1 = arith.constant 0 : index
    %0 = vector.load %arg1[%c0, %c0_0, %c0_1] : memref<1x128x64xf32, #tpu.memory_space<vmem>>, vector<1x128x64xf32>
    %1 = vector.shape_cast %0 : vector<1x128x64xf32> to vector<128x64xf32>
    %c0_2 = arith.constant 0 : index
    %c0_3 = arith.constant 0 : index
    %c0_4 = arith.constant 0 : index
    %2 = vector.load %arg3[%c0_2, %c0_3, %c0_4] : memref<2x1x64xf32, #tpu.memory_space<vmem>>, vector<1x1x64xf32>
    %3 = vector.shape_cast %2 : vector<1x1x64xf32> to vector<1x64xf32>
    %c0_5 = arith.constant 0 : index
    %c0_6 = arith.constant 0 : index
    %c0_7 = arith.constant 0 : index
    %4 = vector.load %arg4[%c0_5, %c0_6, %c0_7] : memref<2x1x64xf32, #tpu.memory_space<vmem>>, vector<1x1x64xf32>
    %5 = vector.shape_cast %4 : vector<1x1x64xf32> to vector<1x64xf32>
    %cst = arith.constant dense<0.000000e+00> : vector<128xf32>
    %6 = vector.multi_reduction <add>, %1, %cst [1] : vector<128x64xf32> to vector<128xf32>
    %7 = vector.shape_cast %6 : vector<128xf32> to vector<128x1xf32>
    %cst_8 = arith.constant 6.400000e+01 : f32
    %8 = vector.broadcast %cst_8 : f32 to vector<128x1xf32>
    %9 = arith.divf %7, %8 : vector<128x1xf32>
    %10 = vector.broadcast %9 : vector<128x1xf32> to vector<128x64xf32>
    %11 = arith.subf %1, %10 : vector<128x64xf32>
    %12 = arith.mulf %11, %11 : vector<128x64xf32>
    %cst_9 = arith.constant dense<0.000000e+00> : vector<128xf32>
    %13 = vector.multi_reduction <add>, %12, %cst_9 [1] : vector<128x64xf32> to vector<128xf32>
    %14 = vector.shape_cast %13 : vector<128xf32> to vector<128x1xf32>
    %cst_10 = arith.constant 6.400000e+01 : f32
    %15 = vector.broadcast %cst_10 : f32 to vector<128x1xf32>
    %16 = arith.divf %14, %15 : vector<128x1xf32>
    %17 = vector.broadcast %9 : vector<128x1xf32> to vector<128x64xf32>
    %18 = arith.subf %1, %17 : vector<128x64xf32>
    %cst_11 = arith.constant 9.99999974E-6 : f32
    %19 = vector.broadcast %cst_11 : f32 to vector<128x1xf32>
    %20 = arith.addf %16, %19 : vector<128x1xf32>
    %21 = math.rsqrt %20 : vector<128x1xf32>
    %22 = vector.broadcast %21 : vector<128x1xf32> to vector<128x64xf32>
    %23 = arith.mulf %18, %22 : vector<128x64xf32>
    %24 = vector.broadcast %3 : vector<1x64xf32> to vector<128x64xf32>
    %25 = arith.mulf %23, %24 : vector<128x64xf32>
    %26 = vector.broadcast %5 : vector<1x64xf32> to vector<128x64xf32>
    %27 = arith.addf %25, %26 : vector<128x64xf32>
    %28 = arith.truncf %27 : vector<128x64xf32> to vector<128x64xbf16>
    %c0_12 = arith.constant 0 : index
    %c0_13 = arith.constant 0 : index
    %c0_14 = arith.constant 0 : index
    %29 = vector.load %arg5[%c0_12, %c0_13, %c0_14] : memref<2x64x192xbf16, #tpu.memory_space<vmem>>, vector<1x64x192xbf16>
    %30 = vector.shape_cast %29 : vector<1x64x192xbf16> to vector<64x192xbf16>
    %cst_15 = arith.constant dense<0.000000e+00> : vector<128x192xf32>
    %31 = tpu.matmul %28, %30, %cst_15 {dimension_numbers = #tpu.dot_dimension_numbers<[1], [0], [0], [1], [0, 0, 1, 1], [], []>} : vector<128x64xbf16>, vector<64x192xbf16>, vector<128x192xf32> -> vector<128x192xf32>
    %c0_16 = arith.constant 0 : index
    %c0_17 = arith.constant 0 : index
    %c0_18 = arith.constant 0 : index
    %32 = vector.load %arg6[%c0_16, %c0_17, %c0_18] : memref<2x1x192xf32, #tpu.memory_space<vmem>>, vector<1x1x192xf32>
    %33 = vector.shape_cast %32 : vector<1x1x192xf32> to vector<1x192xf32>
    %34 = vector.broadcast %33 : vector<1x192xf32> to vector<128x192xf32>
    %35 = arith.addf %31, %34 : vector<128x192xf32>
    %36 = arith.truncf %35 : vector<128x192xf32> to vector<128x192xbf16>
    %37 = vector.extract_strided_slice %36 {offsets = [0, 0], sizes = [128, 32], strides = [1, 1]} : vector<128x192xbf16> to vector<128x32xbf16>
    %38 = vector.extract_strided_slice %36 {offsets = [0, 64], sizes = [128, 32], strides = [1, 1]} : vector<128x192xbf16> to vector<128x32xbf16>
    %39 = vector.extract_strided_slice %36 {offsets = [0, 128], sizes = [128, 32], strides = [1, 1]} : vector<128x192xbf16> to vector<128x32xbf16>
    %cst_19 = arith.constant dense<0.000000e+00> : vector<128x128xf32>
    %40 = tpu.matmul %37, %38, %cst_19 {dimension_numbers = #tpu.dot_dimension_numbers<[1], [1], [0], [0], [0, 0, 1, 0], [], []>} : vector<128x32xbf16>, vector<128x32xbf16>, vector<128x128xf32> -> vector<128x128xf32>
    %cst_20 = arith.constant dense<0xFF800000> : vector<128xf32>
    %41 = vector.multi_reduction <maximumf>, %40, %cst_20 [1] : vector<128x128xf32> to vector<128xf32>
    %42 = vector.shape_cast %41 : vector<128xf32> to vector<128x1xf32>
    %43 = vector.broadcast %42 : vector<128x1xf32> to vector<128x128xf32>
    %44 = arith.subf %40, %43 : vector<128x128xf32>
    %45 = math.exp %44 : vector<128x128xf32>
    %cst_21 = arith.constant dense<0.000000e+00> : vector<128xf32>
    %46 = vector.multi_reduction <add>, %45, %cst_21 [1] : vector<128x128xf32> to vector<128xf32>
    %47 = vector.shape_cast %46 : vector<128xf32> to vector<128x1xf32>
    %48 = tpu.reciprocal %47 {approx = true} : vector<128x1xf32> -> vector<128x1xf32>
    %49 = vector.broadcast %48 : vector<128x1xf32> to vector<128x128xf32>
    %50 = arith.mulf %45, %49 : vector<128x128xf32>
    %51 = arith.truncf %50 : vector<128x128xf32> to vector<128x128xbf16>
    %cst_22 = arith.constant dense<0.000000e+00> : vector<128x32xf32>
    %52 = tpu.matmul %51, %39, %cst_22 {dimension_numbers = #tpu.dot_dimension_numbers<[1], [0], [0], [1], [0, 0, 1, 1], [], []>} : vector<128x128xbf16>, vector<128x32xbf16>, vector<128x32xf32> -> vector<128x32xf32>
    %53 = vector.extract_strided_slice %36 {offsets = [0, 32], sizes = [128, 32], strides = [1, 1]} : vector<128x192xbf16> to vector<128x32xbf16>
    %54 = vector.extract_strided_slice %36 {offsets = [0, 96], sizes = [128, 32], strides = [1, 1]} : vector<128x192xbf16> to vector<128x32xbf16>
    %55 = vector.extract_strided_slice %36 {offsets = [0, 160], sizes = [128, 32], strides = [1, 1]} : vector<128x192xbf16> to vector<128x32xbf16>
    %cst_23 = arith.constant dense<0.000000e+00> : vector<128x128xf32>
    %56 = tpu.matmul %53, %54, %cst_23 {dimension_numbers = #tpu.dot_dimension_numbers<[1], [1], [0], [0], [0, 0, 1, 0], [], []>} : vector<128x32xbf16>, vector<128x32xbf16>, vector<128x128xf32> -> vector<128x128xf32>
    %cst_24 = arith.constant dense<0xFF800000> : vector<128xf32>
    %57 = vector.multi_reduction <maximumf>, %56, %cst_24 [1] : vector<128x128xf32> to vector<128xf32>
    %58 = vector.shape_cast %57 : vector<128xf32> to vector<128x1xf32>
    %59 = vector.broadcast %58 : vector<128x1xf32> to vector<128x128xf32>
    %60 = arith.subf %56, %59 : vector<128x128xf32>
    %61 = math.exp %60 : vector<128x128xf32>
    %cst_25 = arith.constant dense<0.000000e+00> : vector<128xf32>
    %62 = vector.multi_reduction <add>, %61, %cst_25 [1] : vector<128x128xf32> to vector<128xf32>
    %63 = vector.shape_cast %62 : vector<128xf32> to vector<128x1xf32>
    %64 = tpu.reciprocal %63 {approx = true} : vector<128x1xf32> -> vector<128x1xf32>
    %65 = vector.broadcast %64 : vector<128x1xf32> to vector<128x128xf32>
    %66 = arith.mulf %61, %65 : vector<128x128xf32>
    %67 = arith.truncf %66 : vector<128x128xf32> to vector<128x128xbf16>
    %cst_26 = arith.constant dense<0.000000e+00> : vector<128x32xf32>
    %68 = tpu.matmul %67, %55, %cst_26 {dimension_numbers = #tpu.dot_dimension_numbers<[1], [0], [0], [1], [0, 0, 1, 1], [], []>} : vector<128x128xbf16>, vector<128x32xbf16>, vector<128x32xf32> -> vector<128x32xf32>
    %69 = tpu.concatenate %52, %68 in 1 : vector<128x32xf32>, vector<128x32xf32> -> vector<128x64xf32>
    %70 = arith.truncf %69 : vector<128x64xf32> to vector<128x64xbf16>
    %c0_27 = arith.constant 0 : index
    %c0_28 = arith.constant 0 : index
    %c0_29 = arith.constant 0 : index
    %71 = vector.load %arg7[%c0_27, %c0_28, %c0_29] : memref<2x64x64xbf16, #tpu.memory_space<vmem>>, vector<1x64x64xbf16>
    %72 = vector.shape_cast %71 : vector<1x64x64xbf16> to vector<64x64xbf16>
    %cst_30 = arith.constant dense<0.000000e+00> : vector<128x64xf32>
    %73 = tpu.matmul %70, %72, %cst_30 {dimension_numbers = #tpu.dot_dimension_numbers<[1], [0], [0], [1], [0, 0, 1, 1], [], []>} : vector<128x64xbf16>, vector<64x64xbf16>, vector<128x64xf32> -> vector<128x64xf32>
    %c0_31 = arith.constant 0 : index
    %c0_32 = arith.constant 0 : index
    %c0_33 = arith.constant 0 : index
    %74 = vector.load %arg8[%c0_31, %c0_32, %c0_33] : memref<2x1x64xf32, #tpu.memory_space<vmem>>, vector<1x1x64xf32>
    %75 = vector.shape_cast %74 : vector<1x1x64xf32> to vector<1x64xf32>
    %76 = vector.broadcast %75 : vector<1x64xf32> to vector<128x64xf32>
    %77 = arith.addf %73, %76 : vector<128x64xf32>
    %78 = arith.addf %77, %27 : vector<128x64xf32>
    %c0_34 = arith.constant 0 : index
    %c0_35 = arith.constant 0 : index
    %c0_36 = arith.constant 0 : index
    %79 = vector.load %arg9[%c0_34, %c0_35, %c0_36] : memref<2x1x64xf32, #tpu.memory_space<vmem>>, vector<1x1x64xf32>
    %80 = vector.shape_cast %79 : vector<1x1x64xf32> to vector<1x64xf32>
    %c0_37 = arith.constant 0 : index
    %c0_38 = arith.constant 0 : index
    %c0_39 = arith.constant 0 : index
    %81 = vector.load %arg10[%c0_37, %c0_38, %c0_39] : memref<2x1x64xf32, #tpu.memory_space<vmem>>, vector<1x1x64xf32>
    %82 = vector.shape_cast %81 : vector<1x1x64xf32> to vector<1x64xf32>
    %cst_40 = arith.constant dense<0.000000e+00> : vector<128xf32>
    %83 = vector.multi_reduction <add>, %78, %cst_40 [1] : vector<128x64xf32> to vector<128xf32>
    %84 = vector.shape_cast %83 : vector<128xf32> to vector<128x1xf32>
    %cst_41 = arith.constant 6.400000e+01 : f32
    %85 = vector.broadcast %cst_41 : f32 to vector<128x1xf32>
    %86 = arith.divf %84, %85 : vector<128x1xf32>
    %87 = vector.broadcast %86 : vector<128x1xf32> to vector<128x64xf32>
    %88 = arith.subf %78, %87 : vector<128x64xf32>
    %89 = arith.mulf %88, %88 : vector<128x64xf32>
    %cst_42 = arith.constant dense<0.000000e+00> : vector<128xf32>
    %90 = vector.multi_reduction <add>, %89, %cst_42 [1] : vector<128x64xf32> to vector<128xf32>
    %91 = vector.shape_cast %90 : vector<128xf32> to vector<128x1xf32>
    %cst_43 = arith.constant 6.400000e+01 : f32
    %92 = vector.broadcast %cst_43 : f32 to vector<128x1xf32>
    %93 = arith.divf %91, %92 : vector<128x1xf32>
    %94 = vector.broadcast %86 : vector<128x1xf32> to vector<128x64xf32>
    %95 = arith.subf %78, %94 : vector<128x64xf32>
    %cst_44 = arith.constant 9.99999974E-6 : f32
    %96 = vector.broadcast %cst_44 : f32 to vector<128x1xf32>
    %97 = arith.addf %93, %96 : vector<128x1xf32>
    %98 = math.rsqrt %97 : vector<128x1xf32>
    %99 = vector.broadcast %98 : vector<128x1xf32> to vector<128x64xf32>
    %100 = arith.mulf %95, %99 : vector<128x64xf32>
    %101 = vector.broadcast %80 : vector<1x64xf32> to vector<128x64xf32>
    %102 = arith.mulf %100, %101 : vector<128x64xf32>
    %103 = vector.broadcast %82 : vector<1x64xf32> to vector<128x64xf32>
    %104 = arith.addf %102, %103 : vector<128x64xf32>
    %105 = arith.truncf %104 : vector<128x64xf32> to vector<128x64xbf16>
    %c0_45 = arith.constant 0 : index
    %c0_46 = arith.constant 0 : index
    %c0_47 = arith.constant 0 : index
    %106 = vector.load %arg11[%c0_45, %c0_46, %c0_47] : memref<2x64x256xbf16, #tpu.memory_space<vmem>>, vector<1x64x256xbf16>
    %107 = vector.shape_cast %106 : vector<1x64x256xbf16> to vector<64x256xbf16>
    %cst_48 = arith.constant dense<0.000000e+00> : vector<128x256xf32>
    %108 = tpu.matmul %105, %107, %cst_48 {dimension_numbers = #tpu.dot_dimension_numbers<[1], [0], [0], [1], [0, 0, 1, 1], [], []>} : vector<128x64xbf16>, vector<64x256xbf16>, vector<128x256xf32> -> vector<128x256xf32>
    %109 = arith.mulf %108, %108 : vector<128x256xf32>
    %110 = arith.mulf %108, %109 : vector<128x256xf32>
    %cst_49 = arith.constant 4.471500e-02 : f32
    %111 = vector.broadcast %cst_49 : f32 to vector<128x256xf32>
    %112 = arith.mulf %111, %110 : vector<128x256xf32>
    %113 = arith.addf %108, %112 : vector<128x256xf32>
    %cst_50 = arith.constant 0.797884583 : f32
    %114 = vector.broadcast %cst_50 : f32 to vector<128x256xf32>
    %115 = arith.mulf %114, %113 : vector<128x256xf32>
    %116 = math.tanh %115 : vector<128x256xf32>
    %cst_51 = arith.constant 1.000000e+00 : f32
    %117 = vector.broadcast %cst_51 : f32 to vector<128x256xf32>
    %118 = arith.addf %117, %116 : vector<128x256xf32>
    %cst_52 = arith.constant 5.000000e-01 : f32
    %119 = vector.broadcast %cst_52 : f32 to vector<128x256xf32>
    %120 = arith.mulf %119, %118 : vector<128x256xf32>
    %121 = arith.mulf %108, %120 : vector<128x256xf32>
    %122 = arith.truncf %121 : vector<128x256xf32> to vector<128x256xbf16>
    %c0_53 = arith.constant 0 : index
    %c0_54 = arith.constant 0 : index
    %c0_55 = arith.constant 0 : index
    %123 = vector.load %arg12[%c0_53, %c0_54, %c0_55] : memref<2x256x64xbf16, #tpu.memory_space<vmem>>, vector<1x256x64xbf16>
    %124 = vector.shape_cast %123 : vector<1x256x64xbf16> to vector<256x64xbf16>
    %cst_56 = arith.constant dense<0.000000e+00> : vector<128x64xf32>
    %125 = tpu.matmul %122, %124, %cst_56 {dimension_numbers = #tpu.dot_dimension_numbers<[1], [0], [0], [1], [0, 0, 1, 1], [], []>} : vector<128x256xbf16>, vector<256x64xbf16>, vector<128x64xf32> -> vector<128x64xf32>
    %126 = arith.addf %125, %104 : vector<128x64xf32>
    %c1 = arith.constant 1 : index
    %c0_57 = arith.constant 0 : index
    %c0_58 = arith.constant 0 : index
    %127 = vector.load %arg3[%c1, %c0_57, %c0_58] : memref<2x1x64xf32, #tpu.memory_space<vmem>>, vector<1x1x64xf32>
    %128 = vector.shape_cast %127 : vector<1x1x64xf32> to vector<1x64xf32>
    %c1_59 = arith.constant 1 : index
    %c0_60 = arith.constant 0 : index
    %c0_61 = arith.constant 0 : index
    %129 = vector.load %arg4[%c1_59, %c0_60, %c0_61] : memref<2x1x64xf32, #tpu.memory_space<vmem>>, vector<1x1x64xf32>
    %130 = vector.shape_cast %129 : vector<1x1x64xf32> to vector<1x64xf32>
    %cst_62 = arith.constant dense<0.000000e+00> : vector<128xf32>
    %131 = vector.multi_reduction <add>, %126, %cst_62 [1] : vector<128x64xf32> to vector<128xf32>
    %132 = vector.shape_cast %131 : vector<128xf32> to vector<128x1xf32>
    %cst_63 = arith.constant 6.400000e+01 : f32
    %133 = vector.broadcast %cst_63 : f32 to vector<128x1xf32>
    %134 = arith.divf %132, %133 : vector<128x1xf32>
    %135 = vector.broadcast %134 : vector<128x1xf32> to vector<128x64xf32>
    %136 = arith.subf %126, %135 : vector<128x64xf32>
    %137 = arith.mulf %136, %136 : vector<128x64xf32>
    %cst_64 = arith.constant dense<0.000000e+00> : vector<128xf32>
    %138 = vector.multi_reduction <add>, %137, %cst_64 [1] : vector<128x64xf32> to vector<128xf32>
    %139 = vector.shape_cast %138 : vector<128xf32> to vector<128x1xf32>
    %cst_65 = arith.constant 6.400000e+01 : f32
    %140 = vector.broadcast %cst_65 : f32 to vector<128x1xf32>
    %141 = arith.divf %139, %140 : vector<128x1xf32>
    %142 = vector.broadcast %134 : vector<128x1xf32> to vector<128x64xf32>
    %143 = arith.subf %126, %142 : vector<128x64xf32>
    %cst_66 = arith.constant 9.99999974E-6 : f32
    %144 = vector.broadcast %cst_66 : f32 to vector<128x1xf32>
    %145 = arith.addf %141, %144 : vector<128x1xf32>
    %146 = math.rsqrt %145 : vector<128x1xf32>
    %147 = vector.broadcast %146 : vector<128x1xf32> to vector<128x64xf32>
    %148 = arith.mulf %143, %147 : vector<128x64xf32>
    %149 = vector.broadcast %128 : vector<1x64xf32> to vector<128x64xf32>
    %150 = arith.mulf %148, %149 : vector<128x64xf32>
    %151 = vector.broadcast %130 : vector<1x64xf32> to vector<128x64xf32>
    %152 = arith.addf %150, %151 : vector<128x64xf32>
    %153 = arith.truncf %152 : vector<128x64xf32> to vector<128x64xbf16>
    %c1_67 = arith.constant 1 : index
    %c0_68 = arith.constant 0 : index
    %c0_69 = arith.constant 0 : index
    %154 = vector.load %arg5[%c1_67, %c0_68, %c0_69] : memref<2x64x192xbf16, #tpu.memory_space<vmem>>, vector<1x64x192xbf16>
    %155 = vector.shape_cast %154 : vector<1x64x192xbf16> to vector<64x192xbf16>
    %cst_70 = arith.constant dense<0.000000e+00> : vector<128x192xf32>
    %156 = tpu.matmul %153, %155, %cst_70 {dimension_numbers = #tpu.dot_dimension_numbers<[1], [0], [0], [1], [0, 0, 1, 1], [], []>} : vector<128x64xbf16>, vector<64x192xbf16>, vector<128x192xf32> -> vector<128x192xf32>
    %c1_71 = arith.constant 1 : index
    %c0_72 = arith.constant 0 : index
    %c0_73 = arith.constant 0 : index
    %157 = vector.load %arg6[%c1_71, %c0_72, %c0_73] : memref<2x1x192xf32, #tpu.memory_space<vmem>>, vector<1x1x192xf32>
    %158 = vector.shape_cast %157 : vector<1x1x192xf32> to vector<1x192xf32>
    %159 = vector.broadcast %158 : vector<1x192xf32> to vector<128x192xf32>
    %160 = arith.addf %156, %159 : vector<128x192xf32>
    %161 = arith.truncf %160 : vector<128x192xf32> to vector<128x192xbf16>
    %162 = vector.extract_strided_slice %161 {offsets = [0, 0], sizes = [128, 32], strides = [1, 1]} : vector<128x192xbf16> to vector<128x32xbf16>
    %163 = vector.extract_strided_slice %161 {offsets = [0, 64], sizes = [128, 32], strides = [1, 1]} : vector<128x192xbf16> to vector<128x32xbf16>
    %164 = vector.extract_strided_slice %161 {offsets = [0, 128], sizes = [128, 32], strides = [1, 1]} : vector<128x192xbf16> to vector<128x32xbf16>
    %cst_74 = arith.constant dense<0.000000e+00> : vector<128x128xf32>
    %165 = tpu.matmul %162, %163, %cst_74 {dimension_numbers = #tpu.dot_dimension_numbers<[1], [1], [0], [0], [0, 0, 1, 0], [], []>} : vector<128x32xbf16>, vector<128x32xbf16>, vector<128x128xf32> -> vector<128x128xf32>
    %c0_75 = arith.constant 0 : index
    %c0_76 = arith.constant 0 : index
    %166 = vector.load %arg2[%c0_75, %c0_76] : memref<128x128xf32, #tpu.memory_space<vmem>>, vector<128x128xf32>
    %167 = arith.addf %165, %166 : vector<128x128xf32>
    %cst_77 = arith.constant dense<0xFF800000> : vector<128xf32>
    %168 = vector.multi_reduction <maximumf>, %167, %cst_77 [1] : vector<128x128xf32> to vector<128xf32>
    %169 = vector.shape_cast %168 : vector<128xf32> to vector<128x1xf32>
    %170 = vector.broadcast %169 : vector<128x1xf32> to vector<128x128xf32>
    %171 = arith.subf %167, %170 : vector<128x128xf32>
    %172 = math.exp %171 : vector<128x128xf32>
    %cst_78 = arith.constant dense<0.000000e+00> : vector<128xf32>
    %173 = vector.multi_reduction <add>, %172, %cst_78 [1] : vector<128x128xf32> to vector<128xf32>
    %174 = vector.shape_cast %173 : vector<128xf32> to vector<128x1xf32>
    %175 = tpu.reciprocal %174 {approx = true} : vector<128x1xf32> -> vector<128x1xf32>
    %176 = vector.broadcast %175 : vector<128x1xf32> to vector<128x128xf32>
    %177 = arith.mulf %172, %176 : vector<128x128xf32>
    %178 = arith.truncf %177 : vector<128x128xf32> to vector<128x128xbf16>
    %cst_79 = arith.constant dense<0.000000e+00> : vector<128x32xf32>
    %179 = tpu.matmul %178, %164, %cst_79 {dimension_numbers = #tpu.dot_dimension_numbers<[1], [0], [0], [1], [0, 0, 1, 1], [], []>} : vector<128x128xbf16>, vector<128x32xbf16>, vector<128x32xf32> -> vector<128x32xf32>
    %180 = vector.extract_strided_slice %161 {offsets = [0, 32], sizes = [128, 32], strides = [1, 1]} : vector<128x192xbf16> to vector<128x32xbf16>
    %181 = vector.extract_strided_slice %161 {offsets = [0, 96], sizes = [128, 32], strides = [1, 1]} : vector<128x192xbf16> to vector<128x32xbf16>
    %182 = vector.extract_strided_slice %161 {offsets = [0, 160], sizes = [128, 32], strides = [1, 1]} : vector<128x192xbf16> to vector<128x32xbf16>
    %cst_80 = arith.constant dense<0.000000e+00> : vector<128x128xf32>
    %183 = tpu.matmul %180, %181, %cst_80 {dimension_numbers = #tpu.dot_dimension_numbers<[1], [1], [0], [0], [0, 0, 1, 0], [], []>} : vector<128x32xbf16>, vector<128x32xbf16>, vector<128x128xf32> -> vector<128x128xf32>
    %c0_81 = arith.constant 0 : index
    %c0_82 = arith.constant 0 : index
    %184 = vector.load %arg2[%c0_81, %c0_82] : memref<128x128xf32, #tpu.memory_space<vmem>>, vector<128x128xf32>
    %185 = arith.addf %183, %184 : vector<128x128xf32>
    %cst_83 = arith.constant dense<0xFF800000> : vector<128xf32>
    %186 = vector.multi_reduction <maximumf>, %185, %cst_83 [1] : vector<128x128xf32> to vector<128xf32>
    %187 = vector.shape_cast %186 : vector<128xf32> to vector<128x1xf32>
    %188 = vector.broadcast %187 : vector<128x1xf32> to vector<128x128xf32>
    %189 = arith.subf %185, %188 : vector<128x128xf32>
    %190 = math.exp %189 : vector<128x128xf32>
    %cst_84 = arith.constant dense<0.000000e+00> : vector<128xf32>
    %191 = vector.multi_reduction <add>, %190, %cst_84 [1] : vector<128x128xf32> to vector<128xf32>
    %192 = vector.shape_cast %191 : vector<128xf32> to vector<128x1xf32>
    %193 = tpu.reciprocal %192 {approx = true} : vector<128x1xf32> -> vector<128x1xf32>
    %194 = vector.broadcast %193 : vector<128x1xf32> to vector<128x128xf32>
    %195 = arith.mulf %190, %194 : vector<128x128xf32>
    %196 = arith.truncf %195 : vector<128x128xf32> to vector<128x128xbf16>
    %cst_85 = arith.constant dense<0.000000e+00> : vector<128x32xf32>
    %197 = tpu.matmul %196, %182, %cst_85 {dimension_numbers = #tpu.dot_dimension_numbers<[1], [0], [0], [1], [0, 0, 1, 1], [], []>} : vector<128x128xbf16>, vector<128x32xbf16>, vector<128x32xf32> -> vector<128x32xf32>
    %198 = tpu.concatenate %179, %197 in 1 : vector<128x32xf32>, vector<128x32xf32> -> vector<128x64xf32>
    %199 = arith.truncf %198 : vector<128x64xf32> to vector<128x64xbf16>
    %c1_86 = arith.constant 1 : index
    %c0_87 = arith.constant 0 : index
    %c0_88 = arith.constant 0 : index
    %200 = vector.load %arg7[%c1_86, %c0_87, %c0_88] : memref<2x64x64xbf16, #tpu.memory_space<vmem>>, vector<1x64x64xbf16>
    %201 = vector.shape_cast %200 : vector<1x64x64xbf16> to vector<64x64xbf16>
    %cst_89 = arith.constant dense<0.000000e+00> : vector<128x64xf32>
    %202 = tpu.matmul %199, %201, %cst_89 {dimension_numbers = #tpu.dot_dimension_numbers<[1], [0], [0], [1], [0, 0, 1, 1], [], []>} : vector<128x64xbf16>, vector<64x64xbf16>, vector<128x64xf32> -> vector<128x64xf32>
    %c1_90 = arith.constant 1 : index
    %c0_91 = arith.constant 0 : index
    %c0_92 = arith.constant 0 : index
    %203 = vector.load %arg8[%c1_90, %c0_91, %c0_92] : memref<2x1x64xf32, #tpu.memory_space<vmem>>, vector<1x1x64xf32>
    %204 = vector.shape_cast %203 : vector<1x1x64xf32> to vector<1x64xf32>
    %205 = vector.broadcast %204 : vector<1x64xf32> to vector<128x64xf32>
    %206 = arith.addf %202, %205 : vector<128x64xf32>
    %207 = arith.addf %206, %152 : vector<128x64xf32>
    %c1_93 = arith.constant 1 : index
    %c0_94 = arith.constant 0 : index
    %c0_95 = arith.constant 0 : index
    %208 = vector.load %arg9[%c1_93, %c0_94, %c0_95] : memref<2x1x64xf32, #tpu.memory_space<vmem>>, vector<1x1x64xf32>
    %209 = vector.shape_cast %208 : vector<1x1x64xf32> to vector<1x64xf32>
    %c1_96 = arith.constant 1 : index
    %c0_97 = arith.constant 0 : index
    %c0_98 = arith.constant 0 : index
    %210 = vector.load %arg10[%c1_96, %c0_97, %c0_98] : memref<2x1x64xf32, #tpu.memory_space<vmem>>, vector<1x1x64xf32>
    %211 = vector.shape_cast %210 : vector<1x1x64xf32> to vector<1x64xf32>
    %cst_99 = arith.constant dense<0.000000e+00> : vector<128xf32>
    %212 = vector.multi_reduction <add>, %207, %cst_99 [1] : vector<128x64xf32> to vector<128xf32>
    %213 = vector.shape_cast %212 : vector<128xf32> to vector<128x1xf32>
    %cst_100 = arith.constant 6.400000e+01 : f32
    %214 = vector.broadcast %cst_100 : f32 to vector<128x1xf32>
    %215 = arith.divf %213, %214 : vector<128x1xf32>
    %216 = vector.broadcast %215 : vector<128x1xf32> to vector<128x64xf32>
    %217 = arith.subf %207, %216 : vector<128x64xf32>
    %218 = arith.mulf %217, %217 : vector<128x64xf32>
    %cst_101 = arith.constant dense<0.000000e+00> : vector<128xf32>
    %219 = vector.multi_reduction <add>, %218, %cst_101 [1] : vector<128x64xf32> to vector<128xf32>
    %220 = vector.shape_cast %219 : vector<128xf32> to vector<128x1xf32>
    %cst_102 = arith.constant 6.400000e+01 : f32
    %221 = vector.broadcast %cst_102 : f32 to vector<128x1xf32>
    %222 = arith.divf %220, %221 : vector<128x1xf32>
    %223 = vector.broadcast %215 : vector<128x1xf32> to vector<128x64xf32>
    %224 = arith.subf %207, %223 : vector<128x64xf32>
    %cst_103 = arith.constant 9.99999974E-6 : f32
    %225 = vector.broadcast %cst_103 : f32 to vector<128x1xf32>
    %226 = arith.addf %222, %225 : vector<128x1xf32>
    %227 = math.rsqrt %226 : vector<128x1xf32>
    %228 = vector.broadcast %227 : vector<128x1xf32> to vector<128x64xf32>
    %229 = arith.mulf %224, %228 : vector<128x64xf32>
    %230 = vector.broadcast %209 : vector<1x64xf32> to vector<128x64xf32>
    %231 = arith.mulf %229, %230 : vector<128x64xf32>
    %232 = vector.broadcast %211 : vector<1x64xf32> to vector<128x64xf32>
    %233 = arith.addf %231, %232 : vector<128x64xf32>
    %234 = arith.truncf %233 : vector<128x64xf32> to vector<128x64xbf16>
    %c1_104 = arith.constant 1 : index
    %c0_105 = arith.constant 0 : index
    %c0_106 = arith.constant 0 : index
    %235 = vector.load %arg11[%c1_104, %c0_105, %c0_106] : memref<2x64x256xbf16, #tpu.memory_space<vmem>>, vector<1x64x256xbf16>
    %236 = vector.shape_cast %235 : vector<1x64x256xbf16> to vector<64x256xbf16>
    %cst_107 = arith.constant dense<0.000000e+00> : vector<128x256xf32>
    %237 = tpu.matmul %234, %236, %cst_107 {dimension_numbers = #tpu.dot_dimension_numbers<[1], [0], [0], [1], [0, 0, 1, 1], [], []>} : vector<128x64xbf16>, vector<64x256xbf16>, vector<128x256xf32> -> vector<128x256xf32>
    %238 = arith.mulf %237, %237 : vector<128x256xf32>
    %239 = arith.mulf %237, %238 : vector<128x256xf32>
    %cst_108 = arith.constant 4.471500e-02 : f32
    %240 = vector.broadcast %cst_108 : f32 to vector<128x256xf32>
    %241 = arith.mulf %240, %239 : vector<128x256xf32>
    %242 = arith.addf %237, %241 : vector<128x256xf32>
    %cst_109 = arith.constant 0.797884583 : f32
    %243 = vector.broadcast %cst_109 : f32 to vector<128x256xf32>
    %244 = arith.mulf %243, %242 : vector<128x256xf32>
    %245 = math.tanh %244 : vector<128x256xf32>
    %cst_110 = arith.constant 1.000000e+00 : f32
    %246 = vector.broadcast %cst_110 : f32 to vector<128x256xf32>
    %247 = arith.addf %246, %245 : vector<128x256xf32>
    %cst_111 = arith.constant 5.000000e-01 : f32
    %248 = vector.broadcast %cst_111 : f32 to vector<128x256xf32>
    %249 = arith.mulf %248, %247 : vector<128x256xf32>
    %250 = arith.mulf %237, %249 : vector<128x256xf32>
    %251 = arith.truncf %250 : vector<128x256xf32> to vector<128x256xbf16>
    %c1_112 = arith.constant 1 : index
    %c0_113 = arith.constant 0 : index
    %c0_114 = arith.constant 0 : index
    %252 = vector.load %arg12[%c1_112, %c0_113, %c0_114] : memref<2x256x64xbf16, #tpu.memory_space<vmem>>, vector<1x256x64xbf16>
    %253 = vector.shape_cast %252 : vector<1x256x64xbf16> to vector<256x64xbf16>
    %cst_115 = arith.constant dense<0.000000e+00> : vector<128x64xf32>
    %254 = tpu.matmul %251, %253, %cst_115 {dimension_numbers = #tpu.dot_dimension_numbers<[1], [0], [0], [1], [0, 0, 1, 1], [], []>} : vector<128x256xbf16>, vector<256x64xbf16>, vector<128x64xf32> -> vector<128x64xf32>
    %255 = arith.addf %254, %233 : vector<128x64xf32>
    %256 = vector.shape_cast %255 : vector<128x64xf32> to vector<16x8x64xf32>
    %cst_116 = arith.constant dense<0.000000e+00> : vector<16x64xf32>
    %257 = vector.multi_reduction <add>, %256, %cst_116 [1] : vector<16x8x64xf32> to vector<16x64xf32>
    %cst_117 = arith.constant 8.000000e+00 : f32
    %258 = vector.broadcast %cst_117 : f32 to vector<16x64xf32>
    %259 = arith.divf %257, %258 : vector<16x64xf32>
    %260 = arith.truncf %259 : vector<16x64xf32> to vector<16x64xbf16>
    %c0_118 = arith.constant 0 : index
    %c0_119 = arith.constant 0 : index
    %261 = vector.load %arg13[%c0_118, %c0_119] : memref<64x128xbf16, #tpu.memory_space<vmem>>, vector<64x128xbf16>
    %cst_120 = arith.constant dense<0.000000e+00> : vector<16x128xf32>
    %262 = tpu.matmul %260, %261, %cst_120 {dimension_numbers = #tpu.dot_dimension_numbers<[1], [0], [0], [1], [0, 0, 1, 1], [], []>} : vector<16x64xbf16>, vector<64x128xbf16>, vector<16x128xf32> -> vector<16x128xf32>
    %c0_121 = arith.constant 0 : index
    %c0_122 = arith.constant 0 : index
    %263 = vector.load %arg14[%c0_121, %c0_122] : memref<1x128xf32, #tpu.memory_space<vmem>>, vector<1x128xf32>
    %264 = vector.broadcast %263 : vector<1x128xf32> to vector<16x128xf32>
    %265 = arith.addf %262, %264 : vector<16x128xf32>
    %266 = arith.mulf %265, %265 : vector<16x128xf32>
    %267 = arith.mulf %265, %266 : vector<16x128xf32>
    %cst_123 = arith.constant 4.471500e-02 : f32
    %268 = vector.broadcast %cst_123 : f32 to vector<16x128xf32>
    %269 = arith.mulf %268, %267 : vector<16x128xf32>
    %270 = arith.addf %265, %269 : vector<16x128xf32>
    %cst_124 = arith.constant 0.797884583 : f32
    %271 = vector.broadcast %cst_124 : f32 to vector<16x128xf32>
    %272 = arith.mulf %271, %270 : vector<16x128xf32>
    %273 = math.tanh %272 : vector<16x128xf32>
    %cst_125 = arith.constant 1.000000e+00 : f32
    %274 = vector.broadcast %cst_125 : f32 to vector<16x128xf32>
    %275 = arith.addf %274, %273 : vector<16x128xf32>
    %cst_126 = arith.constant 5.000000e-01 : f32
    %276 = vector.broadcast %cst_126 : f32 to vector<16x128xf32>
    %277 = arith.mulf %276, %275 : vector<16x128xf32>
    %278 = arith.mulf %265, %277 : vector<16x128xf32>
    %279 = vector.shape_cast %278 : vector<16x128xf32> to vector<1x16x128xf32>
    %c0_127 = arith.constant 0 : index
    %c0_128 = arith.constant 0 : index
    %c0_129 = arith.constant 0 : index
    %280 = vector.load %arg15[%c0_127, %c0_128, %c0_129] : memref<1x16x128xf32, #tpu.memory_space<vmem>>, vector<1x16x128xf32>
    tpu.vector_store %arg15[%c0_127, %c0_128, %c0_129], %279 {strides = array<i32>} : memref<1x16x128xf32, #tpu.memory_space<vmem>>, vector<1x16x128xf32>,
    return
  }
  func.func @transform_0(%arg0: i32) -> (i32, i32, i32) {
    %c0_i32 = arith.constant 0 : i32
    %c0_i32_0 = arith.constant 0 : i32
    %c0_i32_1 = arith.constant 0 : i32
    return %arg0, %c0_i32, %c0_i32_0 : i32, i32, i32
  }
  func.func @transform_1(%arg0: i32) -> (i32, i32) {
    %c0_i32 = arith.constant 0 : i32
    %c0_i32_0 = arith.constant 0 : i32
    %c0_i32_1 = arith.constant 0 : i32
    return %c0_i32, %c0_i32_0 : i32, i32
  }
  func.func @transform_2(%arg0: i32) -> (i32, i32, i32) {
    %c0_i32 = arith.constant 0 : i32
    %c0_i32_0 = arith.constant 0 : i32
    %c0_i32_1 = arith.constant 0 : i32
    %c0_i32_2 = arith.constant 0 : i32
    return %c0_i32, %c0_i32_0, %c0_i32_1 : i32, i32, i32
  }
  func.func @transform_3(%arg0: i32) -> (i32, i32, i32) {
    %c0_i32 = arith.constant 0 : i32
    %c0_i32_0 = arith.constant 0 : i32
    %c0_i32_1 = arith.constant 0 : i32
    %c0_i32_2 = arith.constant 0 : i32
    return %c0_i32, %c0_i32_0, %c0_i32_1 : i32, i32, i32
  }
  func.func @transform_4(%arg0: i32) -> (i32, i32, i32) {
    %c0_i32 = arith.constant 0 : i32
    %c0_i32_0 = arith.constant 0 : i32
    %c0_i32_1 = arith.constant 0 : i32
    %c0_i32_2 = arith.constant 0 : i32
    return %c0_i32, %c0_i32_0, %c0_i32_1 : i32, i32, i32
  }
  func.func @transform_5(%arg0: i32) -> (i32, i32, i32) {
    %c0_i32 = arith.constant 0 : i32
    %c0_i32_0 = arith.constant 0 : i32
    %c0_i32_1 = arith.constant 0 : i32
    %c0_i32_2 = arith.constant 0 : i32
    return %c0_i32, %c0_i32_0, %c0_i32_1 : i32, i32, i32
  }
  func.func @transform_6(%arg0: i32) -> (i32, i32, i32) {
    %c0_i32 = arith.constant 0 : i32
    %c0_i32_0 = arith.constant 0 : i32
    %c0_i32_1 = arith.constant 0 : i32
    %c0_i32_2 = arith.constant 0 : i32
    return %c0_i32, %c0_i32_0, %c0_i32_1 : i32, i32, i32
  }
  func.func @transform_7(%arg0: i32) -> (i32, i32, i32) {
    %c0_i32 = arith.constant 0 : i32
    %c0_i32_0 = arith.constant 0 : i32
    %c0_i32_1 = arith.constant 0 : i32
    %c0_i32_2 = arith.constant 0 : i32
    return %c0_i32, %c0_i32_0, %c0_i32_1 : i32, i32, i32
  }
  func.func @transform_8(%arg0: i32) -> (i32, i32, i32) {
    %c0_i32 = arith.constant 0 : i32
    %c0_i32_0 = arith.constant 0 : i32
    %c0_i32_1 = arith.constant 0 : i32
    %c0_i32_2 = arith.constant 0 : i32
    return %c0_i32, %c0_i32_0, %c0_i32_1 : i32, i32, i32
  }
  func.func @transform_9(%arg0: i32) -> (i32, i32, i32) {
    %c0_i32 = arith.constant 0 : i32
    %c0_i32_0 = arith.constant 0 : i32
    %c0_i32_1 = arith.constant 0 : i32
    %c0_i32_2 = arith.constant 0 : i32
    return %c0_i32, %c0_i32_0, %c0_i32_1 : i32, i32, i32
  }
  func.func @transform_10(%arg0: i32) -> (i32, i32, i32) {
    %c0_i32 = arith.constant 0 : i32
    %c0_i32_0 = arith.constant 0 : i32
    %c0_i32_1 = arith.constant 0 : i32
    %c0_i32_2 = arith.constant 0 : i32
    return %c0_i32, %c0_i32_0, %c0_i32_1 : i32, i32, i32
  }
  func.func @transform_11(%arg0: i32) -> (i32, i32, i32) {
    %c0_i32 = arith.constant 0 : i32
    %c0_i32_0 = arith.constant 0 : i32
    %c0_i32_1 = arith.constant 0 : i32
    %c0_i32_2 = arith.constant 0 : i32
    return %c0_i32, %c0_i32_0, %c0_i32_1 : i32, i32, i32
  }
  func.func @transform_12(%arg0: i32) -> (i32, i32) {
    %c0_i32 = arith.constant 0 : i32
    %c0_i32_0 = arith.constant 0 : i32
    %c0_i32_1 = arith.constant 0 : i32
    return %c0_i32, %c0_i32_0 : i32, i32
  }
  func.func @transform_13(%arg0: i32) -> (i32, i32) {
    %c0_i32 = arith.constant 0 : i32
    %c0_i32_0 = arith.constant 0 : i32
    %c0_i32_1 = arith.constant 0 : i32
    return %c0_i32, %c0_i32_0 : i32, i32
  }
  func.func @transform_14(%arg0: i32) -> (i32, i32, i32) {
    %c0_i32 = arith.constant 0 : i32
    %c0_i32_0 = arith.constant 0 : i32
    %c0_i32_1 = arith.constant 0 : i32
    return %arg0, %c0_i32, %c0_i32_0 : i32, i32, i32
  }
}

</mosaic_0001>

<llo_original>
// kernel: tpu_custom_call.1
$region0: #{tpu_custom_call.1}
  #allocation0 [shape = 'u32[]', space=smem, size = 0x4, offset = 0x4, fixed_abs, tag = 'smem constant byte address 0x4 - core index']
  #allocation1 [shape = 'u32[144,128]{1,0:T(1,128)}', space=vmem, size = 0x12000, scoped, tag = 'internal scratch']
  %s0 = inlined_call_operand.vmem [shape: f32[2,128,64], index: 0, kind: input, shape index: {}]
  %s1 = inlined_call_operand.vmem [shape: f32[128,128], index: 1, kind: input, shape index: {}]
  %s2 = inlined_call_operand.vmem [shape: f32[2,1,64], index: 2, kind: input, shape index: {}]
  %s3 = inlined_call_operand.vmem [shape: f32[2,1,64], index: 3, kind: input, shape index: {}]
  %s4 = inlined_call_operand.vmem [shape: bf16[2,64,192], index: 4, kind: input, shape index: {}]
  %s5 = inlined_call_operand.vmem [shape: f32[2,1,192], index: 5, kind: input, shape index: {}]
  %s6 = inlined_call_operand.vmem [shape: bf16[2,64,64], index: 6, kind: input, shape index: {}]
  %s7 = inlined_call_operand.vmem [shape: f32[2,1,64], index: 7, kind: input, shape index: {}]
  %s8 = inlined_call_operand.vmem [shape: f32[2,1,64], index: 8, kind: input, shape index: {}]
  %s9 = inlined_call_operand.vmem [shape: f32[2,1,64], index: 9, kind: input, shape index: {}]
  %s10 = inlined_call_operand.vmem [shape: bf16[2,64,256], index: 10, kind: input, shape index: {}]
  %s11 = inlined_call_operand.vmem [shape: bf16[2,256,64], index: 11, kind: input, shape index: {}]
  %s12 = inlined_call_operand.vmem [shape: bf16[64,128], index: 12, kind: input, shape index: {}]
  %s13 = inlined_call_operand.vmem [shape: f32[1,128], index: 13, kind: input, shape index: {}]
  %s14 = inlined_call_operand.hbm [shape: f32[2,16,128], index: 14, kind: output, shape index: {}]
  %s15 = sld [smem:[#allocation0]]
  $region89: #{tpu_custom_call.1} parent=0
    _
  %s17 = ssub.s32 1, %s15
  %s18 = scalar_select 0, %s17, %s15
  $region1: #{tpu_custom_call.1} parent=0
    #allocation2 [shape = 'u8[16384]{0}', space=vmem, size = 0x4000, scoped, tag = 'output window, operand 0']
    #allocation3 [shape = 's32[2]{0}', space=sflag, size = 0x8, scoped, tag = 'scoped memory for tpu_custom_call.1']
    %19 = vsyncpa [#allocation3], 0
    %s20 = scalar_lea.sflag [#allocation3], 1
    %21 = vsyncpa %s20, 0
    loop: start=0, step=1, limit=4
    $region2: #{tpu_custom_call.1} parent=1 // loop_pre_header
      _
    $region3: #{tpu_custom_call.1} parent=1 // loop_header
      %s23 = sphi 0, %s27
      %p24 = scmp.ge.s32.totalorder %s23, 4
      %s33 = sphi 0, %s35
      %s36 = sphi 0, %s33
      %s37 = sphi 0, %s36
      %s53 = sphi 0, %s37
      %s57 = sphi 0, %s57
      %s59 = sphi 0, %s57
      %s60 = sphi 0, %s59
      %s74 = sphi 0, %s60
      %s78 = sphi 0, %s78
      %s80 = sphi 0, %s78
      %s81 = sphi 0, %s80
      %s95 = sphi 0, %s81
      %s99 = sphi 0, %s99
      %s101 = sphi 0, %s99
      %s102 = sphi 0, %s101
      %s116 = sphi 0, %s102
      %s120 = sphi 0, %s120
      %s122 = sphi 0, %s120
      %s123 = sphi 0, %s122
      %s137 = sphi 0, %s123
      %s141 = sphi 0, %s141
      %s143 = sphi 0, %s141
      %s144 = sphi 0, %s143
      %s158 = sphi 0, %s144
      %s162 = sphi 0, %s162
      %s164 = sphi 0, %s162
      %s165 = sphi 0, %s164
      %s179 = sphi 0, %s165
      %s183 = sphi 0, %s183
      %s185 = sphi 0, %s183
      %s186 = sphi 0, %s185
      %s200 = sphi 0, %s186
      %s204 = sphi 0, %s204
      %s206 = sphi 0, %s204
      %s207 = sphi 0, %s206
      %s221 = sphi 0, %s207
      %s225 = sphi 0, %s225
      %s227 = sphi 0, %s225
      %s228 = sphi 0, %s227
      %s242 = sphi 0, %s228
      %s246 = sphi 0, %s246
      %s248 = sphi 0, %s246
      %s249 = sphi 0, %s248
      %s263 = sphi 0, %s249
      %s267 = sphi 0, %s267
      %s269 = sphi 0, %s267
      %s270 = sphi 0, %s269
      %s284 = sphi 0, %s270
      %s288 = sphi 0, %s288
      %s290 = sphi 0, %s288
      %s291 = sphi 0, %s290
      %s305 = sphi 0, %s291
      %s309 = sphi 0, %s309
      %s311 = sphi 0, %s309
      %s312 = sphi 0, %s311
      %s326 = sphi 0, %s312
      %s332 = sphi 0, %s334
      %s335 = sphi 0, %s332
      %s336 = sphi 0, %s335
      %s352 = sphi 0, %s336
    $region4: #{tpu_custom_call.1} parent=1 // loop_header_branch
      %26 = sbr.rel (%p24) target = $region8
    $region5: #{tpu_custom_call.1} parent=1 // loop_body
      %s28 = ssub.s32 %s23, 1
      %s29 = ssub.s32 %s23, 2
      %s30 = sadd.s32 %s23, 1
      %s31 = ssub.s32 %s23, %s30
      %p32 = scmp.eq.s32.totalorder %s31, 0
      %s34 = sadd.s32 %s33, 1
      %s35 = scalar_select %p32, %s33, %s34
      %p38 = pneg %p32
      %p39 = scmp.eq.s32.totalorder %s23, 1
      %p40 = por %p38, %p39
      %p41 = scmp.ne.s32.totalorder %s33, %s36
      %p42 = scmp.eq.s32.totalorder %s23, 0
      %p43 = por %p41, %p42
      %p44 = scmp.ne.s32.totalorder %s33, %s36
      %p45 = scmp.eq.s32.totalorder %s28, 1
      %p46 = por %p44, %p45
      %p47 = scmp.ne.s32.totalorder %s36, %s37
      %p48 = scmp.eq.s32.totalorder %s28, 0
      %p49 = por %p47, %p48
      %p50 = scmp.ne.s32.totalorder %s36, %s37
      %p51 = scmp.eq.s32.totalorder %s29, 1
      %p52 = por %p50, %p51
      %p54 = scmp.ne.s32.totalorder %s37, %s53
      %p55 = scmp.eq.s32.totalorder %s29, 0
      %p56 = por %p54, %p55
      %s58 = sadd.s32 %s57, 1
      %p61 = scmp.eq.s32.totalorder %s23, 1
      %p62 = scmp.ne.s32.totalorder %s57, %s59
      %p63 = scmp.eq.s32.totalorder %s23, 0
      %p64 = por %p62, %p63
      %p65 = scmp.ne.s32.totalorder %s57, %s59
      %p66 = scmp.eq.s32.totalorder %s28, 1
      %p67 = por %p65, %p66
      %p68 = scmp.ne.s32.totalorder %s59, %s60
      %p69 = scmp.eq.s32.totalorder %s28, 0
      %p70 = por %p68, %p69
      %p71 = scmp.ne.s32.totalorder %s59, %s60
      %p72 = scmp.eq.s32.totalorder %s29, 1
      %p73 = por %p71, %p72
      %p75 = scmp.ne.s32.totalorder %s60, %s74
      %p76 = scmp.eq.s32.totalorder %s29, 0
      %p77 = por %p75, %p76
      %s79 = sadd.s32 %s78, 1
      %p82 = scmp.eq.s32.totalorder %s23, 1
      %p83 = scmp.ne.s32.totalorder %s78, %s80
      %p84 = scmp.eq.s32.totalorder %s23, 0
      %p85 = por %p83, %p84
      %p86 = scmp.ne.s32.totalorder %s78, %s80
      %p87 = scmp.eq.s32.totalorder %s28, 1
      %p88 = por %p86, %p87
      %p89 = scmp.ne.s32.totalorder %s80, %s81
      %p90 = scmp.eq.s32.totalorder %s28, 0
      %p91 = por %p89, %p90
      %p92 = scmp.ne.s32.totalorder %s80, %s81
      %p93 = scmp.eq.s32.totalorder %s29, 1
      %p94 = por %p92, %p93
      %p96 = scmp.ne.s32.totalorder %s81, %s95
      %p97 = scmp.eq.s32.totalorder %s29, 0
      %p98 = por %p96, %p97
      %s100 = sadd.s32 %s99, 1
      %p103 = scmp.eq.s32.totalorder %s23, 1
      %p104 = scmp.ne.s32.totalorder %s99, %s101
      %p105 = scmp.eq.s32.totalorder %s23, 0
      %p106 = por %p104, %p105
      %p107 = scmp.ne.s32.totalorder %s99, %s101
      %p108 = scmp.eq.s32.totalorder %s28, 1
      %p109 = por %p107, %p108
      %p110 = scmp.ne.s32.totalorder %s101, %s102
      %p111 = scmp.eq.s32.totalorder %s28, 0
      %p112 = por %p110, %p111
      %p113 = scmp.ne.s32.totalorder %s101, %s102
      %p114 = scmp.eq.s32.totalorder %s29, 1
      %p115 = por %p113, %p114
      %p117 = scmp.ne.s32.totalorder %s102, %s116
      %p118 = scmp.eq.s32.totalorder %s29, 0
      %p119 = por %p117, %p118
      %s121 = sadd.s32 %s120, 1
      %p124 = scmp.eq.s32.totalorder %s23, 1
      %p125 = scmp.ne.s32.totalorder %s120, %s122
      %p126 = scmp.eq.s32.totalorder %s23, 0
      %p127 = por %p125, %p126
      %p128 = scmp.ne.s32.totalorder %s120, %s122
      %p129 = scmp.eq.s32.totalorder %s28, 1
      %p130 = por %p128, %p129
      %p131 = scmp.ne.s32.totalorder %s122, %s123
      %p132 = scmp.eq.s32.totalorder %s28, 0
      %p133 = por %p131, %p132
      %p134 = scmp.ne.s32.totalorder %s122, %s123
      %p135 = scmp.eq.s32.totalorder %s29, 1
      %p136 = por %p134, %p135
      %p138 = scmp.ne.s32.totalorder %s123, %s137
      %p139 = scmp.eq.s32.totalorder %s29, 0
      %p140 = por %p138, %p139
      %s142 = sadd.s32 %s141, 1
      %p145 = scmp.eq.s32.totalorder %s23, 1
      %p146 = scmp.ne.s32.totalorder %s141, %s143
      %p147 = scmp.eq.s32.totalorder %s23, 0
      %p148 = por %p146, %p147
      %p149 = scmp.ne.s32.totalorder %s141, %s143
      %p150 = scmp.eq.s32.totalorder %s28, 1
      %p151 = por %p149, %p150
      %p152 = scmp.ne.s32.totalorder %s143, %s144
      %p153 = scmp.eq.s32.totalorder %s28, 0
      %p154 = por %p152, %p153
      %p155 = scmp.ne.s32.totalorder %s143, %s144
      %p156 = scmp.eq.s32.totalorder %s29, 1
      %p157 = por %p155, %p156
      %p159 = scmp.ne.s32.totalorder %s144, %s158
      %p160 = scmp.eq.s32.totalorder %s29, 0
      %p161 = por %p159, %p160
      %s163 = sadd.s32 %s162, 1
      %p166 = scmp.eq.s32.totalorder %s23, 1
      %p167 = scmp.ne.s32.totalorder %s162, %s164
      %p168 = scmp.eq.s32.totalorder %s23, 0
      %p169 = por %p167, %p168
      %p170 = scmp.ne.s32.totalorder %s162, %s164
      %p171 = scmp.eq.s32.totalorder %s28, 1
      %p172 = por %p170, %p171
      %p173 = scmp.ne.s32.totalorder %s164, %s165
      %p174 = scmp.eq.s32.totalorder %s28, 0
      %p175 = por %p173, %p174
      %p176 = scmp.ne.s32.totalorder %s164, %s165
      %p177 = scmp.eq.s32.totalorder %s29, 1
      %p178 = por %p176, %p177
      %p180 = scmp.ne.s32.totalorder %s165, %s179
      %p181 = scmp.eq.s32.totalorder %s29, 0
      %p182 = por %p180, %p181
      %s184 = sadd.s32 %s183, 1
      %p187 = scmp.eq.s32.totalorder %s23, 1
      %p188 = scmp.ne.s32.totalorder %s183, %s185
      %p189 = scmp.eq.s32.totalorder %s23, 0
      %p190 = por %p188, %p189
      %p191 = scmp.ne.s32.totalorder %s183, %s185
      %p192 = scmp.eq.s32.totalorder %s28, 1
      %p193 = por %p191, %p192
      %p194 = scmp.ne.s32.totalorder %s185, %s186
      %p195 = scmp.eq.s32.totalorder %s28, 0
      %p196 = por %p194, %p195
      %p197 = scmp.ne.s32.totalorder %s185, %s186
      %p198 = scmp.eq.s32.totalorder %s29, 1
      %p199 = por %p197, %p198
      %p201 = scmp.ne.s32.totalorder %s186, %s200
      %p202 = scmp.eq.s32.totalorder %s29, 0
      %p203 = por %p201, %p202
      %s205 = sadd.s32 %s204, 1
      %p208 = scmp.eq.s32.totalorder %s23, 1
      %p209 = scmp.ne.s32.totalorder %s204, %s206
      %p210 = scmp.eq.s32.totalorder %s23, 0
      %p211 = por %p209, %p210
      %p212 = scmp.ne.s32.totalorder %s204, %s206
      %p213 = scmp.eq.s32.totalorder %s28, 1
      %p214 = por %p212, %p213
      %p215 = scmp.ne.s32.totalorder %s206, %s207
      %p216 = scmp.eq.s32.totalorder %s28, 0
      %p217 = por %p215, %p216
      %p218 = scmp.ne.s32.totalorder %s206, %s207
      %p219 = scmp.eq.s32.totalorder %s29, 1
      %p220 = por %p218, %p219
      %p222 = scmp.ne.s32.totalorder %s207, %s221
      %p223 = scmp.eq.s32.totalorder %s29, 0
      %p224 = por %p222, %p223
      %s226 = sadd.s32 %s225, 1
      %p229 = scmp.eq.s32.totalorder %s23, 1
      %p230 = scmp.ne.s32.totalorder %s225, %s227
      %p231 = scmp.eq.s32.totalorder %s23, 0
      %p232 = por %p230, %p231
      %p233 = scmp.ne.s32.totalorder %s225, %s227
      %p234 = scmp.eq.s32.totalorder %s28, 1
      %p235 = por %p233, %p234
      %p236 = scmp.ne.s32.totalorder %s227, %s228
      %p237 = scmp.eq.s32.totalorder %s28, 0
      %p238 = por %p236, %p237
      %p239 = scmp.ne.s32.totalorder %s227, %s228
      %p240 = scmp.eq.s32.totalorder %s29, 1
      %p241 = por %p239, %p240
      %p243 = scmp.ne.s32.totalorder %s228, %s242
      %p244 = scmp.eq.s32.totalorder %s29, 0
      %p245 = por %p243, %p244
      %s247 = sadd.s32 %s246, 1
      %p250 = scmp.eq.s32.totalorder %s23, 1
      %p251 = scmp.ne.s32.totalorder %s246, %s248
      %p252 = scmp.eq.s32.totalorder %s23, 0
      %p253 = por %p251, %p252
      %p254 = scmp.ne.s32.totalorder %s246, %s248
      %p255 = scmp.eq.s32.totalorder %s28, 1
      %p256 = por %p254, %p255
      %p257 = scmp.ne.s32.totalorder %s248, %s249
      %p258 = scmp.eq.s32.totalorder %s28, 0
      %p259 = por %p257, %p258
      %p260 = scmp.ne.s32.totalorder %s248, %s249
      %p261 = scmp.eq.s32.totalorder %s29, 1
      %p262 = por %p260, %p261
      %p264 = scmp.ne.s32.totalorder %s249, %s263
      %p265 = scmp.eq.s32.totalorder %s29, 0
      %p266 = por %p264, %p265
      %s268 = sadd.s32 %s267, 1
      %p271 = scmp.eq.s32.totalorder %s23, 1
      %p272 = scmp.ne.s32.totalorder %s267, %s269
      %p273 = scmp.eq.s32.totalorder %s23, 0
      %p274 = por %p272, %p273
      %p275 = scmp.ne.s32.totalorder %s267, %s269
      %p276 = scmp.eq.s32.totalorder %s28, 1
      %p277 = por %p275, %p276
      %p278 = scmp.ne.s32.totalorder %s269, %s270
      %p279 = scmp.eq.s32.totalorder %s28, 0
      %p280 = por %p278, %p279
      %p281 = scmp.ne.s32.totalorder %s269, %s270
      %p282 = scmp.eq.s32.totalorder %s29, 1
      %p283 = por %p281, %p282
      %p285 = scmp.ne.s32.totalorder %s270, %s284
      %p286 = scmp.eq.s32.totalorder %s29, 0
      %p287 = por %p285, %p286
      %s289 = sadd.s32 %s288, 1
      %p292 = scmp.eq.s32.totalorder %s23, 1
      %p293 = scmp.ne.s32.totalorder %s288, %s290
      %p294 = scmp.eq.s32.totalorder %s23, 0
      %p295 = por %p293, %p294
      %p296 = scmp.ne.s32.totalorder %s288, %s290
      %p297 = scmp.eq.s32.totalorder %s28, 1
      %p298 = por %p296, %p297
      %p299 = scmp.ne.s32.totalorder %s290, %s291
      %p300 = scmp.eq.s32.totalorder %s28, 0
      %p301 = por %p299, %p300
      %p302 = scmp.ne.s32.totalorder %s290, %s291
      %p303 = scmp.eq.s32.totalorder %s29, 1
      %p304 = por %p302, %p303
      %p306 = scmp.ne.s32.totalorder %s291, %s305
      %p307 = scmp.eq.s32.totalorder %s29, 0
      %p308 = por %p306, %p307
      %s310 = sadd.s32 %s309, 1
      %p313 = scmp.eq.s32.totalorder %s23, 1
      %p314 = scmp.ne.s32.totalorder %s309, %s311
      %p315 = scmp.eq.s32.totalorder %s23, 0
      %p316 = por %p314, %p315
      %p317 = scmp.ne.s32.totalorder %s309, %s311
      %p318 = scmp.eq.s32.totalorder %s28, 1
      %p319 = por %p317, %p318
      %p320 = scmp.ne.s32.totalorder %s311, %s312
      %p321 = scmp.eq.s32.totalorder %s28, 0
      %p322 = por %p320, %p321
      %p323 = scmp.ne.s32.totalorder %s311, %s312
      %p324 = scmp.eq.s32.totalorder %s29, 1
      %p325 = por %p323, %p324
      %p327 = scmp.ne.s32.totalorder %s312, %s326
      %p328 = scmp.eq.s32.totalorder %s29, 0
      %p329 = por %p327, %p328
      %s330 = ssub.s32 %s23, %s30
      %p331 = scmp.eq.s32.totalorder %s330, 0
      %s333 = sadd.s32 %s332, 1
      %s334 = scalar_select %p331, %s332, %s333
      %p337 = pneg %p331
      %p338 = scmp.eq.s32.totalorder %s23, 1
      %p339 = por %p337, %p338
      %p340 = scmp.ne.s32.totalorder %s332, %s335
      %p341 = scmp.eq.s32.totalorder %s23, 0
      %p342 = por %p340, %p341
      %p343 = scmp.ne.s32.totalorder %s332, %s335
      %p344 = scmp.eq.s32.totalorder %s28, 1
      %p345 = por %p343, %p344
      %p346 = scmp.ne.s32.totalorder %s335, %s336
      %p347 = scmp.eq.s32.totalorder %s28, 0
      %p348 = por %p346, %p347
      %p349 = scmp.ne.s32.totalorder %s335, %s336
      %p350 = scmp.eq.s32.totalorder %s29, 1
      %p351 = por %p349, %p350
      %p353 = scmp.ne.s32.totalorder %s336, %s352
      %p354 = scmp.eq.s32.totalorder %s29, 0
      %p355 = por %p353, %p354
      %p356 = scmp.le.s32.totalorder 1, %s23
      %p357 = scmp.lt.s32.totalorder %s23, 3
      %p358 = pnand %p356, %p357
      %p359 = pneg %p358
      // Predicated region
      $region9: #{tpu_custom_call.1} parent=5 // pred_check
        _
      $region10: #{tpu_custom_call.1} parent=5 // pred_check_branch
        %361 = sbr.rel (%p358) target = $region12
      $region11: #{tpu_custom_call.1} parent=5 // pred_region
        %s362 = ssub.s32 %s23, 1
        // Predicated region
        $region13: #{tpu_custom_call.1} parent=11 // pred_check
          %p363 = pneg %p70
        $region14: #{tpu_custom_call.1} parent=11 // pred_check_branch
          %365 = sbr.rel (%p363) target = $region16
        $region15: #{tpu_custom_call.1} parent=11 // pred_region
          _
        $region16: #{tpu_custom_call.1} parent=11 // pred_fallthru
          _
        // Predicated region
        $region17: #{tpu_custom_call.1} parent=11 // pred_check
          %p366 = pneg %p91
        $region18: #{tpu_custom_call.1} parent=11 // pred_check_branch
          %368 = sbr.rel (%p366) target = $region20
        $region19: #{tpu_custom_call.1} parent=11 // pred_region
          _
        $region20: #{tpu_custom_call.1} parent=11 // pred_fallthru
          _
        // Predicated region
        $region21: #{tpu_custom_call.1} parent=11 // pred_check
          %p369 = pneg %p112
        $region22: #{tpu_custom_call.1} parent=11 // pred_check_branch
          %371 = sbr.rel (%p369) target = $region24
        $region23: #{tpu_custom_call.1} parent=11 // pred_region
          _
        $region24: #{tpu_custom_call.1} parent=11 // pred_fallthru
          _
        // Predicated region
        $region25: #{tpu_custom_call.1} parent=11 // pred_check
          %p372 = pneg %p133
        $region26: #{tpu_custom_call.1} parent=11 // pred_check_branch
          %374 = sbr.rel (%p372) target = $region28
        $region27: #{tpu_custom_call.1} parent=11 // pred_region
          _
        $region28: #{tpu_custom_call.1} parent=11 // pred_fallthru
          _
        // Predicated region
        $region29: #{tpu_custom_call.1} parent=11 // pred_check
          %p375 = pneg %p154
        $region30: #{tpu_custom_call.1} parent=11 // pred_check_branch
          %377 = sbr.rel (%p375) target = $region32
        $region31: #{tpu_custom_call.1} parent=11 // pred_region
          _
        $region32: #{tpu_custom_call.1} parent=11 // pred_fallthru
          _
        // Predicated region
        $region33: #{tpu_custom_call.1} parent=11 // pred_check
          %p378 = pneg %p175
        $region34: #{tpu_custom_call.1} parent=11 // pred_check_branch
          %380 = sbr.rel (%p378) target = $region36
        $region35: #{tpu_custom_call.1} parent=11 // pred_region
          _
        $region36: #{tpu_custom_call.1} parent=11 // pred_fallthru
          _
        // Predicated region
        $region37: #{tpu_custom_call.1} parent=11 // pred_check
          %p381 = pneg %p196
        $region38: #{tpu_custom_call.1} parent=11 // pred_check_branch
          %383 = sbr.rel (%p381) target = $region40
        $region39: #{tpu_custom_call.1} parent=11 // pred_region
          _
        $region40: #{tpu_custom_call.1} parent=11 // pred_fallthru
          _
        // Predicated region
        $region41: #{tpu_custom_call.1} parent=11 // pred_check
          %p384 = pneg %p217
        $region42: #{tpu_custom_call.1} parent=11 // pred_check_branch
          %386 = sbr.rel (%p384) target = $region44
        $region43: #{tpu_custom_call.1} parent=11 // pred_region
          _
        $region44: #{tpu_custom_call.1} parent=11 // pred_fallthru
          _
        // Predicated region
        $region45: #{tpu_custom_call.1} parent=11 // pred_check
          %p387 = pneg %p238
        $region46: #{tpu_custom_call.1} parent=11 // pred_check_branch
          %389 = sbr.rel (%p387) target = $region48
        $region47: #{tpu_custom_call.1} parent=11 // pred_region
          _
        $region48: #{tpu_custom_call.1} parent=11 // pred_fallthru
          _
        // Predicated region
        $region49: #{tpu_custom_call.1} parent=11 // pred_check
          %p390 = pneg %p259
        $region50: #{tpu_custom_call.1} parent=11 // pred_check_branch
          %392 = sbr.rel (%p390) target = $region52
        $region51: #{tpu_custom_call.1} parent=11 // pred_region
          _
        $region52: #{tpu_custom_call.1} parent=11 // pred_fallthru
          _
        // Predicated region
        $region53: #{tpu_custom_call.1} parent=11 // pred_check
          %p393 = pneg %p280
        $region54: #{tpu_custom_call.1} parent=11 // pred_check_branch
          %395 = sbr.rel (%p393) target = $region56
        $region55: #{tpu_custom_call.1} parent=11 // pred_region
          _
        $region56: #{tpu_custom_call.1} parent=11 // pred_fallthru
          _
        // Predicated region
        $region57: #{tpu_custom_call.1} parent=11 // pred_check
          %p396 = pneg %p301
        $region58: #{tpu_custom_call.1} parent=11 // pred_check_branch
          %398 = sbr.rel (%p396) target = $region60
        $region59: #{tpu_custom_call.1} parent=11 // pred_region
          _
        $region60: #{tpu_custom_call.1} parent=11 // pred_fallthru
          _
        // Predicated region
        $region61: #{tpu_custom_call.1} parent=11 // pred_check
          %p399 = pneg %p322
        $region62: #{tpu_custom_call.1} parent=11 // pred_check_branch
          %401 = sbr.rel (%p399) target = $region64
        $region63: #{tpu_custom_call.1} parent=11 // pred_region
          _
        $region64: #{tpu_custom_call.1} parent=11 // pred_fallthru
          _
      $region12: #{tpu_custom_call.1} parent=5 // pred_fallthru
        _
      %p402 = scmp.lt.s32.totalorder %s23, 2
      // Predicated region
      $region65: #{tpu_custom_call.1} parent=5 // pred_check
        %p403 = pneg %p402
      $region66: #{tpu_custom_call.1} parent=5 // pred_check_branch
        %405 = sbr.rel (%p403) target = $region68
      $region67: #{tpu_custom_call.1} parent=5 // pred_region
        // Predicated region
        $region69: #{tpu_custom_call.1} parent=67 // pred_check
          %p406 = pneg %p43
        $region70: #{tpu_custom_call.1} parent=67 // pred_check_branch
          %408 = sbr.rel (%p406) target = $region72
        $region71: #{tpu_custom_call.1} parent=67 // pred_region
          %p409 = scmp.lt.s32.totalorder %s23, 1
          %s410 = scalar_select %p409, %s23, 1
          %s411 = smul.addr %s410, 16
          %s412 = smul.addr %s411, 8
          %s413 = scalar_lea.vmem %s0, %s412
        $region72: #{tpu_custom_call.1} parent=67 // pred_fallthru
          _
      $region68: #{tpu_custom_call.1} parent=5 // pred_fallthru
        _
      %p414 = scmp.le.s32.totalorder 1, %s23
      %p415 = scmp.lt.s32.totalorder %s23, 3
      %p416 = pnand %p414, %p415
      %p417 = pneg %p416
      // Predicated region
      $region73: #{tpu_custom_call.1} parent=5 // pred_check
        _
      $region74: #{tpu_custom_call.1} parent=5 // pred_check_branch
        %419 = sbr.rel (%p416) target = $region76
      $region75: #{tpu_custom_call.1} parent=5 // pred_region
        %s420 = ssub.s32 %s23, 1
        %p421 = scmp.lt.s32.totalorder %s28, 1
        %s422 = scalar_select %p421, %s28, 1
        %s423 = smul.addr %s422, 16
        %s424 = smul.addr %s423, 8
        %s425 = scalar_lea.vmem %s0, %s424
        %p426 = pneg %p49
        %p427 = pneg %p46
        %p428 = pneg %p70
        %p429 = pneg %p67
        %p430 = pneg %p91
        %p431 = pneg %p88
        %p432 = pneg %p112
        %p433 = pneg %p109
        %p434 = pneg %p133
        %p435 = pneg %p130
        %p436 = pneg %p154
        %p437 = pneg %p151
        %p438 = pneg %p175
        %p439 = pneg %p172
        %p440 = pneg %p196
        %p441 = pneg %p193
        %p442 = pneg %p217
        %p443 = pneg %p214
        %p444 = pneg %p238
        %p445 = pneg %p235
        %p446 = pneg %p259
        %p447 = pneg %p256
        %p448 = pneg %p280
        %p449 = pneg %p277
        %p450 = pneg %p301
        %p451 = pneg %p298
        %p452 = pneg %p322
        %p453 = pneg %p319
        %p454 = pneg %p348
        %p455 = pneg %p345
        %s456 = sand.u32 %s335, 1
        %s457 = scalar_lea.sflag [#allocation3], %s456
        %s458 = sand.u32 %s335, 1
        %s459 = smul.addr %s458, 16
        %s460 = scalar_lea.vmem [#allocation2], %s459
        %p461 = scmp.lt.s32.totalorder %s28, 1
        %s462 = scalar_select %p461, %s28, 1
        %s463 = smul.addr %s462, 16
        %s464 = smul.addr %s463, 8
        %s465 = scalar_lea.vmem %s0, %s464
        %v467 = vld [vmem:[%s465] sm:$0xff]
        %v468 = vld [vmem:[%s465 + $0x8] sm:$0xff]
        %v469 = vld [vmem:[%s465 + $0x10] sm:$0xff]
        %v470 = vld [vmem:[%s465 + $0x18] sm:$0xff]
        %v471 = vld [vmem:[%s465 + $0x20] sm:$0xff]
        %v472 = vld [vmem:[%s465 + $0x28] sm:$0xff]
        %v473 = vld [vmem:[%s465 + $0x30] sm:$0xff]
        %v474 = vld [vmem:[%s465 + $0x38] sm:$0xff]
        %v475 = vld [vmem:[%s465 + $0x40] sm:$0xff]
        %v476 = vld [vmem:[%s465 + $0x48] sm:$0xff]
        %v477 = vld [vmem:[%s465 + $0x50] sm:$0xff]
        %v478 = vld [vmem:[%s465 + $0x58] sm:$0xff]
        %v479 = vld [vmem:[%s465 + $0x60] sm:$0xff]
        %v480 = vld [vmem:[%s465 + $0x68] sm:$0xff]
        %v481 = vld [vmem:[%s465 + $0x70] sm:$0xff]
        %v482 = vld [vmem:[%s465 + $0x78] sm:$0xff]
        %v483 = vld [vmem:[%s2] sm:$0x1]
        %v484 = vld [vmem:[%s3] sm:$0x1]
        %vm485 = vcmask 523264
        %v486 = vsel %vm485, %v467, 0.0
        %487 = vadd.xlane.f32.xlu0 %v486
        %v488 = vpop.xlane.xlu0 %487
        %v489 = vsel %vm485, %v468, 0.0
        %490 = vadd.xlane.f32.xlu0 %v489
        %v491 = vpop.xlane.xlu0 %490
        %v492 = vsel %vm485, %v469, 0.0
        %493 = vadd.xlane.f32.xlu0 %v492
        %v494 = vpop.xlane.xlu0 %493
        %v495 = vsel %vm485, %v470, 0.0
        %496 = vadd.xlane.f32.xlu0 %v495
        %v497 = vpop.xlane.xlu0 %496
        %v498 = vsel %vm485, %v471, 0.0
        %499 = vadd.xlane.f32.xlu0 %v498
        %v500 = vpop.xlane.xlu0 %499
        %v501 = vsel %vm485, %v472, 0.0
        %502 = vadd.xlane.f32.xlu0 %v501
        %v503 = vpop.xlane.xlu0 %502
        %v504 = vsel %vm485, %v473, 0.0
        %505 = vadd.xlane.f32.xlu0 %v504
        %v506 = vpop.xlane.xlu0 %505
        %v507 = vsel %vm485, %v474, 0.0
        %508 = vadd.xlane.f32.xlu0 %v507
        %v509 = vpop.xlane.xlu0 %508
        %v510 = vsel %vm485, %v475, 0.0
        %511 = vadd.xlane.f32.xlu0 %v510
        %v512 = vpop.xlane.xlu0 %511
        %v513 = vsel %vm485, %v476, 0.0
        %514 = vadd.xlane.f32.xlu0 %v513
        %v515 = vpop.xlane.xlu0 %514
        %v516 = vsel %vm485, %v477, 0.0
        %517 = vadd.xlane.f32.xlu0 %v516
        %v518 = vpop.xlane.xlu0 %517
        %v519 = vsel %vm485, %v478, 0.0
        %520 = vadd.xlane.f32.xlu0 %v519
        %v521 = vpop.xlane.xlu0 %520
        %v522 = vsel %vm485, %v479, 0.0
        %523 = vadd.xlane.f32.xlu0 %v522
        %v524 = vpop.xlane.xlu0 %523
        %v525 = vsel %vm485, %v480, 0.0
        %526 = vadd.xlane.f32.xlu0 %v525
        %v527 = vpop.xlane.xlu0 %526
        %v528 = vsel %vm485, %v481, 0.0
        %529 = vadd.xlane.f32.xlu0 %v528
        %v530 = vpop.xlane.xlu0 %529
        %v531 = vsel %vm485, %v482, 0.0
        %532 = vadd.xlane.f32.xlu0 %v531
        %v533 = vpop.xlane.xlu0 %532
        %v534 = vrcp.pop 64.0
        %v535 = vmul.f32 %v488, %v534
        %v536 = vmul.f32 %v491, %v534
        %v537 = vmul.f32 %v494, %v534
        %v538 = vmul.f32 %v497, %v534
        %v539 = vmul.f32 %v500, %v534
        %v540 = vmul.f32 %v503, %v534
        %v541 = vmul.f32 %v506, %v534
        %v542 = vmul.f32 %v509, %v534
        %v543 = vmul.f32 %v512, %v534
        %v544 = vmul.f32 %v515, %v534
        %v545 = vmul.f32 %v518, %v534
        %v546 = vmul.f32 %v521, %v534
        %v547 = vmul.f32 %v524, %v534
        %v548 = vmul.f32 %v527, %v534
        %v549 = vmul.f32 %v530, %v534
        %v550 = vmul.f32 %v533, %v534
        %v551 = vsub.f32 %v467, %v535
        %v552 = vsub.f32 %v468, %v536
        %v553 = vsub.f32 %v469, %v537
        %v554 = vsub.f32 %v470, %v538
        %v555 = vsub.f32 %v471, %v539
        %v556 = vsub.f32 %v472, %v540
        %v557 = vsub.f32 %v473, %v541
        %v558 = vsub.f32 %v474, %v542
        %v559 = vsub.f32 %v475, %v543
        %v560 = vsub.f32 %v476, %v544
        %v561 = vsub.f32 %v477, %v545
        %v562 = vsub.f32 %v478, %v546
        %v563 = vsub.f32 %v479, %v547
        %v564 = vsub.f32 %v480, %v548
        %v565 = vsub.f32 %v481, %v549
        %v566 = vsub.f32 %v482, %v550
        %v567 = vmul.f32 %v551, %v551
        %v568 = vmul.f32 %v552, %v552
        %v569 = vmul.f32 %v553, %v553
        %v570 = vmul.f32 %v554, %v554
        %v571 = vmul.f32 %v555, %v555
        %v572 = vmul.f32 %v556, %v556
        %v573 = vmul.f32 %v557, %v557
        %v574 = vmul.f32 %v558, %v558
        %v575 = vmul.f32 %v559, %v559
        %v576 = vmul.f32 %v560, %v560
        %v577 = vmul.f32 %v561, %v561
        %v578 = vmul.f32 %v562, %v562
        %v579 = vmul.f32 %v563, %v563
        %v580 = vmul.f32 %v564, %v564
        %v581 = vmul.f32 %v565, %v565
        %v582 = vmul.f32 %v566, %v566
        %v583 = vsel %vm485, %v567, 0.0
        %584 = vadd.xlane.f32.xlu0 %v583
        %v585 = vpop.xlane.xlu0 %584
        %v586 = vsel %vm485, %v568, 0.0
        %587 = vadd.xlane.f32.xlu0 %v586
        %v588 = vpop.xlane.xlu0 %587
        %v589 = vsel %vm485, %v569, 0.0
        %590 = vadd.xlane.f32.xlu0 %v589
        %v591 = vpop.xlane.xlu0 %590
        %v592 = vsel %vm485, %v570, 0.0
        %593 = vadd.xlane.f32.xlu0 %v592
        %v594 = vpop.xlane.xlu0 %593
        %v595 = vsel %vm485, %v571, 0.0
        %596 = vadd.xlane.f32.xlu0 %v595
        %v597 = vpop.xlane.xlu0 %596
        %v598 = vsel %vm485, %v572, 0.0
        %599 = vadd.xlane.f32.xlu0 %v598
        %v600 = vpop.xlane.xlu0 %599
        %v601 = vsel %vm485, %v573, 0.0
        %602 = vadd.xlane.f32.xlu0 %v601
        %v603 = vpop.xlane.xlu0 %602
        %v604 = vsel %vm485, %v574, 0.0
        %605 = vadd.xlane.f32.xlu0 %v604
        %v606 = vpop.xlane.xlu0 %605
        %v607 = vsel %vm485, %v575, 0.0
        %608 = vadd.xlane.f32.xlu0 %v607
        %v609 = vpop.xlane.xlu0 %608
        %v610 = vsel %vm485, %v576, 0.0
        %611 = vadd.xlane.f32.xlu0 %v610
        %v612 = vpop.xlane.xlu0 %611
        %v613 = vsel %vm485, %v577, 0.0
        %614 = vadd.xlane.f32.xlu0 %v613
        %v615 = vpop.xlane.xlu0 %614
        %v616 = vsel %vm485, %v578, 0.0
        %617 = vadd.xlane.f32.xlu0 %v616
        %v618 = vpop.xlane.xlu0 %617
        %v619 = vsel %vm485, %v579, 0.0
        %620 = vadd.xlane.f32.xlu0 %v619
        %v621 = vpop.xlane.xlu0 %620
        %v622 = vsel %vm485, %v580, 0.0
        %623 = vadd.xlane.f32.xlu0 %v622
        %v624 = vpop.xlane.xlu0 %623
        %v625 = vsel %vm485, %v581, 0.0
        %626 = vadd.xlane.f32.xlu0 %v625
        %v627 = vpop.xlane.xlu0 %626
        %v628 = vsel %vm485, %v582, 0.0
        %629 = vadd.xlane.f32.xlu0 %v628
        %v630 = vpop.xlane.xlu0 %629
        %v631 = vmul.f32 %v585, %v534
        %v632 = vmul.f32 %v588, %v534
        %v633 = vmul.f32 %v591, %v534
        %v634 = vmul.f32 %v594, %v534
        %v635 = vmul.f32 %v597, %v534
        %v636 = vmul.f32 %v600, %v534
        %v637 = vmul.f32 %v603, %v534
        %v638 = vmul.f32 %v606, %v534
        %v639 = vmul.f32 %v609, %v534
        %v640 = vmul.f32 %v612, %v534
        %v641 = vmul.f32 %v615, %v534
        %v642 = vmul.f32 %v618, %v534
        %v643 = vmul.f32 %v621, %v534
        %v644 = vmul.f32 %v624, %v534
        %v645 = vmul.f32 %v627, %v534
        %v646 = vmul.f32 %v630, %v534
        %v647 = vadd.f32 %v631, 1e-05
        %v648 = vadd.f32 %v632, 1e-05
        %v649 = vadd.f32 %v633, 1e-05
        %v650 = vadd.f32 %v634, 1e-05
        %v651 = vadd.f32 %v635, 1e-05
        %v652 = vadd.f32 %v636, 1e-05
        %v653 = vadd.f32 %v637, 1e-05
        %v654 = vadd.f32 %v638, 1e-05
        %v655 = vadd.f32 %v639, 1e-05
        %v656 = vadd.f32 %v640, 1e-05
        %v657 = vadd.f32 %v641, 1e-05
        %v658 = vadd.f32 %v642, 1e-05
        %v659 = vadd.f32 %v643, 1e-05
        %v660 = vadd.f32 %v644, 1e-05
        %v661 = vadd.f32 %v645, 1e-05
        %v662 = vadd.f32 %v646, 1e-05
        %v663 = vrsqrt.pop %v647
        %v664 = vrsqrt.pop %v648
        %v665 = vrsqrt.pop %v649
        %v666 = vrsqrt.pop %v650
        %v667 = vrsqrt.pop %v651
        %v668 = vrsqrt.pop %v652
        %v669 = vrsqrt.pop %v653
        %v670 = vrsqrt.pop %v654
        %v671 = vrsqrt.pop %v655
        %v672 = vrsqrt.pop %v656
        %v673 = vrsqrt.pop %v657
        %v674 = vrsqrt.pop %v658
        %v675 = vrsqrt.pop %v659
        %v676 = vrsqrt.pop %v660
        %v677 = vrsqrt.pop %v661
        %v678 = vrsqrt.pop %v662
        %v679 = vmul.f32 %v551, %v663
        %v680 = vmul.f32 %v552, %v664
        %v681 = vmul.f32 %v553, %v665
        %v682 = vmul.f32 %v554, %v666
        %v683 = vmul.f32 %v555, %v667
        %v684 = vmul.f32 %v556, %v668
        %v685 = vmul.f32 %v557, %v669
        %v686 = vmul.f32 %v558, %v670
        %v687 = vmul.f32 %v559, %v671
        %v688 = vmul.f32 %v560, %v672
        %v689 = vmul.f32 %v561, %v673
        %v690 = vmul.f32 %v562, %v674
        %v691 = vmul.f32 %v563, %v675
        %v692 = vmul.f32 %v564, %v676
        %v693 = vmul.f32 %v565, %v677
        %v694 = vmul.f32 %v566, %v678
        %v696 = vlaneseq
        %v697 = vshrl.u32 %v696, 7
        %v698 = vsub.s32 0, %v697
        %v699 = vrot.slane %v483, %v698
        %v701 = vmul.f32 %v679, %v699
        %v702 = vmul.f32 %v680, %v699
        %v703 = vmul.f32 %v681, %v699
        %v704 = vmul.f32 %v682, %v699
        %v705 = vmul.f32 %v683, %v699
        %v706 = vmul.f32 %v684, %v699
        %v707 = vmul.f32 %v685, %v699
        %v708 = vmul.f32 %v686, %v699
        %v709 = vmul.f32 %v687, %v699
        %v710 = vmul.f32 %v688, %v699
        %v711 = vmul.f32 %v689, %v699
        %v712 = vmul.f32 %v690, %v699
        %v713 = vmul.f32 %v691, %v699
        %v714 = vmul.f32 %v692, %v699
        %v715 = vmul.f32 %v693, %v699
        %v716 = vmul.f32 %v694, %v699
        %v718 = vlaneseq
        %v719 = vshrl.u32 %v718, 7
        %v720 = vsub.s32 0, %v719
        %v721 = vrot.slane %v484, %v720
        %v723 = vadd.f32 %v701, %v721
        %v724 = vadd.f32 %v702, %v721
        %v725 = vadd.f32 %v703, %v721
        %v726 = vadd.f32 %v704, %v721
        %v727 = vadd.f32 %v705, %v721
        %v728 = vadd.f32 %v706, %v721
        %v729 = vadd.f32 %v707, %v721
        %v730 = vadd.f32 %v708, %v721
        %v731 = vadd.f32 %v709, %v721
        %v732 = vadd.f32 %v710, %v721
        %v733 = vadd.f32 %v711, %v721
        %v734 = vadd.f32 %v712, %v721
        %v735 = vadd.f32 %v713, %v721
        %v736 = vadd.f32 %v714, %v721
        %v737 = vadd.f32 %v715, %v721
        %v738 = vadd.f32 %v716, %v721
        %v739 = vpack.c.bf16 %v724, %v723
        %v740 = vpack.c.bf16 %v726, %v725
        %v741 = vpack.c.bf16 %v728, %v727
        %v742 = vpack.c.bf16 %v730, %v729
        %v743 = vpack.c.bf16 %v732, %v731
        %v744 = vpack.c.bf16 %v734, %v733
        %v745 = vpack.c.bf16 %v736, %v735
        %v746 = vpack.c.bf16 %v738, %v737
        %v747 = vld [vmem:[%s4] sm:$0xff]
        %v748 = vld [vmem:[%s4 + $0x8] sm:$0xff]
        %v749 = vld [vmem:[%s4 + $0x10] sm:$0xff]
        %v750 = vld [vmem:[%s4 + $0x18] sm:$0xff]
        %v751 = vld [vmem:[%s4 + $0x20] sm:$0xff]
        %v752 = vld [vmem:[%s4 + $0x28] sm:$0xff]
        %v753 = vld [vmem:[%s4 + $0x30] sm:$0xff]
        %v754 = vld [vmem:[%s4 + $0x38] sm:$0xff]
        %v755 = vld [vmem:[%s5] sm:$0x3]
        %v757 = vlaneseq
        %v758 = vshrl.u32 %v757, 7
        %v759 = vsub.s32 0, %v758
        %v760 = vrot.slane %v755, %v759
        %v761 = vlaneseq
        %v762 = vshrl.u32 %v761, 7
        %v763 = vsub.s32 1, %v762
        %v764 = vrot.slane %v755, %v763
        %v775 = vunpack.c.l.b16 %v747
        %v776 = vunpack.c.h.b16 %v747
        %v777 = vunpack.c.l.b16 %v748
        %v778 = vunpack.c.h.b16 %v748
        %v779 = vunpack.c.l.b16 %v749
        %v780 = vunpack.c.h.b16 %v749
        %v781 = vunpack.c.l.b16 %v750
        %v782 = vunpack.c.h.b16 %v750
        %v783 = vunpack.c.l.b16 %v751
        %v784 = vunpack.c.h.b16 %v751
        %v785 = vunpack.c.l.b16 %v752
        %v786 = vunpack.c.h.b16 %v752
        %v787 = vunpack.c.l.b16 %v753
        %v788 = vunpack.c.h.b16 %v753
        %v789 = vunpack.c.l.b16 %v754
        %v790 = vunpack.c.h.b16 %v754
        %v791 = vpack.c.b16 %v777, %v775
        %v792 = vpack.c.b16 %v778, %v776
        %v793 = vpack.c.b16 %v781, %v779
        %v794 = vpack.c.b16 %v782, %v780
        %v795 = vpack.c.b16 %v785, %v783
        %v796 = vpack.c.b16 %v786, %v784
        %v797 = vpack.c.b16 %v789, %v787
        %v798 = vpack.c.b16 %v790, %v788
        %v808 = vsel %vm485, %v739, 0
        %v811 = vsel %vm485, %v740, 0
        %v814 = vsel %vm485, %v741, 0
        %v817 = vsel %vm485, %v742, 0
        %v820 = vsel %vm485, %v743, 0
        %v823 = vsel %vm485, %v744, 0
        %v826 = vsel %vm485, %v745, 0
        %v829 = vsel %vm485, %v746, 0
        %831 = vmatprep.subr.bf16.mxu0 %v792
        %832 = vmatpush1.bf16.msra.mxu0 %v791
        %833 = vmatprep.subr.bf16.mxu0 %v794
        %834 = vmatpush1.bf16.msra.mxu0 %v793
        %835 = vmatprep.subr.bf16.mxu0 %v796
        %836 = vmatpush1.bf16.msra.mxu0 %v795
        %837 = vmatprep.subr.bf16.mxu0 %v798
        %838 = vmatpush1.bf16.msra.mxu0 %v797
        %839 = vmatprep.subr.bf16.mxu0 0
        %840 = vmatpush1.bf16.msra.mxu0 0
        %841 = vmatprep.subr.bf16.mxu0 0
        %842 = vmatpush1.bf16.msra.mxu0 0
        %843 = vmatprep.subr.bf16.mxu0 0
        %844 = vmatpush1.bf16.msra.mxu0 0
        %845 = vmatprep.subr.bf16.mxu0 0
        %846 = vmatpush1.bf16.msra.mxu0 0
        %847 = vmatprep.subr.bf16.mxu0 0
        %848 = vmatpush1.bf16.msra.mxu0 0
        %849 = vmatprep.subr.bf16.mxu0 0
        %850 = vmatpush1.bf16.msra.mxu0 0
        %851 = vmatprep.subr.bf16.mxu0 0
        %852 = vmatpush1.bf16.msra.mxu0 0
        %853 = vmatprep.subr.bf16.mxu0 0
        %854 = vmatpush1.bf16.msra.mxu0 0
        %855 = vmatprep.subr.bf16.mxu0 0
        %856 = vmatpush1.bf16.msra.mxu0 0
        %857 = vmatprep.subr.bf16.mxu0 0
        %858 = vmatpush1.bf16.msra.mxu0 0
        %859 = vmatprep.subr.bf16.mxu0 0
        %860 = vmatpush1.bf16.msra.mxu0 0
        %861 = vmatprep.subr.bf16.mxu0 0
        %862 = vmatpush1.bf16.msra.mxu0 0
        %863 = vmatprep.mubr.bf16.mxu0 0
        %864 = vmatmul.mubr.bf16.gmra.mrb[0].mxu0 %v808
        %v865 = vpop.f32.mrb[0].mxu0
        %v866 = vadd.f32 %v760, %v865
        %v867 = vpop.f32.mrb[0].mxu0
        %v868 = vadd.f32 %v764, %v867
        %v869 = vpop.f32.mrb[0].mxu0
        %v870 = vadd.f32 %v760, %v869
        %v871 = vpop.f32.mrb[0].mxu0
        %v872 = vadd.f32 %v764, %v871
        %873 = vmatprep.mubr.bf16.mxu0 0
        %874 = vmatmul.mubr.bf16.gmra.mrb[0].mxu0 %v811
        %v875 = vpop.f32.mrb[0].mxu0
        %v876 = vadd.f32 %v760, %v875
        %v877 = vpop.f32.mrb[0].mxu0
        %v878 = vadd.f32 %v764, %v877
        %v879 = vpop.f32.mrb[0].mxu0
        %v880 = vadd.f32 %v760, %v879
        %v881 = vpop.f32.mrb[0].mxu0
        %v882 = vadd.f32 %v764, %v881
        %883 = vmatprep.mubr.bf16.mxu0 0
        %884 = vmatmul.mubr.bf16.gmra.mrb[0].mxu0 %v814
        %v885 = vpop.f32.mrb[0].mxu0
        %v886 = vadd.f32 %v760, %v885
        %v887 = vpop.f32.mrb[0].mxu0
        %v888 = vadd.f32 %v764, %v887
        %v889 = vpop.f32.mrb[0].mxu0
        %v890 = vadd.f32 %v760, %v889
        %v891 = vpop.f32.mrb[0].mxu0
        %v892 = vadd.f32 %v764, %v891
        %893 = vmatprep.mubr.bf16.mxu0 0
        %894 = vmatmul.mubr.bf16.gmra.mrb[0].mxu0 %v817
        %v895 = vpop.f32.mrb[0].mxu0
        %v896 = vadd.f32 %v760, %v895
        %v897 = vpop.f32.mrb[0].mxu0
        %v898 = vadd.f32 %v764, %v897
        %v899 = vpop.f32.mrb[0].mxu0
        %v900 = vadd.f32 %v760, %v899
        %v901 = vpop.f32.mrb[0].mxu0
        %v902 = vadd.f32 %v764, %v901
        %903 = vmatprep.mubr.bf16.mxu0 0
        %904 = vmatmul.mubr.bf16.gmra.mrb[0].mxu0 %v820
        %v905 = vpop.f32.mrb[0].mxu0
        %v906 = vadd.f32 %v760, %v905
        %v907 = vpop.f32.mrb[0].mxu0
        %v908 = vadd.f32 %v764, %v907
        %v909 = vpop.f32.mrb[0].mxu0
        %v910 = vadd.f32 %v760, %v909
        %v911 = vpop.f32.mrb[0].mxu0
        %v912 = vadd.f32 %v764, %v911
        %913 = vmatprep.mubr.bf16.mxu0 0
        %914 = vmatmul.mubr.bf16.gmra.mrb[0].mxu0 %v823
        %v915 = vpop.f32.mrb[0].mxu0
        %v916 = vadd.f32 %v760, %v915
        %v917 = vpop.f32.mrb[0].mxu0
        %v918 = vadd.f32 %v764, %v917
        %v919 = vpop.f32.mrb[0].mxu0
        %v920 = vadd.f32 %v760, %v919
        %v921 = vpop.f32.mrb[0].mxu0
        %v922 = vadd.f32 %v764, %v921
        %923 = vmatprep.mubr.bf16.mxu0 0
        %924 = vmatmul.mubr.bf16.gmra.mrb[0].mxu0 %v826
        %v925 = vpop.f32.mrb[0].mxu0
        %v926 = vadd.f32 %v760, %v925
        %v927 = vpop.f32.mrb[0].mxu0
        %v928 = vadd.f32 %v764, %v927
        %v929 = vpop.f32.mrb[0].mxu0
        %v930 = vadd.f32 %v760, %v929
        %v931 = vpop.f32.mrb[0].mxu0
        %v932 = vadd.f32 %v764, %v931
        %933 = vmatprep.mubr.bf16.mxu0 0
        %934 = vmatmul.mubr.bf16.gmra.mrb[0].mxu0 %v829
        %v935 = vpop.f32.mrb[0].mxu0
        %v936 = vadd.f32 %v760, %v935
        %v937 = vpop.f32.mrb[0].mxu0
        %v938 = vadd.f32 %v764, %v937
        %v939 = vpop.f32.mrb[0].mxu0
        %v940 = vadd.f32 %v760, %v939
        %v941 = vpop.f32.mrb[0].mxu0
        %v942 = vadd.f32 %v764, %v941
        %943 = vdwg.mxu0
        %v944 = vpack.c.bf16 %v870, %v866
        %v945 = vpack.c.bf16 %v872, %v868
        %v946 = vpack.c.bf16 %v880, %v876
        %v947 = vpack.c.bf16 %v882, %v878
        %v948 = vpack.c.bf16 %v890, %v886
        %v949 = vpack.c.bf16 %v892, %v888
        %v950 = vpack.c.bf16 %v900, %v896
        %v951 = vpack.c.bf16 %v902, %v898
        %v952 = vpack.c.bf16 %v910, %v906
        %v953 = vpack.c.bf16 %v912, %v908
        %v954 = vpack.c.bf16 %v920, %v916
        %v955 = vpack.c.bf16 %v922, %v918
        %v956 = vpack.c.bf16 %v930, %v926
        %v957 = vpack.c.bf16 %v932, %v928
        %v958 = vpack.c.bf16 %v940, %v936
        %v959 = vpack.c.bf16 %v942, %v938
        %968 = vrot.lane.b32.xlu0 %v944, 64
        %v969 = vpop.permute.xlu0 %968
        %970 = vrot.lane.b32.xlu0 %v946, 64
        %v971 = vpop.permute.xlu0 %970
        %972 = vrot.lane.b32.xlu0 %v948, 64
        %v973 = vpop.permute.xlu0 %972
        %974 = vrot.lane.b32.xlu0 %v950, 64
        %v975 = vpop.permute.xlu0 %974
        %976 = vrot.lane.b32.xlu0 %v952, 64
        %v977 = vpop.permute.xlu0 %976
        %978 = vrot.lane.b32.xlu0 %v954, 64
        %v979 = vpop.permute.xlu0 %978
        %980 = vrot.lane.b32.xlu0 %v956, 64
        %v981 = vpop.permute.xlu0 %980
        %982 = vrot.lane.b32.xlu0 %v958, 64
        %v983 = vpop.permute.xlu0 %982
        %vm984 = vcmask 261120
        %v986 = vsel %vm984, %v944, 0
        %v989 = vsel %vm984, %v946, 0
        %v992 = vsel %vm984, %v948, 0
        %v995 = vsel %vm984, %v950, 0
        %v998 = vsel %vm984, %v952, 0
        %v1001 = vsel %vm984, %v954, 0
        %v1004 = vsel %vm984, %v956, 0
        %v1007 = vsel %vm984, %v958, 0
        %v1010 = vsel %vm984, %v969, 0
        %v1013 = vsel %vm984, %v971, 0
        %v1016 = vsel %vm984, %v973, 0
        %v1019 = vsel %vm984, %v975, 0
        %v1022 = vsel %vm984, %v977, 0
        %v1025 = vsel %vm984, %v979, 0
        %v1028 = vsel %vm984, %v981, 0
        %v1031 = vsel %vm984, %v983, 0
        %1033 = vmatprep.subr.bf16.mxu0 0
        %1034 = vmatpush1.bf16.xpose.msra.mxu0 %v1010
        %1035 = vmatprep.subr.bf16.mxu0 0
        %1036 = vmatpush1.bf16.xpose.msra.mxu0 %v1013
        %1037 = vmatprep.subr.bf16.mxu0 0
        %1038 = vmatpush1.bf16.xpose.msra.mxu0 %v1016
        %1039 = vmatprep.subr.bf16.mxu0 0
        %1040 = vmatpush1.bf16.xpose.msra.mxu0 %v1019
        %1041 = vmatprep.subr.bf16.mxu0 0
        %1042 = vmatpush1.bf16.xpose.msra.mxu0 %v1022
        %1043 = vmatprep.subr.bf16.mxu0 0
        %1044 = vmatpush1.bf16.xpose.msra.mxu0 %v1025
        %1045 = vmatprep.subr.bf16.mxu0 0
        %1046 = vmatpush1.bf16.xpose.msra.mxu0 %v1028
        %1047 = vmatprep.subr.bf16.mxu0 0
        %1048 = vmatpush1.bf16.xpose.msra.mxu0 %v1031
        %1049 = vmatprep.subr.bf16.mxu0 0
        %1050 = vmatpush1.bf16.xpose.msra.mxu0 0
        %1051 = vmatprep.subr.bf16.mxu0 0
        %1052 = vmatpush1.bf16.xpose.msra.mxu0 0
        %1053 = vmatprep.subr.bf16.mxu0 0
        %1054 = vmatpush1.bf16.xpose.msra.mxu0 0
        %1055 = vmatprep.subr.bf16.mxu0 0
        %1056 = vmatpush1.bf16.xpose.msra.mxu0 0
        %1057 = vmatprep.subr.bf16.mxu0 0
        %1058 = vmatpush1.bf16.xpose.msra.mxu0 0
        %1059 = vmatprep.subr.bf16.mxu0 0
        %1060 = vmatpush1.bf16.xpose.msra.mxu0 0
        %1061 = vmatprep.subr.bf16.mxu0 0
        %1062 = vmatpush1.bf16.xpose.msra.mxu0 0
        %1063 = vmatprep.subr.bf16.mxu0 0
        %1064 = vmatpush1.bf16.xpose.msra.mxu0 0
        %1065 = vmatprep.mubr.bf16.mxu0 0
        %1066 = vmatmul.mubr.bf16.gmra.mrb[0].mxu0 %v986
        %v1067 = vpop.f32.mrb[0].mxu0
        %v1068 = vadd.f32 0.0, %v1067
        %v1069 = vpop.f32.mrb[0].mxu0
        %v1070 = vpop.f32.mrb[0].mxu0
        %v1071 = vadd.f32 0.0, %v1070
        %v1072 = vpop.f32.mrb[0].mxu0
        %1073 = vmatprep.mubr.bf16.mxu0 0
        %1074 = vmatmul.mubr.bf16.gmra.mrb[0].mxu0 %v989
        %v1075 = vpop.f32.mrb[0].mxu0
        %v1076 = vadd.f32 0.0, %v1075
        %v1077 = vpop.f32.mrb[0].mxu0
        %v1078 = vpop.f32.mrb[0].mxu0
        %v1079 = vadd.f32 0.0, %v1078
        %v1080 = vpop.f32.mrb[0].mxu0
        %1081 = vmatprep.mubr.bf16.mxu0 0
        %1082 = vmatmul.mubr.bf16.gmra.mrb[0].mxu0 %v992
        %v1083 = vpop.f32.mrb[0].mxu0
        %v1084 = vadd.f32 0.0, %v1083
        %v1085 = vpop.f32.mrb[0].mxu0
        %v1086 = vpop.f32.mrb[0].mxu0
        %v1087 = vadd.f32 0.0, %v1086
        %v1088 = vpop.f32.mrb[0].mxu0
        %1089 = vmatprep.mubr.bf16.mxu0 0
        %1090 = vmatmul.mubr.bf16.gmra.mrb[0].mxu0 %v995
        %v1091 = vpop.f32.mrb[0].mxu0
        %v1092 = vadd.f32 0.0, %v1091
        %v1093 = vpop.f32.mrb[0].mxu0
        %v1094 = vpop.f32.mrb[0].mxu0
        %v1095 = vadd.f32 0.0, %v1094
        %v1096 = vpop.f32.mrb[0].mxu0
        %1097 = vmatprep.mubr.bf16.mxu0 0
        %1098 = vmatmul.mubr.bf16.gmra.mrb[0].mxu0 %v998
        %v1099 = vpop.f32.mrb[0].mxu0
        %v1100 = vadd.f32 0.0, %v1099
        %v1101 = vpop.f32.mrb[0].mxu0
        %v1102 = vpop.f32.mrb[0].mxu0
        %v1103 = vadd.f32 0.0, %v1102
        %v1104 = vpop.f32.mrb[0].mxu0
        %1105 = vmatprep.mubr.bf16.mxu0 0
        %1106 = vmatmul.mubr.bf16.gmra.mrb[0].mxu0 %v1001
        %v1107 = vpop.f32.mrb[0].mxu0
        %v1108 = vadd.f32 0.0, %v1107
        %v1109 = vpop.f32.mrb[0].mxu0
        %v1110 = vpop.f32.mrb[0].mxu0
        %v1111 = vadd.f32 0.0, %v1110
        %v1112 = vpop.f32.mrb[0].mxu0
        %1113 = vmatprep.mubr.bf16.mxu0 0
        %1114 = vmatmul.mubr.bf16.gmra.mrb[0].mxu0 %v1004
        %v1115 = vpop.f32.mrb[0].mxu0
        %v1116 = vadd.f32 0.0, %v1115
        %v1117 = vpop.f32.mrb[0].mxu0
        %v1118 = vpop.f32.mrb[0].mxu0
        %v1119 = vadd.f32 0.0, %v1118
        %v1120 = vpop.f32.mrb[0].mxu0
        %1121 = vmatprep.mubr.bf16.mxu0 0
        %1122 = vmatmul.mubr.bf16.gmra.mrb[0].mxu0 %v1007
        %v1123 = vpop.f32.mrb[0].mxu0
        %v1124 = vadd.f32 0.0, %v1123
        %v1125 = vpop.f32.mrb[0].mxu0
        %v1126 = vpop.f32.mrb[0].mxu0
        %v1127 = vadd.f32 0.0, %v1126
        %v1128 = vpop.f32.mrb[0].mxu0
        %1129 = vdwg.mxu0
        %1130 = vmax.xlane.f32.xlu0 %v1068
        %v1131 = vpop.xlane.xlu0 %1130
        %1132 = vmax.xlane.f32.xlu0 %v1071
        %v1133 = vpop.xlane.xlu0 %1132
        %1134 = vmax.xlane.f32.xlu0 %v1076
        %v1135 = vpop.xlane.xlu0 %1134
        %1136 = vmax.xlane.f32.xlu0 %v1079
        %v1137 = vpop.xlane.xlu0 %1136
        %1138 = vmax.xlane.f32.xlu0 %v1084
        %v1139 = vpop.xlane.xlu0 %1138
        %1140 = vmax.xlane.f32.xlu0 %v1087
        %v1141 = vpop.xlane.xlu0 %1140
        %1142 = vmax.xlane.f32.xlu0 %v1092
        %v1143 = vpop.xlane.xlu0 %1142
        %1144 = vmax.xlane.f32.xlu0 %v1095
        %v1145 = vpop.xlane.xlu0 %1144
        %1146 = vmax.xlane.f32.xlu0 %v1100
        %v1147 = vpop.xlane.xlu0 %1146
        %1148 = vmax.xlane.f32.xlu0 %v1103
        %v1149 = vpop.xlane.xlu0 %1148
        %1150 = vmax.xlane.f32.xlu0 %v1108
        %v1151 = vpop.xlane.xlu0 %1150
        %1152 = vmax.xlane.f32.xlu0 %v1111
        %v1153 = vpop.xlane.xlu0 %1152
        %1154 = vmax.xlane.f32.xlu0 %v1116
        %v1155 = vpop.xlane.xlu0 %1154
        %1156 = vmax.xlane.f32.xlu0 %v1119
        %v1157 = vpop.xlane.xlu0 %1156
        %1158 = vmax.xlane.f32.xlu0 %v1124
        %v1159 = vpop.xlane.xlu0 %1158
        %1160 = vmax.xlane.f32.xlu0 %v1127
        %v1161 = vpop.xlane.xlu0 %1160
        %v1162 = vsub.f32 %v1068, %v1131
        %v1163 = vsub.f32 %v1071, %v1133
        %v1164 = vsub.f32 %v1076, %v1135
        %v1165 = vsub.f32 %v1079, %v1137
        %v1166 = vsub.f32 %v1084, %v1139
        %v1167 = vsub.f32 %v1087, %v1141
        %v1168 = vsub.f32 %v1092, %v1143
        %v1169 = vsub.f32 %v1095, %v1145
        %v1170 = vsub.f32 %v1100, %v1147
        %v1171 = vsub.f32 %v1103, %v1149
        %v1172 = vsub.f32 %v1108, %v1151
        %v1173 = vsub.f32 %v1111, %v1153
        %v1174 = vsub.f32 %v1116, %v1155
        %v1175 = vsub.f32 %v1119, %v1157
        %v1176 = vsub.f32 %v1124, %v1159
        %v1177 = vsub.f32 %v1127, %v1161
        %v1178 = vmul.f32 %v1162, 1.442695
        %v1179 = vpow.pop %v1178
        %v1180 = vmul.f32 %v1163, 1.442695
        %v1181 = vpow.pop %v1180
        %v1182 = vmul.f32 %v1164, 1.442695
        %v1183 = vpow.pop %v1182
        %v1184 = vmul.f32 %v1165, 1.442695
        %v1185 = vpow.pop %v1184
        %v1186 = vmul.f32 %v1166, 1.442695
        %v1187 = vpow.pop %v1186
        %v1188 = vmul.f32 %v1167, 1.442695
        %v1189 = vpow.pop %v1188
        %v1190 = vmul.f32 %v1168, 1.442695
        %v1191 = vpow.pop %v1190
        %v1192 = vmul.f32 %v1169, 1.442695
        %v1193 = vpow.pop %v1192
        %v1194 = vmul.f32 %v1170, 1.442695
        %v1195 = vpow.pop %v1194
        %v1196 = vmul.f32 %v1171, 1.442695
        %v1197 = vpow.pop %v1196
        %v1198 = vmul.f32 %v1172, 1.442695
        %v1199 = vpow.pop %v1198
        %v1200 = vmul.f32 %v1173, 1.442695
        %v1201 = vpow.pop %v1200
        %v1202 = vmul.f32 %v1174, 1.442695
        %v1203 = vpow.pop %v1202
        %v1204 = vmul.f32 %v1175, 1.442695
        %v1205 = vpow.pop %v1204
        %v1206 = vmul.f32 %v1176, 1.442695
        %v1207 = vpow.pop %v1206
        %v1208 = vmul.f32 %v1177, 1.442695
        %v1209 = vpow.pop %v1208
        %1210 = vadd.xlane.f32.xlu0 %v1179
        %v1211 = vpop.xlane.xlu0 %1210
        %1212 = vadd.xlane.f32.xlu0 %v1181
        %v1213 = vpop.xlane.xlu0 %1212
        %1214 = vadd.xlane.f32.xlu0 %v1183
        %v1215 = vpop.xlane.xlu0 %1214
        %1216 = vadd.xlane.f32.xlu0 %v1185
        %v1217 = vpop.xlane.xlu0 %1216
        %1218 = vadd.xlane.f32.xlu0 %v1187
        %v1219 = vpop.xlane.xlu0 %1218
        %1220 = vadd.xlane.f32.xlu0 %v1189
        %v1221 = vpop.xlane.xlu0 %1220
        %1222 = vadd.xlane.f32.xlu0 %v1191
        %v1223 = vpop.xlane.xlu0 %1222
        %1224 = vadd.xlane.f32.xlu0 %v1193
        %v1225 = vpop.xlane.xlu0 %1224
        %1226 = vadd.xlane.f32.xlu0 %v1195
        %v1227 = vpop.xlane.xlu0 %1226
        %1228 = vadd.xlane.f32.xlu0 %v1197
        %v1229 = vpop.xlane.xlu0 %1228
        %1230 = vadd.xlane.f32.xlu0 %v1199
        %v1231 = vpop.xlane.xlu0 %1230
        %1232 = vadd.xlane.f32.xlu0 %v1201
        %v1233 = vpop.xlane.xlu0 %1232
        %1234 = vadd.xlane.f32.xlu0 %v1203
        %v1235 = vpop.xlane.xlu0 %1234
        %1236 = vadd.xlane.f32.xlu0 %v1205
        %v1237 = vpop.xlane.xlu0 %1236
        %1238 = vadd.xlane.f32.xlu0 %v1207
        %v1239 = vpop.xlane.xlu0 %1238
        %1240 = vadd.xlane.f32.xlu0 %v1209
        %v1241 = vpop.xlane.xlu0 %1240
        %v1242 = vrcp.pop %v1211
        %v1243 = vrcp.pop %v1213
        %v1244 = vrcp.pop %v1215
        %v1245 = vrcp.pop %v1217
        %v1246 = vrcp.pop %v1219
        %v1247 = vrcp.pop %v1221
        %v1248 = vrcp.pop %v1223
        %v1249 = vrcp.pop %v1225
        %v1250 = vrcp.pop %v1227
        %v1251 = vrcp.pop %v1229
        %v1252 = vrcp.pop %v1231
        %v1253 = vrcp.pop %v1233
        %v1254 = vrcp.pop %v1235
        %v1255 = vrcp.pop %v1237
        %v1256 = vrcp.pop %v1239
        %v1257 = vrcp.pop %v1241
        %v1258 = vmul.f32 %v1179, %v1242
        %v1259 = vmul.f32 %v1181, %v1243
        %v1260 = vmul.f32 %v1183, %v1244
        %v1261 = vmul.f32 %v1185, %v1245
        %v1262 = vmul.f32 %v1187, %v1246
        %v1263 = vmul.f32 %v1189, %v1247
        %v1264 = vmul.f32 %v1191, %v1248
        %v1265 = vmul.f32 %v1193, %v1249
        %v1266 = vmul.f32 %v1195, %v1250
        %v1267 = vmul.f32 %v1197, %v1251
        %v1268 = vmul.f32 %v1199, %v1252
        %v1269 = vmul.f32 %v1201, %v1253
        %v1270 = vmul.f32 %v1203, %v1254
        %v1271 = vmul.f32 %v1205, %v1255
        %v1272 = vmul.f32 %v1207, %v1256
        %v1273 = vmul.f32 %v1209, %v1257
        %v1274 = vpack.c.bf16 %v1259, %v1258
        %v1275 = vpack.c.bf16 %v1261, %v1260
        %v1276 = vpack.c.bf16 %v1263, %v1262
        %v1277 = vpack.c.bf16 %v1265, %v1264
        %v1278 = vpack.c.bf16 %v1267, %v1266
        %v1279 = vpack.c.bf16 %v1269, %v1268
        %v1280 = vpack.c.bf16 %v1271, %v1270
        %v1281 = vpack.c.bf16 %v1273, %v1272
        %1282 = vmatprep.subr.bf16.mxu0 0
        %1283 = vmatpush1.bf16.msra.mxu0 %v945
        %1284 = vmatprep.subr.bf16.mxu0 0
        %1285 = vmatpush1.bf16.msra.mxu0 %v947
        %1286 = vmatprep.subr.bf16.mxu0 0
        %1287 = vmatpush1.bf16.msra.mxu0 %v949
        %1288 = vmatprep.subr.bf16.mxu0 0
        %1289 = vmatpush1.bf16.msra.mxu0 %v951
        %1290 = vmatprep.subr.bf16.mxu0 0
        %1291 = vmatpush1.bf16.msra.mxu0 %v953
        %1292 = vmatprep.subr.bf16.mxu0 0
        %1293 = vmatpush1.bf16.msra.mxu0 %v955
        %1294 = vmatprep.subr.bf16.mxu0 0
        %1295 = vmatpush1.bf16.msra.mxu0 %v957
        %1296 = vmatprep.subr.bf16.mxu0 0
        %1297 = vmatpush1.bf16.msra.mxu0 %v959
        %1298 = vmatprep.subr.bf16.mxu0 0
        %1299 = vmatpush1.bf16.msra.mxu0 0
        %1300 = vmatprep.subr.bf16.mxu0 0
        %1301 = vmatpush1.bf16.msra.mxu0 0
        %1302 = vmatprep.subr.bf16.mxu0 0
        %1303 = vmatpush1.bf16.msra.mxu0 0
        %1304 = vmatprep.subr.bf16.mxu0 0
        %1305 = vmatpush1.bf16.msra.mxu0 0
        %1306 = vmatprep.subr.bf16.mxu0 0
        %1307 = vmatpush1.bf16.msra.mxu0 0
        %1308 = vmatprep.subr.bf16.mxu0 0
        %1309 = vmatpush1.bf16.msra.mxu0 0
        %1310 = vmatprep.subr.bf16.mxu0 0
        %1311 = vmatpush1.bf16.msra.mxu0 0
        %1312 = vmatprep.subr.bf16.mxu0 0
        %1313 = vmatpush1.bf16.msra.mxu0 0
        %1314 = vmatprep.mubr.bf16.mxu0 0
        %1315 = vmatmul.mubr.bf16.gmra.mrb[0].mxu0 %v1274
        %v1316 = vpop.f32.mrb[0].mxu0
        %v1317 = vadd.f32 0.0, %v1316
        %v1318 = vpop.f32.mrb[0].mxu0
        %v1319 = vpop.f32.mrb[0].mxu0
        %v1320 = vadd.f32 0.0, %v1319
        %v1321 = vpop.f32.mrb[0].mxu0
        %1322 = vmatprep.mubr.bf16.mxu0 0
        %1323 = vmatmul.mubr.bf16.gmra.mrb[0].mxu0 %v1275
        %v1324 = vpop.f32.mrb[0].mxu0
        %v1325 = vadd.f32 0.0, %v1324
        %v1326 = vpop.f32.mrb[0].mxu0
        %v1327 = vpop.f32.mrb[0].mxu0
        %v1328 = vadd.f32 0.0, %v1327
        %v1329 = vpop.f32.mrb[0].mxu0
        %1330 = vmatprep.mubr.bf16.mxu0 0
        %1331 = vmatmul.mubr.bf16.gmra.mrb[0].mxu0 %v1276
        %v1332 = vpop.f32.mrb[0].mxu0
        %v1333 = vadd.f32 0.0, %v1332
        %v1334 = vpop.f32.mrb[0].mxu0
        %v1335 = vpop.f32.mrb[0].mxu0
        %v1336 = vadd.f32 0.0, %v1335
        %v1337 = vpop.f32.mrb[0].mxu0
        %1338 = vmatprep.mubr.bf16.mxu0 0
        %1339 = vmatmul.mubr.bf16.gmra.mrb[0].mxu0 %v1277
        %v1340 = vpop.f32.mrb[0].mxu0
        %v1341 = vadd.f32 0.0, %v1340
        %v1342 = vpop.f32.mrb[0].mxu0
        %v1343 = vpop.f32.mrb[0].mxu0
        %v1344 = vadd.f32 0.0, %v1343
        %v1345 = vpop.f32.mrb[0].mxu0
        %1346 = vmatprep.mubr.bf16.mxu0 0
        %1347 = vmatmul.mubr.bf16.gmra.mrb[0].mxu0 %v1278
        %v1348 = vpop.f32.mrb[0].mxu0
        %v1349 = vadd.f32 0.0, %v1348
        %v1350 = vpop.f32.mrb[0].mxu0
        %v1351 = vpop.f32.mrb[0].mxu0
        %v1352 = vadd.f32 0.0, %v1351
        %v1353 = vpop.f32.mrb[0].mxu0
        %1354 = vmatprep.mubr.bf16.mxu0 0
        %1355 = vmatmul.mubr.bf16.gmra.mrb[0].mxu0 %v1279
        %v1356 = vpop.f32.mrb[0].mxu0
        %v1357 = vadd.f32 0.0, %v1356
        %v1358 = vpop.f32.mrb[0].mxu0
        %v1359 = vpop.f32.mrb[0].mxu0
        %v1360 = vadd.f32 0.0, %v1359
        %v1361 = vpop.f32.mrb[0].mxu0
        %1362 = vmatprep.mubr.bf16.mxu0 0
        %1363 = vmatmul.mubr.bf16.gmra.mrb[0].mxu0 %v1280
        %v1364 = vpop.f32.mrb[0].mxu0
        %v1365 = vadd.f32 0.0, %v1364
        %v1366 = vpop.f32.mrb[0].mxu0
        %v1367 = vpop.f32.mrb[0].mxu0
        %v1368 = vadd.f32 0.0, %v1367
        %v1369 = vpop.f32.mrb[0].mxu0
        %1370 = vmatprep.mubr.bf16.mxu0 0
        %1371 = vmatmul.mubr.bf16.gmra.mrb[0].mxu0 %v1281
        %v1372 = vpop.f32.mrb[0].mxu0
        %v1373 = vadd.f32 0.0, %v1372
        %v1374 = vpop.f32.mrb[0].mxu0
        %v1375 = vpop.f32.mrb[0].mxu0
        %v1376 = vadd.f32 0.0, %v1375
        %v1377 = vpop.f32.mrb[0].mxu0
        %1378 = vdwg.mxu0
        %1379 = vrot.lane.b32.xlu0 %v944, 96
        %v1380 = vpop.permute.xlu0 %1379
        %1381 = vrot.lane.b32.xlu0 %v946, 96
        %v1382 = vpop.permute.xlu0 %1381
        %1383 = vrot.lane.b32.xlu0 %v948, 96
        %v1384 = vpop.permute.xlu0 %1383
        %1385 = vrot.lane.b32.xlu0 %v950, 96
        %v1386 = vpop.permute.xlu0 %1385
        %1387 = vrot.lane.b32.xlu0 %v952, 96
        %v1388 = vpop.permute.xlu0 %1387
        %1389 = vrot.lane.b32.xlu0 %v954, 96
        %v1390 = vpop.permute.xlu0 %1389
        %1391 = vrot.lane.b32.xlu0 %v956, 96
        %v1392 = vpop.permute.xlu0 %1391
        %1393 = vrot.lane.b32.xlu0 %v958, 96
        %v1394 = vpop.permute.xlu0 %1393
        %1395 = vrot.lane.b32.xlu0 %v944, 32
        %v1396 = vpop.permute.xlu0 %1395
        %1397 = vrot.lane.b32.xlu0 %v946, 32
        %v1398 = vpop.permute.xlu0 %1397
        %1399 = vrot.lane.b32.xlu0 %v948, 32
        %v1400 = vpop.permute.xlu0 %1399
        %1401 = vrot.lane.b32.xlu0 %v950, 32
        %v1402 = vpop.permute.xlu0 %1401
        %1403 = vrot.lane.b32.xlu0 %v952, 32
        %v1404 = vpop.permute.xlu0 %1403
        %1405 = vrot.lane.b32.xlu0 %v954, 32
        %v1406 = vpop.permute.xlu0 %1405
        %1407 = vrot.lane.b32.xlu0 %v956, 32
        %v1408 = vpop.permute.xlu0 %1407
        %1409 = vrot.lane.b32.xlu0 %v958, 32
        %v1410 = vpop.permute.xlu0 %1409
        %v1412 = vsel %vm984, %v1380, 0
        %v1415 = vsel %vm984, %v1382, 0
        %v1418 = vsel %vm984, %v1384, 0
        %v1421 = vsel %vm984, %v1386, 0
        %v1424 = vsel %vm984, %v1388, 0
        %v1427 = vsel %vm984, %v1390, 0
        %v1430 = vsel %vm984, %v1392, 0
        %v1433 = vsel %vm984, %v1394, 0
        %v1436 = vsel %vm984, %v1396, 0
        %v1439 = vsel %vm984, %v1398, 0
        %v1442 = vsel %vm984, %v1400, 0
        %v1445 = vsel %vm984, %v1402, 0
        %v1448 = vsel %vm984, %v1404, 0
        %v1451 = vsel %vm984, %v1406, 0
        %v1454 = vsel %vm984, %v1408, 0
        %v1457 = vsel %vm984, %v1410, 0
        %1459 = vmatprep.subr.bf16.mxu0 0
        %1460 = vmatpush1.bf16.xpose.msra.mxu0 %v1436
        %1461 = vmatprep.subr.bf16.mxu0 0
        %1462 = vmatpush1.bf16.xpose.msra.mxu0 %v1439
        %1463 = vmatprep.subr.bf16.mxu0 0
        %1464 = vmatpush1.bf16.xpose.msra.mxu0 %v1442
        %1465 = vmatprep.subr.bf16.mxu0 0
        %1466 = vmatpush1.bf16.xpose.msra.mxu0 %v1445
        %1467 = vmatprep.subr.bf16.mxu0 0
        %1468 = vmatpush1.bf16.xpose.msra.mxu0 %v1448
        %1469 = vmatprep.subr.bf16.mxu0 0
        %1470 = vmatpush1.bf16.xpose.msra.mxu0 %v1451
        %1471 = vmatprep.subr.bf16.mxu0 0
        %1472 = vmatpush1.bf16.xpose.msra.mxu0 %v1454
        %1473 = vmatprep.subr.bf16.mxu0 0
        %1474 = vmatpush1.bf16.xpose.msra.mxu0 %v1457
        %1475 = vmatprep.subr.bf16.mxu0 0
        %1476 = vmatpush1.bf16.xpose.msra.mxu0 0
        %1477 = vmatprep.subr.bf16.mxu0 0
        %1478 = vmatpush1.bf16.xpose.msra.mxu0 0
        %1479 = vmatprep.subr.bf16.mxu0 0
        %1480 = vmatpush1.bf16.xpose.msra.mxu0 0
        %1481 = vmatprep.subr.bf16.mxu0 0
        %1482 = vmatpush1.bf16.xpose.msra.mxu0 0
        %1483 = vmatprep.subr.bf16.mxu0 0
        %1484 = vmatpush1.bf16.xpose.msra.mxu0 0
        %1485 = vmatprep.subr.bf16.mxu0 0
        %1486 = vmatpush1.bf16.xpose.msra.mxu0 0
        %1487 = vmatprep.subr.bf16.mxu0 0
        %1488 = vmatpush1.bf16.xpose.msra.mxu0 0
        %1489 = vmatprep.subr.bf16.mxu0 0
        %1490 = vmatpush1.bf16.xpose.msra.mxu0 0
        %1491 = vmatprep.mubr.bf16.mxu0 0
        %1492 = vmatmul.mubr.bf16.gmra.mrb[0].mxu0 %v1412
        %v1493 = vpop.f32.mrb[0].mxu0
        %v1494 = vadd.f32 0.0, %v1493
        %v1495 = vpop.f32.mrb[0].mxu0
        %v1496 = vpop.f32.mrb[0].mxu0
        %v1497 = vadd.f32 0.0, %v1496
        %v1498 = vpop.f32.mrb[0].mxu0
        %1499 = vmatprep.mubr.bf16.mxu0 0
        %1500 = vmatmul.mubr.bf16.gmra.mrb[0].mxu0 %v1415
        %v1501 = vpop.f32.mrb[0].mxu0
        %v1502 = vadd.f32 0.0, %v1501
        %v1503 = vpop.f32.mrb[0].mxu0
        %v1504 = vpop.f32.mrb[0].mxu0
        %v1505 = vadd.f32 0.0, %v1504
        %v1506 = vpop.f32.mrb[0].mxu0
        %1507 = vmatprep.mubr.bf16.mxu0 0
        %1508 = vmatmul.mubr.bf16.gmra.mrb[0].mxu0 %v1418
        %v1509 = vpop.f32.mrb[0].mxu0
        %v1510 = vadd.f32 0.0, %v1509
        %v1511 = vpop.f32.mrb[0].mxu0
        %v1512 = vpop.f32.mrb[0].mxu0
        %v1513 = vadd.f32 0.0, %v1512
        %v1514 = vpop.f32.mrb[0].mxu0
        %1515 = vmatprep.mubr.bf16.mxu0 0
        %1516 = vmatmul.mubr.bf16.gmra.mrb[0].mxu0 %v1421
        %v1517 = vpop.f32.mrb[0].mxu0
        %v1518 = vadd.f32 0.0, %v1517
        %v1519 = vpop.f32.mrb[0].mxu0
        %v1520 = vpop.f32.mrb[0].mxu0
        %v1521 = vadd.f32 0.0, %v1520
        %v1522 = vpop.f32.mrb[0].mxu0
        %1523 = vmatprep.mubr.bf16.mxu0 0
        %1524 = vmatmul.mubr.bf16.gmra.mrb[0].mxu0 %v1424
        %v1525 = vpop.f32.mrb[0].mxu0
        %v1526 = vadd.f32 0.0, %v1525
        %v1527 = vpop.f32.mrb[0].mxu0
        %v1528 = vpop.f32.mrb[0].mxu0
        %v1529 = vadd.f32 0.0, %v1528
        %v1530 = vpop.f32.mrb[0].mxu0
        %1531 = vmatprep.mubr.bf16.mxu0 0
        %1532 = vmatmul.mubr.bf16.gmra.mrb[0].mxu0 %v1427
        %v1533 = vpop.f32.mrb[0].mxu0
        %v1534 = vadd.f32 0.0, %v1533
        %v1535 = vpop.f32.mrb[0].mxu0
        %v1536 = vpop.f32.mrb[0].mxu0
        %v1537 = vadd.f32 0.0, %v1536
        %v1538 = vpop.f32.mrb[0].mxu0
        %1539 = vmatprep.mubr.bf16.mxu0 0
        %1540 = vmatmul.mubr.bf16.gmra.mrb[0].mxu0 %v1430
        %v1541 = vpop.f32.mrb[0].mxu0
        %v1542 = vadd.f32 0.0, %v1541
        %v1543 = vpop.f32.mrb[0].mxu0
        %v1544 = vpop.f32.mrb[0].mxu0
        %v1545 = vadd.f32 0.0, %v1544
        %v1546 = vpop.f32.mrb[0].mxu0
        %1547 = vmatprep.mubr.bf16.mxu0 0
        %1548 = vmatmul.mubr.bf16.gmra.mrb[0].mxu0 %v1433
        %v1549 = vpop.f32.mrb[0].mxu0
        %v1550 = vadd.f32 0.0, %v1549
        %v1551 = vpop.f32.mrb[0].mxu0
        %v1552 = vpop.f32.mrb[0].mxu0
        %v1553 = vadd.f32 0.0, %v1552
        %v1554 = vpop.f32.mrb[0].mxu0
        %1555 = vdwg.mxu0
        %1556 = vmax.xlane.f32.xlu0 %v1494
        %v1557 = vpop.xlane.xlu0 %1556
        %1558 = vmax.xlane.f32.xlu0 %v1497
        %v1559 = vpop.xlane.xlu0 %1558
        %1560 = vmax.xlane.f32.xlu0 %v1502
        %v1561 = vpop.xlane.xlu0 %1560
        %1562 = vmax.xlane.f32.xlu0 %v1505
        %v1563 = vpop.xlane.xlu0 %1562
        %1564 = vmax.xlane.f32.xlu0 %v1510
        %v1565 = vpop.xlane.xlu0 %1564
        %1566 = vmax.xlane.f32.xlu0 %v1513
        %v1567 = vpop.xlane.xlu0 %1566
        %1568 = vmax.xlane.f32.xlu0 %v1518
        %v1569 = vpop.xlane.xlu0 %1568
        %1570 = vmax.xlane.f32.xlu0 %v1521
        %v1571 = vpop.xlane.xlu0 %1570
        %1572 = vmax.xlane.f32.xlu0 %v1526
        %v1573 = vpop.xlane.xlu0 %1572
        %1574 = vmax.xlane.f32.xlu0 %v1529
        %v1575 = vpop.xlane.xlu0 %1574
        %1576 = vmax.xlane.f32.xlu0 %v1534
        %v1577 = vpop.xlane.xlu0 %1576
        %1578 = vmax.xlane.f32.xlu0 %v1537
        %v1579 = vpop.xlane.xlu0 %1578
        %1580 = vmax.xlane.f32.xlu0 %v1542
        %v1581 = vpop.xlane.xlu0 %1580
        %1582 = vmax.xlane.f32.xlu0 %v1545
        %v1583 = vpop.xlane.xlu0 %1582
        %1584 = vmax.xlane.f32.xlu0 %v1550
        %v1585 = vpop.xlane.xlu0 %1584
        %1586 = vmax.xlane.f32.xlu0 %v1553
        %v1587 = vpop.xlane.xlu0 %1586
        %v1588 = vsub.f32 %v1494, %v1557
        %v1589 = vsub.f32 %v1497, %v1559
        %v1590 = vsub.f32 %v1502, %v1561
        %v1591 = vsub.f32 %v1505, %v1563
        %v1592 = vsub.f32 %v1510, %v1565
        %v1593 = vsub.f32 %v1513, %v1567
        %v1594 = vsub.f32 %v1518, %v1569
        %v1595 = vsub.f32 %v1521, %v1571
        %v1596 = vsub.f32 %v1526, %v1573
        %v1597 = vsub.f32 %v1529, %v1575
        %v1598 = vsub.f32 %v1534, %v1577
        %v1599 = vsub.f32 %v1537, %v1579
        %v1600 = vsub.f32 %v1542, %v1581
        %v1601 = vsub.f32 %v1545, %v1583
        %v1602 = vsub.f32 %v1550, %v1585
        %v1603 = vsub.f32 %v1553, %v1587
        %v1604 = vmul.f32 %v1588, 1.442695
        %v1605 = vpow.pop %v1604
        %v1606 = vmul.f32 %v1589, 1.442695
        %v1607 = vpow.pop %v1606
        %v1608 = vmul.f32 %v1590, 1.442695
        %v1609 = vpow.pop %v1608
        %v1610 = vmul.f32 %v1591, 1.442695
        %v1611 = vpow.pop %v1610
        %v1612 = vmul.f32 %v1592, 1.442695
        %v1613 = vpow.pop %v1612
        %v1614 = vmul.f32 %v1593, 1.442695
        %v1615 = vpow.pop %v1614
        %v1616 = vmul.f32 %v1594, 1.442695
        %v1617 = vpow.pop %v1616
        %v1618 = vmul.f32 %v1595, 1.442695
        %v1619 = vpow.pop %v1618
        %v1620 = vmul.f32 %v1596, 1.442695
        %v1621 = vpow.pop %v1620
        %v1622 = vmul.f32 %v1597, 1.442695
        %v1623 = vpow.pop %v1622
        %v1624 = vmul.f32 %v1598, 1.442695
        %v1625 = vpow.pop %v1624
        %v1626 = vmul.f32 %v1599, 1.442695
        %v1627 = vpow.pop %v1626
        %v1628 = vmul.f32 %v1600, 1.442695
        %v1629 = vpow.pop %v1628
        %v1630 = vmul.f32 %v1601, 1.442695
        %v1631 = vpow.pop %v1630
        %v1632 = vmul.f32 %v1602, 1.442695
        %v1633 = vpow.pop %v1632
        %v1634 = vmul.f32 %v1603, 1.442695
        %v1635 = vpow.pop %v1634
        %1636 = vadd.xlane.f32.xlu0 %v1605
        %v1637 = vpop.xlane.xlu0 %1636
        %1638 = vadd.xlane.f32.xlu0 %v1607
        %v1639 = vpop.xlane.xlu0 %1638
        %1640 = vadd.xlane.f32.xlu0 %v1609
        %v1641 = vpop.xlane.xlu0 %1640
        %1642 = vadd.xlane.f32.xlu0 %v1611
        %v1643 = vpop.xlane.xlu0 %1642
        %1644 = vadd.xlane.f32.xlu0 %v1613
        %v1645 = vpop.xlane.xlu0 %1644
        %1646 = vadd.xlane.f32.xlu0 %v1615
        %v1647 = vpop.xlane.xlu0 %1646
        %1648 = vadd.xlane.f32.xlu0 %v1617
        %v1649 = vpop.xlane.xlu0 %1648
        %1650 = vadd.xlane.f32.xlu0 %v1619
        %v1651 = vpop.xlane.xlu0 %1650
        %1652 = vadd.xlane.f32.xlu0 %v1621
        %v1653 = vpop.xlane.xlu0 %1652
        %1654 = vadd.xlane.f32.xlu0 %v1623
        %v1655 = vpop.xlane.xlu0 %1654
        %1656 = vadd.xlane.f32.xlu0 %v1625
        %v1657 = vpop.xlane.xlu0 %1656
        %1658 = vadd.xlane.f32.xlu0 %v1627
        %v1659 = vpop.xlane.xlu0 %1658
        %1660 = vadd.xlane.f32.xlu0 %v1629
        %v1661 = vpop.xlane.xlu0 %1660
        %1662 = vadd.xlane.f32.xlu0 %v1631
        %v1663 = vpop.xlane.xlu0 %1662
        %1664 = vadd.xlane.f32.xlu0 %v1633
        %v1665 = vpop.xlane.xlu0 %1664
        %1666 = vadd.xlane.f32.xlu0 %v1635
        %v1667 = vpop.xlane.xlu0 %1666
        %v1668 = vrcp.pop %v1637
        %v1669 = vrcp.pop %v1639
        %v1670 = vrcp.pop %v1641
        %v1671 = vrcp.pop %v1643
        %v1672 = vrcp.pop %v1645
        %v1673 = vrcp.pop %v1647
        %v1674 = vrcp.pop %v1649
        %v1675 = vrcp.pop %v1651
        %v1676 = vrcp.pop %v1653
        %v1677 = vrcp.pop %v1655
        %v1678 = vrcp.pop %v1657
        %v1679 = vrcp.pop %v1659
        %v1680 = vrcp.pop %v1661
        %v1681 = vrcp.pop %v1663
        %v1682 = vrcp.pop %v1665
        %v1683 = vrcp.pop %v1667
        %v1684 = vmul.f32 %v1605, %v1668
        %v1685 = vmul.f32 %v1607, %v1669
        %v1686 = vmul.f32 %v1609, %v1670
        %v1687 = vmul.f32 %v1611, %v1671
        %v1688 = vmul.f32 %v1613, %v1672
        %v1689 = vmul.f32 %v1615, %v1673
        %v1690 = vmul.f32 %v1617, %v1674
        %v1691 = vmul.f32 %v1619, %v1675
        %v1692 = vmul.f32 %v1621, %v1676
        %v1693 = vmul.f32 %v1623, %v1677
        %v1694 = vmul.f32 %v1625, %v1678
        %v1695 = vmul.f32 %v1627, %v1679
        %v1696 = vmul.f32 %v1629, %v1680
        %v1697 = vmul.f32 %v1631, %v1681
        %v1698 = vmul.f32 %v1633, %v1682
        %v1699 = vmul.f32 %v1635, %v1683
        %v1700 = vpack.c.bf16 %v1685, %v1684
        %v1701 = vpack.c.bf16 %v1687, %v1686
        %v1702 = vpack.c.bf16 %v1689, %v1688
        %v1703 = vpack.c.bf16 %v1691, %v1690
        %v1704 = vpack.c.bf16 %v1693, %v1692
        %v1705 = vpack.c.bf16 %v1695, %v1694
        %v1706 = vpack.c.bf16 %v1697, %v1696
        %v1707 = vpack.c.bf16 %v1699, %v1698
        %1716 = vrot.lane.b32.xlu0 %v945, 96
        %v1717 = vpop.permute.xlu0 %1716
        %1718 = vrot.lane.b32.xlu0 %v947, 96
        %v1719 = vpop.permute.xlu0 %1718
        %1720 = vrot.lane.b32.xlu0 %v949, 96
        %v1721 = vpop.permute.xlu0 %1720
        %1722 = vrot.lane.b32.xlu0 %v951, 96
        %v1723 = vpop.permute.xlu0 %1722
        %1724 = vrot.lane.b32.xlu0 %v953, 96
        %v1725 = vpop.permute.xlu0 %1724
        %1726 = vrot.lane.b32.xlu0 %v955, 96
        %v1727 = vpop.permute.xlu0 %1726
        %1728 = vrot.lane.b32.xlu0 %v957, 96
        %v1729 = vpop.permute.xlu0 %1728
        %1730 = vrot.lane.b32.xlu0 %v959, 96
        %v1731 = vpop.permute.xlu0 %1730
        %1740 = vmatprep.subr.bf16.mxu0 0
        %1741 = vmatpush1.bf16.msra.mxu0 %v1717
        %1742 = vmatprep.subr.bf16.mxu0 0
        %1743 = vmatpush1.bf16.msra.mxu0 %v1719
        %1744 = vmatprep.subr.bf16.mxu0 0
        %1745 = vmatpush1.bf16.msra.mxu0 %v1721
        %1746 = vmatprep.subr.bf16.mxu0 0
        %1747 = vmatpush1.bf16.msra.mxu0 %v1723
        %1748 = vmatprep.subr.bf16.mxu0 0
        %1749 = vmatpush1.bf16.msra.mxu0 %v1725
        %1750 = vmatprep.subr.bf16.mxu0 0
        %1751 = vmatpush1.bf16.msra.mxu0 %v1727
        %1752 = vmatprep.subr.bf16.mxu0 0
        %1753 = vmatpush1.bf16.msra.mxu0 %v1729
        %1754 = vmatprep.subr.bf16.mxu0 0
        %1755 = vmatpush1.bf16.msra.mxu0 %v1731
        %1756 = vmatprep.subr.bf16.mxu0 0
        %1757 = vmatpush1.bf16.msra.mxu0 0
        %1758 = vmatprep.subr.bf16.mxu0 0
        %1759 = vmatpush1.bf16.msra.mxu0 0
        %1760 = vmatprep.subr.bf16.mxu0 0
        %1761 = vmatpush1.bf16.msra.mxu0 0
        %1762 = vmatprep.subr.bf16.mxu0 0
        %1763 = vmatpush1.bf16.msra.mxu0 0
        %1764 = vmatprep.subr.bf16.mxu0 0
        %1765 = vmatpush1.bf16.msra.mxu0 0
        %1766 = vmatprep.subr.bf16.mxu0 0
        %1767 = vmatpush1.bf16.msra.mxu0 0
        %1768 = vmatprep.subr.bf16.mxu0 0
        %1769 = vmatpush1.bf16.msra.mxu0 0
        %1770 = vmatprep.subr.bf16.mxu0 0
        %1771 = vmatpush1.bf16.msra.mxu0 0
        %1772 = vmatprep.mubr.bf16.mxu0 0
        %1773 = vmatmul.mubr.bf16.gmra.mrb[0].mxu0 %v1700
        %v1774 = vpop.f32.mrb[0].mxu0
        %v1775 = vadd.f32 0.0, %v1774
        %v1776 = vpop.f32.mrb[0].mxu0
        %v1777 = vpop.f32.mrb[0].mxu0
        %v1778 = vadd.f32 0.0, %v1777
        %v1779 = vpop.f32.mrb[0].mxu0
        %1780 = vmatprep.mubr.bf16.mxu0 0
        %1781 = vmatmul.mubr.bf16.gmra.mrb[0].mxu0 %v1701
        %v1782 = vpop.f32.mrb[0].mxu0
        %v1783 = vadd.f32 0.0, %v1782
        %v1784 = vpop.f32.mrb[0].mxu0
        %v1785 = vpop.f32.mrb[0].mxu0
        %v1786 = vadd.f32 0.0, %v1785
        %v1787 = vpop.f32.mrb[0].mxu0
        %1788 = vmatprep.mubr.bf16.mxu0 0
        %1789 = vmatmul.mubr.bf16.gmra.mrb[0].mxu0 %v1702
        %v1790 = vpop.f32.mrb[0].mxu0
        %v1791 = vadd.f32 0.0, %v1790
        %v1792 = vpop.f32.mrb[0].mxu0
        %v1793 = vpop.f32.mrb[0].mxu0
        %v1794 = vadd.f32 0.0, %v1793
        %v1795 = vpop.f32.mrb[0].mxu0
        %1796 = vmatprep.mubr.bf16.mxu0 0
        %1797 = vmatmul.mubr.bf16.gmra.mrb[0].mxu0 %v1703
        %v1798 = vpop.f32.mrb[0].mxu0
        %v1799 = vadd.f32 0.0, %v1798
        %v1800 = vpop.f32.mrb[0].mxu0
        %v1801 = vpop.f32.mrb[0].mxu0
        %v1802 = vadd.f32 0.0, %v1801
        %v1803 = vpop.f32.mrb[0].mxu0
        %1804 = vmatprep.mubr.bf16.mxu0 0
        %1805 = vmatmul.mubr.bf16.gmra.mrb[0].mxu0 %v1704
        %v1806 = vpop.f32.mrb[0].mxu0
        %v1807 = vadd.f32 0.0, %v1806
        %v1808 = vpop.f32.mrb[0].mxu0
        %v1809 = vpop.f32.mrb[0].mxu0
        %v1810 = vadd.f32 0.0, %v1809
        %v1811 = vpop.f32.mrb[0].mxu0
        %1812 = vmatprep.mubr.bf16.mxu0 0
        %1813 = vmatmul.mubr.bf16.gmra.mrb[0].mxu0 %v1705
        %v1814 = vpop.f32.mrb[0].mxu0
        %v1815 = vadd.f32 0.0, %v1814
        %v1816 = vpop.f32.mrb[0].mxu0
        %v1817 = vpop.f32.mrb[0].mxu0
        %v1818 = vadd.f32 0.0, %v1817
        %v1819 = vpop.f32.mrb[0].mxu0
        %1820 = vmatprep.mubr.bf16.mxu0 0
        %1821 = vmatmul.mubr.bf16.gmra.mrb[0].mxu0 %v1706
        %v1822 = vpop.f32.mrb[0].mxu0
        %v1823 = vadd.f32 0.0, %v1822
        %v1824 = vpop.f32.mrb[0].mxu0
        %v1825 = vpop.f32.mrb[0].mxu0
        %v1826 = vadd.f32 0.0, %v1825
        %v1827 = vpop.f32.mrb[0].mxu0
        %1828 = vmatprep.mubr.bf16.mxu0 0
        %1829 = vmatmul.mubr.bf16.gmra.mrb[0].mxu0 %v1707
        %v1830 = vpop.f32.mrb[0].mxu0
        %v1831 = vadd.f32 0.0, %v1830
        %v1832 = vpop.f32.mrb[0].mxu0
        %v1833 = vpop.f32.mrb[0].mxu0
        %v1834 = vadd.f32 0.0, %v1833
        %v1835 = vpop.f32.mrb[0].mxu0
        %1836 = vdwg.mxu0
        %1853 = vrot.lane.b32.xlu0 %v1775, 32
        %v1854 = vpop.permute.xlu0 %1853
        %1855 = vrot.lane.b32.xlu0 %v1778, 32
        %v1856 = vpop.permute.xlu0 %1855
        %1857 = vrot.lane.b32.xlu0 %v1783, 32
        %v1858 = vpop.permute.xlu0 %1857
        %1859 = vrot.lane.b32.xlu0 %v1786, 32
        %v1860 = vpop.permute.xlu0 %1859
        %1861 = vrot.lane.b32.xlu0 %v1791, 32
        %v1862 = vpop.permute.xlu0 %1861
        %1863 = vrot.lane.b32.xlu0 %v1794, 32
        %v1864 = vpop.permute.xlu0 %1863
        %1865 = vrot.lane.b32.xlu0 %v1799, 32
        %v1866 = vpop.permute.xlu0 %1865
        %1867 = vrot.lane.b32.xlu0 %v1802, 32
        %v1868 = vpop.permute.xlu0 %1867
        %1869 = vrot.lane.b32.xlu0 %v1807, 32
        %v1870 = vpop.permute.xlu0 %1869
        %1871 = vrot.lane.b32.xlu0 %v1810, 32
        %v1872 = vpop.permute.xlu0 %1871
        %1873 = vrot.lane.b32.xlu0 %v1815, 32
        %v1874 = vpop.permute.xlu0 %1873
        %1875 = vrot.lane.b32.xlu0 %v1818, 32
        %v1876 = vpop.permute.xlu0 %1875
        %1877 = vrot.lane.b32.xlu0 %v1823, 32
        %v1878 = vpop.permute.xlu0 %1877
        %1879 = vrot.lane.b32.xlu0 %v1826, 32
        %v1880 = vpop.permute.xlu0 %1879
        %1881 = vrot.lane.b32.xlu0 %v1831, 32
        %v1882 = vpop.permute.xlu0 %1881
        %1883 = vrot.lane.b32.xlu0 %v1834, 32
        %v1884 = vpop.permute.xlu0 %1883
        %v1901 = vsel %vm984, %v1317, %v1854
        %v1902 = vsel %vm984, %v1320, %v1856
        %v1903 = vsel %vm984, %v1325, %v1858
        %v1904 = vsel %vm984, %v1328, %v1860
        %v1905 = vsel %vm984, %v1333, %v1862
        %v1906 = vsel %vm984, %v1336, %v1864
        %v1907 = vsel %vm984, %v1341, %v1866
        %v1908 = vsel %vm984, %v1344, %v1868
        %v1909 = vsel %vm984, %v1349, %v1870
        %v1910 = vsel %vm984, %v1352, %v1872
        %v1911 = vsel %vm984, %v1357, %v1874
        %v1912 = vsel %vm984, %v1360, %v1876
        %v1913 = vsel %vm984, %v1365, %v1878
        %v1914 = vsel %vm984, %v1368, %v1880
        %v1915 = vsel %vm984, %v1373, %v1882
        %v1916 = vsel %vm984, %v1376, %v1884
        %v1917 = vpack.c.bf16 %v1902, %v1901
        %v1918 = vpack.c.bf16 %v1904, %v1903
        %v1919 = vpack.c.bf16 %v1906, %v1905
        %v1920 = vpack.c.bf16 %v1908, %v1907
        %v1921 = vpack.c.bf16 %v1910, %v1909
        %v1922 = vpack.c.bf16 %v1912, %v1911
        %v1923 = vpack.c.bf16 %v1914, %v1913
        %v1924 = vpack.c.bf16 %v1916, %v1915
        %v1925 = vld [vmem:[%s6] sm:$0xf]
        %v1926 = vld [vmem:[%s6 + $0x4] sm:$0xf]
        %v1927 = vld [vmem:[%s6 + $0x8] sm:$0xf]
        %v1928 = vld [vmem:[%s6 + $0xc] sm:$0xf]
        %v1929 = vld [vmem:[%s6 + $0x10] sm:$0xf]
        %v1930 = vld [vmem:[%s6 + $0x14] sm:$0xf]
        %v1931 = vld [vmem:[%s6 + $0x18] sm:$0xf]
        %v1932 = vld [vmem:[%s6 + $0x1c] sm:$0xf]
        %v1933 = vld [vmem:[%s7] sm:$0x1]
        %v1935 = vlaneseq
        %v1936 = vshrl.u32 %v1935, 7
        %v1937 = vsub.s32 0, %v1936
        %v1938 = vrot.slane %v1933, %v1937
        %v1948 = vunpack.c.l.b16 %v1925
        %v1949 = vunpack.c.l.b16 %v1926
        %v1950 = vunpack.c.l.b16 %v1927
        %v1951 = vunpack.c.l.b16 %v1928
        %v1952 = vunpack.c.l.b16 %v1929
        %v1953 = vunpack.c.l.b16 %v1930
        %v1954 = vunpack.c.l.b16 %v1931
        %v1955 = vunpack.c.l.b16 %v1932
        %v1956 = vpack.c.b16 %v1949, %v1948
        %v1957 = vpack.c.b16 %v1951, %v1950
        %v1958 = vpack.c.b16 %v1953, %v1952
        %v1959 = vpack.c.b16 %v1955, %v1954
        %v1965 = vsel %vm485, %v1917, 0
        %v1968 = vsel %vm485, %v1918, 0
        %v1971 = vsel %vm485, %v1919, 0
        %v1974 = vsel %vm485, %v1920, 0
        %v1977 = vsel %vm485, %v1921, 0
        %v1980 = vsel %vm485, %v1922, 0
        %v1983 = vsel %vm485, %v1923, 0
        %v1986 = vsel %vm485, %v1924, 0
        %1988 = vmatprep.subr.bf16.mxu0 0
        %1989 = vmatpush1.bf16.msra.mxu0 %v1956
        %1990 = vmatprep.subr.bf16.mxu0 0
        %1991 = vmatpush1.bf16.msra.mxu0 %v1957
        %1992 = vmatprep.subr.bf16.mxu0 0
        %1993 = vmatpush1.bf16.msra.mxu0 %v1958
        %1994 = vmatprep.subr.bf16.mxu0 0
        %1995 = vmatpush1.bf16.msra.mxu0 %v1959
        %1996 = vmatprep.subr.bf16.mxu0 0
        %1997 = vmatpush1.bf16.msra.mxu0 0
        %1998 = vmatprep.subr.bf16.mxu0 0
        %1999 = vmatpush1.bf16.msra.mxu0 0
        %2000 = vmatprep.subr.bf16.mxu0 0
        %2001 = vmatpush1.bf16.msra.mxu0 0
        %2002 = vmatprep.subr.bf16.mxu0 0
        %2003 = vmatpush1.bf16.msra.mxu0 0
        %2004 = vmatprep.subr.bf16.mxu0 0
        %2005 = vmatpush1.bf16.msra.mxu0 0
        %2006 = vmatprep.subr.bf16.mxu0 0
        %2007 = vmatpush1.bf16.msra.mxu0 0
        %2008 = vmatprep.subr.bf16.mxu0 0
        %2009 = vmatpush1.bf16.msra.mxu0 0
        %2010 = vmatprep.subr.bf16.mxu0 0
        %2011 = vmatpush1.bf16.msra.mxu0 0
        %2012 = vmatprep.subr.bf16.mxu0 0
        %2013 = vmatpush1.bf16.msra.mxu0 0
        %2014 = vmatprep.subr.bf16.mxu0 0
        %2015 = vmatpush1.bf16.msra.mxu0 0
        %2016 = vmatprep.subr.bf16.mxu0 0
        %2017 = vmatpush1.bf16.msra.mxu0 0
        %2018 = vmatprep.subr.bf16.mxu0 0
        %2019 = vmatpush1.bf16.msra.mxu0 0
        %2020 = vmatprep.mubr.bf16.mxu0 0
        %2021 = vmatmul.mubr.bf16.gmra.mrb[0].mxu0 %v1965
        %v2022 = vpop.f32.mrb[0].mxu0
        %v2023 = vadd.f32 %v1938, %v2022
        %v2024 = vpop.f32.mrb[0].mxu0
        %v2025 = vpop.f32.mrb[0].mxu0
        %v2026 = vadd.f32 %v1938, %v2025
        %v2027 = vpop.f32.mrb[0].mxu0
        %2028 = vmatprep.mubr.bf16.mxu0 0
        %2029 = vmatmul.mubr.bf16.gmra.mrb[0].mxu0 %v1968
        %v2030 = vpop.f32.mrb[0].mxu0
        %v2031 = vadd.f32 %v1938, %v2030
        %v2032 = vpop.f32.mrb[0].mxu0
        %v2033 = vpop.f32.mrb[0].mxu0
        %v2034 = vadd.f32 %v1938, %v2033
        %v2035 = vpop.f32.mrb[0].mxu0
        %2036 = vmatprep.mubr.bf16.mxu0 0
        %2037 = vmatmul.mubr.bf16.gmra.mrb[0].mxu0 %v1971
        %v2038 = vpop.f32.mrb[0].mxu0
        %v2039 = vadd.f32 %v1938, %v2038
        %v2040 = vpop.f32.mrb[0].mxu0
        %v2041 = vpop.f32.mrb[0].mxu0
        %v2042 = vadd.f32 %v1938, %v2041
        %v2043 = vpop.f32.mrb[0].mxu0
        %2044 = vmatprep.mubr.bf16.mxu0 0
        %2045 = vmatmul.mubr.bf16.gmra.mrb[0].mxu0 %v1974
        %v2046 = vpop.f32.mrb[0].mxu0
        %v2047 = vadd.f32 %v1938, %v2046
        %v2048 = vpop.f32.mrb[0].mxu0
        %v2049 = vpop.f32.mrb[0].mxu0
        %v2050 = vadd.f32 %v1938, %v2049
        %v2051 = vpop.f32.mrb[0].mxu0
        %2052 = vmatprep.mubr.bf16.mxu0 0
        %2053 = vmatmul.mubr.bf16.gmra.mrb[0].mxu0 %v1977
        %v2054 = vpop.f32.mrb[0].mxu0
        %v2055 = vadd.f32 %v1938, %v2054
        %v2056 = vpop.f32.mrb[0].mxu0
        %v2057 = vpop.f32.mrb[0].mxu0
        %v2058 = vadd.f32 %v1938, %v2057
        %v2059 = vpop.f32.mrb[0].mxu0
        %2060 = vmatprep.mubr.bf16.mxu0 0
        %2061 = vmatmul.mubr.bf16.gmra.mrb[0].mxu0 %v1980
        %v2062 = vpop.f32.mrb[0].mxu0
        %v2063 = vadd.f32 %v1938, %v2062
        %v2064 = vpop.f32.mrb[0].mxu0
        %v2065 = vpop.f32.mrb[0].mxu0
        %v2066 = vadd.f32 %v1938, %v2065
        %v2067 = vpop.f32.mrb[0].mxu0
        %2068 = vmatprep.mubr.bf16.mxu0 0
        %2069 = vmatmul.mubr.bf16.gmra.mrb[0].mxu0 %v1983
        %v2070 = vpop.f32.mrb[0].mxu0
        %v2071 = vadd.f32 %v1938, %v2070
        %v2072 = vpop.f32.mrb[0].mxu0
        %v2073 = vpop.f32.mrb[0].mxu0
        %v2074 = vadd.f32 %v1938, %v2073
        %v2075 = vpop.f32.mrb[0].mxu0
        %2076 = vmatprep.mubr.bf16.mxu0 0
        %2077 = vmatmul.mubr.bf16.gmra.mrb[0].mxu0 %v1986
        %v2078 = vpop.f32.mrb[0].mxu0
        %v2079 = vadd.f32 %v1938, %v2078
        %v2080 = vpop.f32.mrb[0].mxu0
        %v2081 = vpop.f32.mrb[0].mxu0
        %v2082 = vadd.f32 %v1938, %v2081
        %v2083 = vpop.f32.mrb[0].mxu0
        %2084 = vdwg.mxu0
        %v2085 = vadd.f32 %v2023, %v723
        %v2086 = vadd.f32 %v2026, %v724
        %v2087 = vadd.f32 %v2031, %v725
        %v2088 = vadd.f32 %v2034, %v726
        %v2089 = vadd.f32 %v2039, %v727
        %v2090 = vadd.f32 %v2042, %v728
        %v2091 = vadd.f32 %v2047, %v729
        %v2092 = vadd.f32 %v2050, %v730
        %v2093 = vadd.f32 %v2055, %v731
        %v2094 = vadd.f32 %v2058, %v732
        %v2095 = vadd.f32 %v2063, %v733
        %v2096 = vadd.f32 %v2066, %v734
        %v2097 = vadd.f32 %v2071, %v735
        %v2098 = vadd.f32 %v2074, %v736
        %v2099 = vadd.f32 %v2079, %v737
        %v2100 = vadd.f32 %v2082, %v738
        %v2101 = vld [vmem:[%s8] sm:$0x1]
        %v2102 = vld [vmem:[%s9] sm:$0x1]
        %v2103 = vsel %vm485, %v2085, 0.0
        %2104 = vadd.xlane.f32.xlu0 %v2103
        %v2105 = vpop.xlane.xlu0 %2104
        %v2106 = vsel %vm485, %v2086, 0.0
        %2107 = vadd.xlane.f32.xlu0 %v2106
        %v2108 = vpop.xlane.xlu0 %2107
        %v2109 = vsel %vm485, %v2087, 0.0
        %2110 = vadd.xlane.f32.xlu0 %v2109
        %v2111 = vpop.xlane.xlu0 %2110
        %v2112 = vsel %vm485, %v2088, 0.0
        %2113 = vadd.xlane.f32.xlu0 %v2112
        %v2114 = vpop.xlane.xlu0 %2113
        %v2115 = vsel %vm485, %v2089, 0.0
        %2116 = vadd.xlane.f32.xlu0 %v2115
        %v2117 = vpop.xlane.xlu0 %2116
        %v2118 = vsel %vm485, %v2090, 0.0
        %2119 = vadd.xlane.f32.xlu0 %v2118
        %v2120 = vpop.xlane.xlu0 %2119
        %v2121 = vsel %vm485, %v2091, 0.0
        %2122 = vadd.xlane.f32.xlu0 %v2121
        %v2123 = vpop.xlane.xlu0 %2122
        %v2124 = vsel %vm485, %v2092, 0.0
        %2125 = vadd.xlane.f32.xlu0 %v2124
        %v2126 = vpop.xlane.xlu0 %2125
        %v2127 = vsel %vm485, %v2093, 0.0
        %2128 = vadd.xlane.f32.xlu0 %v2127
        %v2129 = vpop.xlane.xlu0 %2128
        %v2130 = vsel %vm485, %v2094, 0.0
        %2131 = vadd.xlane.f32.xlu0 %v2130
        %v2132 = vpop.xlane.xlu0 %2131
        %v2133 = vsel %vm485, %v2095, 0.0
        %2134 = vadd.xlane.f32.xlu0 %v2133
        %v2135 = vpop.xlane.xlu0 %2134
        %v2136 = vsel %vm485, %v2096, 0.0
        %2137 = vadd.xlane.f32.xlu0 %v2136
        %v2138 = vpop.xlane.xlu0 %2137
        %v2139 = vsel %vm485, %v2097, 0.0
        %2140 = vadd.xlane.f32.xlu0 %v2139
        %v2141 = vpop.xlane.xlu0 %2140
        %v2142 = vsel %vm485, %v2098, 0.0
        %2143 = vadd.xlane.f32.xlu0 %v2142
        %v2144 = vpop.xlane.xlu0 %2143
        %v2145 = vsel %vm485, %v2099, 0.0
        %2146 = vadd.xlane.f32.xlu0 %v2145
        %v2147 = vpop.xlane.xlu0 %2146
        %v2148 = vsel %vm485, %v2100, 0.0
        %2149 = vadd.xlane.f32.xlu0 %v2148
        %v2150 = vpop.xlane.xlu0 %2149
        %v2151 = vmul.f32 %v2105, %v534
        %v2152 = vmul.f32 %v2108, %v534
        %v2153 = vmul.f32 %v2111, %v534
        %v2154 = vmul.f32 %v2114, %v534
        %v2155 = vmul.f32 %v2117, %v534
        %v2156 = vmul.f32 %v2120, %v534
        %v2157 = vmul.f32 %v2123, %v534
        %v2158 = vmul.f32 %v2126, %v534
        %v2159 = vmul.f32 %v2129, %v534
        %v2160 = vmul.f32 %v2132, %v534
        %v2161 = vmul.f32 %v2135, %v534
        %v2162 = vmul.f32 %v2138, %v534
        %v2163 = vmul.f32 %v2141, %v534
        %v2164 = vmul.f32 %v2144, %v534
        %v2165 = vmul.f32 %v2147, %v534
        %v2166 = vmul.f32 %v2150, %v534
        %v2167 = vsub.f32 %v2085, %v2151
        %v2168 = vsub.f32 %v2086, %v2152
        %v2169 = vsub.f32 %v2087, %v2153
        %v2170 = vsub.f32 %v2088, %v2154
        %v2171 = vsub.f32 %v2089, %v2155
        %v2172 = vsub.f32 %v2090, %v2156
        %v2173 = vsub.f32 %v2091, %v2157
        %v2174 = vsub.f32 %v2092, %v2158
        %v2175 = vsub.f32 %v2093, %v2159
        %v2176 = vsub.f32 %v2094, %v2160
        %v2177 = vsub.f32 %v2095, %v2161
        %v2178 = vsub.f32 %v2096, %v2162
        %v2179 = vsub.f32 %v2097, %v2163
        %v2180 = vsub.f32 %v2098, %v2164
        %v2181 = vsub.f32 %v2099, %v2165
        %v2182 = vsub.f32 %v2100, %v2166
        %v2183 = vmul.f32 %v2167, %v2167
        %v2184 = vmul.f32 %v2168, %v2168
        %v2185 = vmul.f32 %v2169, %v2169
        %v2186 = vmul.f32 %v2170, %v2170
        %v2187 = vmul.f32 %v2171, %v2171
        %v2188 = vmul.f32 %v2172, %v2172
        %v2189 = vmul.f32 %v2173, %v2173
        %v2190 = vmul.f32 %v2174, %v2174
        %v2191 = vmul.f32 %v2175, %v2175
        %v2192 = vmul.f32 %v2176, %v2176
        %v2193 = vmul.f32 %v2177, %v2177
        %v2194 = vmul.f32 %v2178, %v2178
        %v2195 = vmul.f32 %v2179, %v2179
        %v2196 = vmul.f32 %v2180, %v2180
        %v2197 = vmul.f32 %v2181, %v2181
        %v2198 = vmul.f32 %v2182, %v2182
        %v2199 = vsel %vm485, %v2183, 0.0
        %2200 = vadd.xlane.f32.xlu0 %v2199
        %v2201 = vpop.xlane.xlu0 %2200
        %v2202 = vsel %vm485, %v2184, 0.0
        %2203 = vadd.xlane.f32.xlu0 %v2202
        %v2204 = vpop.xlane.xlu0 %2203
        %v2205 = vsel %vm485, %v2185, 0.0
        %2206 = vadd.xlane.f32.xlu0 %v2205
        %v2207 = vpop.xlane.xlu0 %2206
        %v2208 = vsel %vm485, %v2186, 0.0
        %2209 = vadd.xlane.f32.xlu0 %v2208
        %v2210 = vpop.xlane.xlu0 %2209
        %v2211 = vsel %vm485, %v2187, 0.0
        %2212 = vadd.xlane.f32.xlu0 %v2211
        %v2213 = vpop.xlane.xlu0 %2212
        %v2214 = vsel %vm485, %v2188, 0.0
        %2215 = vadd.xlane.f32.xlu0 %v2214
        %v2216 = vpop.xlane.xlu0 %2215
        %v2217 = vsel %vm485, %v2189, 0.0
        %2218 = vadd.xlane.f32.xlu0 %v2217
        %v2219 = vpop.xlane.xlu0 %2218
        %v2220 = vsel %vm485, %v2190, 0.0
        %2221 = vadd.xlane.f32.xlu0 %v2220
        %v2222 = vpop.xlane.xlu0 %2221
        %v2223 = vsel %vm485, %v2191, 0.0
        %2224 = vadd.xlane.f32.xlu0 %v2223
        %v2225 = vpop.xlane.xlu0 %2224
        %v2226 = vsel %vm485, %v2192, 0.0
        %2227 = vadd.xlane.f32.xlu0 %v2226
        %v2228 = vpop.xlane.xlu0 %2227
        %v2229 = vsel %vm485, %v2193, 0.0
        %2230 = vadd.xlane.f32.xlu0 %v2229
        %v2231 = vpop.xlane.xlu0 %2230
        %v2232 = vsel %vm485, %v2194, 0.0
        %2233 = vadd.xlane.f32.xlu0 %v2232
        %v2234 = vpop.xlane.xlu0 %2233
        %v2235 = vsel %vm485, %v2195, 0.0
        %2236 = vadd.xlane.f32.xlu0 %v2235
        %v2237 = vpop.xlane.xlu0 %2236
        %v2238 = vsel %vm485, %v2196, 0.0
        %2239 = vadd.xlane.f32.xlu0 %v2238
        %v2240 = vpop.xlane.xlu0 %2239
        %v2241 = vsel %vm485, %v2197, 0.0
        %2242 = vadd.xlane.f32.xlu0 %v2241
        %v2243 = vpop.xlane.xlu0 %2242
        %v2244 = vsel %vm485, %v2198, 0.0
        %2245 = vadd.xlane.f32.xlu0 %v2244
        %v2246 = vpop.xlane.xlu0 %2245
        %v2247 = vmul.f32 %v2201, %v534
        %v2248 = vmul.f32 %v2204, %v534
        %v2249 = vmul.f32 %v2207, %v534
        %v2250 = vmul.f32 %v2210, %v534
        %v2251 = vmul.f32 %v2213, %v534
        %v2252 = vmul.f32 %v2216, %v534
        %v2253 = vmul.f32 %v2219, %v534
        %v2254 = vmul.f32 %v2222, %v534
        %v2255 = vmul.f32 %v2225, %v534
        %v2256 = vmul.f32 %v2228, %v534
        %v2257 = vmul.f32 %v2231, %v534
        %v2258 = vmul.f32 %v2234, %v534
        %v2259 = vmul.f32 %v2237, %v534
        %v2260 = vmul.f32 %v2240, %v534
        %v2261 = vmul.f32 %v2243, %v534
        %v2262 = vmul.f32 %v2246, %v534
        %v2263 = vadd.f32 %v2247, 1e-05
        %v2264 = vadd.f32 %v2248, 1e-05
        %v2265 = vadd.f32 %v2249, 1e-05
        %v2266 = vadd.f32 %v2250, 1e-05
        %v2267 = vadd.f32 %v2251, 1e-05
        %v2268 = vadd.f32 %v2252, 1e-05
        %v2269 = vadd.f32 %v2253, 1e-05
        %v2270 = vadd.f32 %v2254, 1e-05
        %v2271 = vadd.f32 %v2255, 1e-05
        %v2272 = vadd.f32 %v2256, 1e-05
        %v2273 = vadd.f32 %v2257, 1e-05
        %v2274 = vadd.f32 %v2258, 1e-05
        %v2275 = vadd.f32 %v2259, 1e-05
        %v2276 = vadd.f32 %v2260, 1e-05
        %v2277 = vadd.f32 %v2261, 1e-05
        %v2278 = vadd.f32 %v2262, 1e-05
        %v2279 = vrsqrt.pop %v2263
        %v2280 = vrsqrt.pop %v2264
        %v2281 = vrsqrt.pop %v2265
        %v2282 = vrsqrt.pop %v2266
        %v2283 = vrsqrt.pop %v2267
        %v2284 = vrsqrt.pop %v2268
        %v2285 = vrsqrt.pop %v2269
        %v2286 = vrsqrt.pop %v2270
        %v2287 = vrsqrt.pop %v2271
        %v2288 = vrsqrt.pop %v2272
        %v2289 = vrsqrt.pop %v2273
        %v2290 = vrsqrt.pop %v2274
        %v2291 = vrsqrt.pop %v2275
        %v2292 = vrsqrt.pop %v2276
        %v2293 = vrsqrt.pop %v2277
        %v2294 = vrsqrt.pop %v2278
        %v2295 = vmul.f32 %v2167, %v2279
        %v2296 = vmul.f32 %v2168, %v2280
        %v2297 = vmul.f32 %v2169, %v2281
        %v2298 = vmul.f32 %v2170, %v2282
        %v2299 = vmul.f32 %v2171, %v2283
        %v2300 = vmul.f32 %v2172, %v2284
        %v2301 = vmul.f32 %v2173, %v2285
        %v2302 = vmul.f32 %v2174, %v2286
        %v2303 = vmul.f32 %v2175, %v2287
        %v2304 = vmul.f32 %v2176, %v2288
        %v2305 = vmul.f32 %v2177, %v2289
        %v2306 = vmul.f32 %v2178, %v2290
        %v2307 = vmul.f32 %v2179, %v2291
        %v2308 = vmul.f32 %v2180, %v2292
        %v2309 = vmul.f32 %v2181, %v2293
        %v2310 = vmul.f32 %v2182, %v2294
        %v2312 = vlaneseq
        %v2313 = vshrl.u32 %v2312, 7
        %v2314 = vsub.s32 0, %v2313
        %v2315 = vrot.slane %v2101, %v2314
        %v2317 = vmul.f32 %v2295, %v2315
        %v2318 = vmul.f32 %v2296, %v2315
        %v2319 = vmul.f32 %v2297, %v2315
        %v2320 = vmul.f32 %v2298, %v2315
        %v2321 = vmul.f32 %v2299, %v2315
        %v2322 = vmul.f32 %v2300, %v2315
        %v2323 = vmul.f32 %v2301, %v2315
        %v2324 = vmul.f32 %v2302, %v2315
        %v2325 = vmul.f32 %v2303, %v2315
        %v2326 = vmul.f32 %v2304, %v2315
        %v2327 = vmul.f32 %v2305, %v2315
        %v2328 = vmul.f32 %v2306, %v2315
        %v2329 = vmul.f32 %v2307, %v2315
        %v2330 = vmul.f32 %v2308, %v2315
        %v2331 = vmul.f32 %v2309, %v2315
        %v2332 = vmul.f32 %v2310, %v2315
        %v2334 = vlaneseq
        %v2335 = vshrl.u32 %v2334, 7
        %v2336 = vsub.s32 0, %v2335
        %v2337 = vrot.slane %v2102, %v2336
        %v2339 = vadd.f32 %v2317, %v2337
        %v2340 = vadd.f32 %v2318, %v2337
        %v2341 = vadd.f32 %v2319, %v2337
        %v2342 = vadd.f32 %v2320, %v2337
        %v2343 = vadd.f32 %v2321, %v2337
        %v2344 = vadd.f32 %v2322, %v2337
        %v2345 = vadd.f32 %v2323, %v2337
        %v2346 = vadd.f32 %v2324, %v2337
        %v2347 = vadd.f32 %v2325, %v2337
        %v2348 = vadd.f32 %v2326, %v2337
        %v2349 = vadd.f32 %v2327, %v2337
        %v2350 = vadd.f32 %v2328, %v2337
        %v2351 = vadd.f32 %v2329, %v2337
        %v2352 = vadd.f32 %v2330, %v2337
        %v2353 = vadd.f32 %v2331, %v2337
        %v2354 = vadd.f32 %v2332, %v2337
        %v2355 = vpack.c.bf16 %v2340, %v2339
        %v2356 = vpack.c.bf16 %v2342, %v2341
        %v2357 = vpack.c.bf16 %v2344, %v2343
        %v2358 = vpack.c.bf16 %v2346, %v2345
        %v2359 = vpack.c.bf16 %v2348, %v2347
        %v2360 = vpack.c.bf16 %v2350, %v2349
        %v2361 = vpack.c.bf16 %v2352, %v2351
        %v2362 = vpack.c.bf16 %v2354, %v2353
        %v2363 = vld [vmem:[%s10] sm:$0xff]
        %v2364 = vld [vmem:[%s10 + $0x8] sm:$0xff]
        %v2365 = vld [vmem:[%s10 + $0x10] sm:$0xff]
        %v2366 = vld [vmem:[%s10 + $0x18] sm:$0xff]
        %v2367 = vld [vmem:[%s10 + $0x20] sm:$0xff]
        %v2368 = vld [vmem:[%s10 + $0x28] sm:$0xff]
        %v2369 = vld [vmem:[%s10 + $0x30] sm:$0xff]
        %v2370 = vld [vmem:[%s10 + $0x38] sm:$0xff]
        %v2379 = vunpack.c.l.b16 %v2363
        %v2380 = vunpack.c.h.b16 %v2363
        %v2381 = vunpack.c.l.b16 %v2364
        %v2382 = vunpack.c.h.b16 %v2364
        %v2383 = vunpack.c.l.b16 %v2365
        %v2384 = vunpack.c.h.b16 %v2365
        %v2385 = vunpack.c.l.b16 %v2366
        %v2386 = vunpack.c.h.b16 %v2366
        %v2387 = vunpack.c.l.b16 %v2367
        %v2388 = vunpack.c.h.b16 %v2367
        %v2389 = vunpack.c.l.b16 %v2368
        %v2390 = vunpack.c.h.b16 %v2368
        %v2391 = vunpack.c.l.b16 %v2369
        %v2392 = vunpack.c.h.b16 %v2369
        %v2393 = vunpack.c.l.b16 %v2370
        %v2394 = vunpack.c.h.b16 %v2370
        %v2395 = vpack.c.b16 %v2381, %v2379
        %v2396 = vpack.c.b16 %v2382, %v2380
        %v2397 = vpack.c.b16 %v2385, %v2383
        %v2398 = vpack.c.b16 %v2386, %v2384
        %v2399 = vpack.c.b16 %v2389, %v2387
        %v2400 = vpack.c.b16 %v2390, %v2388
        %v2401 = vpack.c.b16 %v2393, %v2391
        %v2402 = vpack.c.b16 %v2394, %v2392
        %v2412 = vsel %vm485, %v2355, 0
        %v2415 = vsel %vm485, %v2356, 0
        %v2418 = vsel %vm485, %v2357, 0
        %v2421 = vsel %vm485, %v2358, 0
        %v2424 = vsel %vm485, %v2359, 0
        %v2427 = vsel %vm485, %v2360, 0
        %v2430 = vsel %vm485, %v2361, 0
        %v2433 = vsel %vm485, %v2362, 0
        %2435 = vmatprep.subr.bf16.mxu0 %v2396
        %2436 = vmatpush1.bf16.msra.mxu0 %v2395
        %2437 = vmatprep.subr.bf16.mxu0 %v2398
        %2438 = vmatpush1.bf16.msra.mxu0 %v2397
        %2439 = vmatprep.subr.bf16.mxu0 %v2400
        %2440 = vmatpush1.bf16.msra.mxu0 %v2399
        %2441 = vmatprep.subr.bf16.mxu0 %v2402
        %2442 = vmatpush1.bf16.msra.mxu0 %v2401
        %2443 = vmatprep.subr.bf16.mxu0 0
        %2444 = vmatpush1.bf16.msra.mxu0 0
        %2445 = vmatprep.subr.bf16.mxu0 0
        %2446 = vmatpush1.bf16.msra.mxu0 0
        %2447 = vmatprep.subr.bf16.mxu0 0
        %2448 = vmatpush1.bf16.msra.mxu0 0
        %2449 = vmatprep.subr.bf16.mxu0 0
        %2450 = vmatpush1.bf16.msra.mxu0 0
        %2451 = vmatprep.subr.bf16.mxu0 0
        %2452 = vmatpush1.bf16.msra.mxu0 0
        %2453 = vmatprep.subr.bf16.mxu0 0
        %2454 = vmatpush1.bf16.msra.mxu0 0
        %2455 = vmatprep.subr.bf16.mxu0 0
        %2456 = vmatpush1.bf16.msra.mxu0 0
        %2457 = vmatprep.subr.bf16.mxu0 0
        %2458 = vmatpush1.bf16.msra.mxu0 0
        %2459 = vmatprep.subr.bf16.mxu0 0
        %2460 = vmatpush1.bf16.msra.mxu0 0
        %2461 = vmatprep.subr.bf16.mxu0 0
        %2462 = vmatpush1.bf16.msra.mxu0 0
        %2463 = vmatprep.subr.bf16.mxu0 0
        %2464 = vmatpush1.bf16.msra.mxu0 0
        %2465 = vmatprep.subr.bf16.mxu0 0
        %2466 = vmatpush1.bf16.msra.mxu0 0
        %2467 = vmatprep.mubr.bf16.mxu0 0
        %2468 = vmatmul.mubr.bf16.gmra.mrb[0].mxu0 %v2412
        %v2469 = vpop.f32.mrb[0].mxu0
        %v2470 = vadd.f32 0.0, %v2469
        %v2471 = vpop.f32.mrb[0].mxu0
        %v2472 = vadd.f32 0.0, %v2471
        %v2473 = vpop.f32.mrb[0].mxu0
        %v2474 = vadd.f32 0.0, %v2473
        %v2475 = vpop.f32.mrb[0].mxu0
        %v2476 = vadd.f32 0.0, %v2475
        %2477 = vmatprep.mubr.bf16.mxu0 0
        %2478 = vmatmul.mubr.bf16.gmra.mrb[0].mxu0 %v2415
        %v2479 = vpop.f32.mrb[0].mxu0
        %v2480 = vadd.f32 0.0, %v2479
        %v2481 = vpop.f32.mrb[0].mxu0
        %v2482 = vadd.f32 0.0, %v2481
        %v2483 = vpop.f32.mrb[0].mxu0
        %v2484 = vadd.f32 0.0, %v2483
        %v2485 = vpop.f32.mrb[0].mxu0
        %v2486 = vadd.f32 0.0, %v2485
        %2487 = vmatprep.mubr.bf16.mxu0 0
        %2488 = vmatmul.mubr.bf16.gmra.mrb[0].mxu0 %v2418
        %v2489 = vpop.f32.mrb[0].mxu0
        %v2490 = vadd.f32 0.0, %v2489
        %v2491 = vpop.f32.mrb[0].mxu0
        %v2492 = vadd.f32 0.0, %v2491
        %v2493 = vpop.f32.mrb[0].mxu0
        %v2494 = vadd.f32 0.0, %v2493
        %v2495 = vpop.f32.mrb[0].mxu0
        %v2496 = vadd.f32 0.0, %v2495
        %2497 = vmatprep.mubr.bf16.mxu0 0
        %2498 = vmatmul.mubr.bf16.gmra.mrb[0].mxu0 %v2421
        %v2499 = vpop.f32.mrb[0].mxu0
        %v2500 = vadd.f32 0.0, %v2499
        %v2501 = vpop.f32.mrb[0].mxu0
        %v2502 = vadd.f32 0.0, %v2501
        %v2503 = vpop.f32.mrb[0].mxu0
        %v2504 = vadd.f32 0.0, %v2503
        %v2505 = vpop.f32.mrb[0].mxu0
        %v2506 = vadd.f32 0.0, %v2505
        %2507 = vmatprep.mubr.bf16.mxu0 0
        %2508 = vmatmul.mubr.bf16.gmra.mrb[0].mxu0 %v2424
        %v2509 = vpop.f32.mrb[0].mxu0
        %v2510 = vadd.f32 0.0, %v2509
        %v2511 = vpop.f32.mrb[0].mxu0
        %v2512 = vadd.f32 0.0, %v2511
        %v2513 = vpop.f32.mrb[0].mxu0
        %v2514 = vadd.f32 0.0, %v2513
        %v2515 = vpop.f32.mrb[0].mxu0
        %v2516 = vadd.f32 0.0, %v2515
        %2517 = vmatprep.mubr.bf16.mxu0 0
        %2518 = vmatmul.mubr.bf16.gmra.mrb[0].mxu0 %v2427
        %v2519 = vpop.f32.mrb[0].mxu0
        %v2520 = vadd.f32 0.0, %v2519
        %v2521 = vpop.f32.mrb[0].mxu0
        %v2522 = vadd.f32 0.0, %v2521
        %v2523 = vpop.f32.mrb[0].mxu0
        %v2524 = vadd.f32 0.0, %v2523
        %v2525 = vpop.f32.mrb[0].mxu0
        %v2526 = vadd.f32 0.0, %v2525
        %2527 = vmatprep.mubr.bf16.mxu0 0
        %2528 = vmatmul.mubr.bf16.gmra.mrb[0].mxu0 %v2430
        %v2529 = vpop.f32.mrb[0].mxu0
        %v2530 = vadd.f32 0.0, %v2529
        %v2531 = vpop.f32.mrb[0].mxu0
        %v2532 = vadd.f32 0.0, %v2531
        %v2533 = vpop.f32.mrb[0].mxu0
        %v2534 = vadd.f32 0.0, %v2533
        %v2535 = vpop.f32.mrb[0].mxu0
        %v2536 = vadd.f32 0.0, %v2535
        %2537 = vmatprep.mubr.bf16.mxu0 0
        %2538 = vmatmul.mubr.bf16.gmra.mrb[0].mxu0 %v2433
        %v2539 = vpop.f32.mrb[0].mxu0
        %v2540 = vadd.f32 0.0, %v2539
        %v2541 = vpop.f32.mrb[0].mxu0
        %v2542 = vadd.f32 0.0, %v2541
        %v2543 = vpop.f32.mrb[0].mxu0
        %v2544 = vadd.f32 0.0, %v2543
        %v2545 = vpop.f32.mrb[0].mxu0
        %v2546 = vadd.f32 0.0, %v2545
        %2547 = vdwg.mxu0
        %v2548 = vmul.f32 %v2470, %v2470
        %v2549 = vmul.f32 %v2472, %v2472
        %v2550 = vmul.f32 %v2474, %v2474
        %v2551 = vmul.f32 %v2476, %v2476
        %v2552 = vmul.f32 %v2480, %v2480
        %v2553 = vmul.f32 %v2482, %v2482
        %v2554 = vmul.f32 %v2484, %v2484
        %v2555 = vmul.f32 %v2486, %v2486
        %v2556 = vmul.f32 %v2490, %v2490
        %v2557 = vmul.f32 %v2492, %v2492
        %v2558 = vmul.f32 %v2494, %v2494
        %v2559 = vmul.f32 %v2496, %v2496
        %v2560 = vmul.f32 %v2500, %v2500
        %v2561 = vmul.f32 %v2502, %v2502
        %v2562 = vmul.f32 %v2504, %v2504
        %v2563 = vmul.f32 %v2506, %v2506
        %v2564 = vmul.f32 %v2510, %v2510
        %v2565 = vmul.f32 %v2512, %v2512
        %v2566 = vmul.f32 %v2514, %v2514
        %v2567 = vmul.f32 %v2516, %v2516
        %v2568 = vmul.f32 %v2520, %v2520
        %v2569 = vmul.f32 %v2522, %v2522
        %v2570 = vmul.f32 %v2524, %v2524
        %v2571 = vmul.f32 %v2526, %v2526
        %v2572 = vmul.f32 %v2530, %v2530
        %v2573 = vmul.f32 %v2532, %v2532
        %v2574 = vmul.f32 %v2534, %v2534
        %v2575 = vmul.f32 %v2536, %v2536
        %v2576 = vmul.f32 %v2540, %v2540
        %v2577 = vmul.f32 %v2542, %v2542
        %v2578 = vmul.f32 %v2544, %v2544
        %v2579 = vmul.f32 %v2546, %v2546
        %v2580 = vmul.f32 %v2470, %v2548
        %v2581 = vmul.f32 %v2472, %v2549
        %v2582 = vmul.f32 %v2474, %v2550
        %v2583 = vmul.f32 %v2476, %v2551
        %v2584 = vmul.f32 %v2480, %v2552
        %v2585 = vmul.f32 %v2482, %v2553
        %v2586 = vmul.f32 %v2484, %v2554
        %v2587 = vmul.f32 %v2486, %v2555
        %v2588 = vmul.f32 %v2490, %v2556
        %v2589 = vmul.f32 %v2492, %v2557
        %v2590 = vmul.f32 %v2494, %v2558
        %v2591 = vmul.f32 %v2496, %v2559
        %v2592 = vmul.f32 %v2500, %v2560
        %v2593 = vmul.f32 %v2502, %v2561
        %v2594 = vmul.f32 %v2504, %v2562
        %v2595 = vmul.f32 %v2506, %v2563
        %v2596 = vmul.f32 %v2510, %v2564
        %v2597 = vmul.f32 %v2512, %v2565
        %v2598 = vmul.f32 %v2514, %v2566
        %v2599 = vmul.f32 %v2516, %v2567
        %v2600 = vmul.f32 %v2520, %v2568
        %v2601 = vmul.f32 %v2522, %v2569
        %v2602 = vmul.f32 %v2524, %v2570
        %v2603 = vmul.f32 %v2526, %v2571
        %v2604 = vmul.f32 %v2530, %v2572
        %v2605 = vmul.f32 %v2532, %v2573
        %v2606 = vmul.f32 %v2534, %v2574
        %v2607 = vmul.f32 %v2536, %v2575
        %v2608 = vmul.f32 %v2540, %v2576
        %v2609 = vmul.f32 %v2542, %v2577
        %v2610 = vmul.f32 %v2544, %v2578
        %v2611 = vmul.f32 %v2546, %v2579
        %v2612 = vmul.f32 %v2580, 0.044715
        %v2613 = vmul.f32 %v2581, 0.044715
        %v2614 = vmul.f32 %v2582, 0.044715
        %v2615 = vmul.f32 %v2583, 0.044715
        %v2616 = vmul.f32 %v2584, 0.044715
        %v2617 = vmul.f32 %v2585, 0.044715
        %v2618 = vmul.f32 %v2586, 0.044715
        %v2619 = vmul.f32 %v2587, 0.044715
        %v2620 = vmul.f32 %v2588, 0.044715
        %v2621 = vmul.f32 %v2589, 0.044715
        %v2622 = vmul.f32 %v2590, 0.044715
        %v2623 = vmul.f32 %v2591, 0.044715
        %v2624 = vmul.f32 %v2592, 0.044715
        %v2625 = vmul.f32 %v2593, 0.044715
        %v2626 = vmul.f32 %v2594, 0.044715
        %v2627 = vmul.f32 %v2595, 0.044715
        %v2628 = vmul.f32 %v2596, 0.044715
        %v2629 = vmul.f32 %v2597, 0.044715
        %v2630 = vmul.f32 %v2598, 0.044715
        %v2631 = vmul.f32 %v2599, 0.044715
        %v2632 = vmul.f32 %v2600, 0.044715
        %v2633 = vmul.f32 %v2601, 0.044715
        %v2634 = vmul.f32 %v2602, 0.044715
        %v2635 = vmul.f32 %v2603, 0.044715
        %v2636 = vmul.f32 %v2604, 0.044715
        %v2637 = vmul.f32 %v2605, 0.044715
        %v2638 = vmul.f32 %v2606, 0.044715
        %v2639 = vmul.f32 %v2607, 0.044715
        %v2640 = vmul.f32 %v2608, 0.044715
        %v2641 = vmul.f32 %v2609, 0.044715
        %v2642 = vmul.f32 %v2610, 0.044715
        %v2643 = vmul.f32 %v2611, 0.044715
        %v2644 = vadd.f32 %v2470, %v2612
        %v2645 = vadd.f32 %v2472, %v2613
        %v2646 = vadd.f32 %v2474, %v2614
        %v2647 = vadd.f32 %v2476, %v2615
        %v2648 = vadd.f32 %v2480, %v2616
        %v2649 = vadd.f32 %v2482, %v2617
        %v2650 = vadd.f32 %v2484, %v2618
        %v2651 = vadd.f32 %v2486, %v2619
        %v2652 = vadd.f32 %v2490, %v2620
        %v2653 = vadd.f32 %v2492, %v2621
        %v2654 = vadd.f32 %v2494, %v2622
        %v2655 = vadd.f32 %v2496, %v2623
        %v2656 = vadd.f32 %v2500, %v2624
        %v2657 = vadd.f32 %v2502, %v2625
        %v2658 = vadd.f32 %v2504, %v2626
        %v2659 = vadd.f32 %v2506, %v2627
        %v2660 = vadd.f32 %v2510, %v2628
        %v2661 = vadd.f32 %v2512, %v2629
        %v2662 = vadd.f32 %v2514, %v2630
        %v2663 = vadd.f32 %v2516, %v2631
        %v2664 = vadd.f32 %v2520, %v2632
        %v2665 = vadd.f32 %v2522, %v2633
        %v2666 = vadd.f32 %v2524, %v2634
        %v2667 = vadd.f32 %v2526, %v2635
        %v2668 = vadd.f32 %v2530, %v2636
        %v2669 = vadd.f32 %v2532, %v2637
        %v2670 = vadd.f32 %v2534, %v2638
        %v2671 = vadd.f32 %v2536, %v2639
        %v2672 = vadd.f32 %v2540, %v2640
        %v2673 = vadd.f32 %v2542, %v2641
        %v2674 = vadd.f32 %v2544, %v2642
        %v2675 = vadd.f32 %v2546, %v2643
        %v2676 = vmul.f32 %v2644, 0.7978846
        %v2677 = vmul.f32 %v2645, 0.7978846
        %v2678 = vmul.f32 %v2646, 0.7978846
        %v2679 = vmul.f32 %v2647, 0.7978846
        %v2680 = vmul.f32 %v2648, 0.7978846
        %v2681 = vmul.f32 %v2649, 0.7978846
        %v2682 = vmul.f32 %v2650, 0.7978846
        %v2683 = vmul.f32 %v2651, 0.7978846
        %v2684 = vmul.f32 %v2652, 0.7978846
        %v2685 = vmul.f32 %v2653, 0.7978846
        %v2686 = vmul.f32 %v2654, 0.7978846
        %v2687 = vmul.f32 %v2655, 0.7978846
        %v2688 = vmul.f32 %v2656, 0.7978846
        %v2689 = vmul.f32 %v2657, 0.7978846
        %v2690 = vmul.f32 %v2658, 0.7978846
        %v2691 = vmul.f32 %v2659, 0.7978846
        %v2692 = vmul.f32 %v2660, 0.7978846
        %v2693 = vmul.f32 %v2661, 0.7978846
        %v2694 = vmul.f32 %v2662, 0.7978846
        %v2695 = vmul.f32 %v2663, 0.7978846
        %v2696 = vmul.f32 %v2664, 0.7978846
        %v2697 = vmul.f32 %v2665, 0.7978846
        %v2698 = vmul.f32 %v2666, 0.7978846
        %v2699 = vmul.f32 %v2667, 0.7978846
        %v2700 = vmul.f32 %v2668, 0.7978846
        %v2701 = vmul.f32 %v2669, 0.7978846
        %v2702 = vmul.f32 %v2670, 0.7978846
        %v2703 = vmul.f32 %v2671, 0.7978846
        %v2704 = vmul.f32 %v2672, 0.7978846
        %v2705 = vmul.f32 %v2673, 0.7978846
        %v2706 = vmul.f32 %v2674, 0.7978846
        %v2707 = vmul.f32 %v2675, 0.7978846
        %v2708 = vtanh.pop %v2676
        %v2709 = vtanh.pop %v2677
        %v2710 = vtanh.pop %v2678
        %v2711 = vtanh.pop %v2679
        %v2712 = vtanh.pop %v2680
        %v2713 = vtanh.pop %v2681
        %v2714 = vtanh.pop %v2682
        %v2715 = vtanh.pop %v2683
        %v2716 = vtanh.pop %v2684
        %v2717 = vtanh.pop %v2685
        %v2718 = vtanh.pop %v2686
        %v2719 = vtanh.pop %v2687
        %v2720 = vtanh.pop %v2688
        %v2721 = vtanh.pop %v2689
        %v2722 = vtanh.pop %v2690
        %v2723 = vtanh.pop %v2691
        %v2724 = vtanh.pop %v2692
        %v2725 = vtanh.pop %v2693
        %v2726 = vtanh.pop %v2694
        %v2727 = vtanh.pop %v2695
        %v2728 = vtanh.pop %v2696
        %v2729 = vtanh.pop %v2697
        %v2730 = vtanh.pop %v2698
        %v2731 = vtanh.pop %v2699
        %v2732 = vtanh.pop %v2700
        %v2733 = vtanh.pop %v2701
        %v2734 = vtanh.pop %v2702
        %v2735 = vtanh.pop %v2703
        %v2736 = vtanh.pop %v2704
        %v2737 = vtanh.pop %v2705
        %v2738 = vtanh.pop %v2706
        %v2739 = vtanh.pop %v2707
        %v2740 = vadd.f32 %v2708, 1.0
        %v2741 = vadd.f32 %v2709, 1.0
        %v2742 = vadd.f32 %v2710, 1.0
        %v2743 = vadd.f32 %v2711, 1.0
        %v2744 = vadd.f32 %v2712, 1.0
        %v2745 = vadd.f32 %v2713, 1.0
        %v2746 = vadd.f32 %v2714, 1.0
        %v2747 = vadd.f32 %v2715, 1.0
        %v2748 = vadd.f32 %v2716, 1.0
        %v2749 = vadd.f32 %v2717, 1.0
        %v2750 = vadd.f32 %v2718, 1.0
        %v2751 = vadd.f32 %v2719, 1.0
        %v2752 = vadd.f32 %v2720, 1.0
        %v2753 = vadd.f32 %v2721, 1.0
        %v2754 = vadd.f32 %v2722, 1.0
        %v2755 = vadd.f32 %v2723, 1.0
        %v2756 = vadd.f32 %v2724, 1.0
        %v2757 = vadd.f32 %v2725, 1.0
        %v2758 = vadd.f32 %v2726, 1.0
        %v2759 = vadd.f32 %v2727, 1.0
        %v2760 = vadd.f32 %v2728, 1.0
        %v2761 = vadd.f32 %v2729, 1.0
        %v2762 = vadd.f32 %v2730, 1.0
        %v2763 = vadd.f32 %v2731, 1.0
        %v2764 = vadd.f32 %v2732, 1.0
        %v2765 = vadd.f32 %v2733, 1.0
        %v2766 = vadd.f32 %v2734, 1.0
        %v2767 = vadd.f32 %v2735, 1.0
        %v2768 = vadd.f32 %v2736, 1.0
        %v2769 = vadd.f32 %v2737, 1.0
        %v2770 = vadd.f32 %v2738, 1.0
        %v2771 = vadd.f32 %v2739, 1.0
        %v2772 = vmul.f32 %v2740, 0.5
        %v2773 = vmul.f32 %v2741, 0.5
        %v2774 = vmul.f32 %v2742, 0.5
        %v2775 = vmul.f32 %v2743, 0.5
        %v2776 = vmul.f32 %v2744, 0.5
        %v2777 = vmul.f32 %v2745, 0.5
        %v2778 = vmul.f32 %v2746, 0.5
        %v2779 = vmul.f32 %v2747, 0.5
        %v2780 = vmul.f32 %v2748, 0.5
        %v2781 = vmul.f32 %v2749, 0.5
        %v2782 = vmul.f32 %v2750, 0.5
        %v2783 = vmul.f32 %v2751, 0.5
        %v2784 = vmul.f32 %v2752, 0.5
        %v2785 = vmul.f32 %v2753, 0.5
        %v2786 = vmul.f32 %v2754, 0.5
        %v2787 = vmul.f32 %v2755, 0.5
        %v2788 = vmul.f32 %v2756, 0.5
        %v2789 = vmul.f32 %v2757, 0.5
        %v2790 = vmul.f32 %v2758, 0.5
        %v2791 = vmul.f32 %v2759, 0.5
        %v2792 = vmul.f32 %v2760, 0.5
        %v2793 = vmul.f32 %v2761, 0.5
        %v2794 = vmul.f32 %v2762, 0.5
        %v2795 = vmul.f32 %v2763, 0.5
        %v2796 = vmul.f32 %v2764, 0.5
        %v2797 = vmul.f32 %v2765, 0.5
        %v2798 = vmul.f32 %v2766, 0.5
        %v2799 = vmul.f32 %v2767, 0.5
        %v2800 = vmul.f32 %v2768, 0.5
        %v2801 = vmul.f32 %v2769, 0.5
        %v2802 = vmul.f32 %v2770, 0.5
        %v2803 = vmul.f32 %v2771, 0.5
        %v2804 = vmul.f32 %v2470, %v2772
        %v2805 = vmul.f32 %v2472, %v2773
        %v2806 = vmul.f32 %v2474, %v2774
        %v2807 = vmul.f32 %v2476, %v2775
        %v2808 = vmul.f32 %v2480, %v2776
        %v2809 = vmul.f32 %v2482, %v2777
        %v2810 = vmul.f32 %v2484, %v2778
        %v2811 = vmul.f32 %v2486, %v2779
        %v2812 = vmul.f32 %v2490, %v2780
        %v2813 = vmul.f32 %v2492, %v2781
        %v2814 = vmul.f32 %v2494, %v2782
        %v2815 = vmul.f32 %v2496, %v2783
        %v2816 = vmul.f32 %v2500, %v2784
        %v2817 = vmul.f32 %v2502, %v2785
        %v2818 = vmul.f32 %v2504, %v2786
        %v2819 = vmul.f32 %v2506, %v2787
        %v2820 = vmul.f32 %v2510, %v2788
        %v2821 = vmul.f32 %v2512, %v2789
        %v2822 = vmul.f32 %v2514, %v2790
        %v2823 = vmul.f32 %v2516, %v2791
        %v2824 = vmul.f32 %v2520, %v2792
        %v2825 = vmul.f32 %v2522, %v2793
        %v2826 = vmul.f32 %v2524, %v2794
        %v2827 = vmul.f32 %v2526, %v2795
        %v2828 = vmul.f32 %v2530, %v2796
        %v2829 = vmul.f32 %v2532, %v2797
        %v2830 = vmul.f32 %v2534, %v2798
        %v2831 = vmul.f32 %v2536, %v2799
        %v2832 = vmul.f32 %v2540, %v2800
        %v2833 = vmul.f32 %v2542, %v2801
        %v2834 = vmul.f32 %v2544, %v2802
        %v2835 = vmul.f32 %v2546, %v2803
        %v2836 = vpack.c.bf16 %v2806, %v2804
        %v2837 = vpack.c.bf16 %v2807, %v2805
        %v2838 = vpack.c.bf16 %v2810, %v2808
        %v2839 = vpack.c.bf16 %v2811, %v2809
        %v2840 = vpack.c.bf16 %v2814, %v2812
        %v2841 = vpack.c.bf16 %v2815, %v2813
        %v2842 = vpack.c.bf16 %v2818, %v2816
        %v2843 = vpack.c.bf16 %v2819, %v2817
        %v2844 = vpack.c.bf16 %v2822, %v2820
        %v2845 = vpack.c.bf16 %v2823, %v2821
        %v2846 = vpack.c.bf16 %v2826, %v2824
        %v2847 = vpack.c.bf16 %v2827, %v2825
        %v2848 = vpack.c.bf16 %v2830, %v2828
        %v2849 = vpack.c.bf16 %v2831, %v2829
        %v2850 = vpack.c.bf16 %v2834, %v2832
        %v2851 = vpack.c.bf16 %v2835, %v2833
        %v2852 = vld [vmem:[%s11] sm:$0xf]
        %v2853 = vld [vmem:[%s11 + $0x4] sm:$0xf]
        %v2854 = vld [vmem:[%s11 + $0x8] sm:$0xf]
        %v2855 = vld [vmem:[%s11 + $0xc] sm:$0xf]
        %v2856 = vld [vmem:[%s11 + $0x10] sm:$0xf]
        %v2857 = vld [vmem:[%s11 + $0x14] sm:$0xf]
        %v2858 = vld [vmem:[%s11 + $0x18] sm:$0xf]
        %v2859 = vld [vmem:[%s11 + $0x1c] sm:$0xf]
        %v2860 = vld [vmem:[%s11 + $0x20] sm:$0xf]
        %v2861 = vld [vmem:[%s11 + $0x24] sm:$0xf]
        %v2862 = vld [vmem:[%s11 + $0x28] sm:$0xf]
        %v2863 = vld [vmem:[%s11 + $0x2c] sm:$0xf]
        %v2864 = vld [vmem:[%s11 + $0x30] sm:$0xf]
        %v2865 = vld [vmem:[%s11 + $0x34] sm:$0xf]
        %v2866 = vld [vmem:[%s11 + $0x38] sm:$0xf]
        %v2867 = vld [vmem:[%s11 + $0x3c] sm:$0xf]
        %v2868 = vld [vmem:[%s11 + $0x40] sm:$0xf]
        %v2869 = vld [vmem:[%s11 + $0x44] sm:$0xf]
        %v2870 = vld [vmem:[%s11 + $0x48] sm:$0xf]
        %v2871 = vld [vmem:[%s11 + $0x4c] sm:$0xf]
        %v2872 = vld [vmem:[%s11 + $0x50] sm:$0xf]
        %v2873 = vld [vmem:[%s11 + $0x54] sm:$0xf]
        %v2874 = vld [vmem:[%s11 + $0x58] sm:$0xf]
        %v2875 = vld [vmem:[%s11 + $0x5c] sm:$0xf]
        %v2876 = vld [vmem:[%s11 + $0x60] sm:$0xf]
        %v2877 = vld [vmem:[%s11 + $0x64] sm:$0xf]
        %v2878 = vld [vmem:[%s11 + $0x68] sm:$0xf]
        %v2879 = vld [vmem:[%s11 + $0x6c] sm:$0xf]
        %v2880 = vld [vmem:[%s11 + $0x70] sm:$0xf]
        %v2881 = vld [vmem:[%s11 + $0x74] sm:$0xf]
        %v2882 = vld [vmem:[%s11 + $0x78] sm:$0xf]
        %v2883 = vld [vmem:[%s11 + $0x7c] sm:$0xf]
        %v2916 = vunpack.c.l.b16 %v2852
        %v2917 = vunpack.c.l.b16 %v2853
        %v2918 = vunpack.c.l.b16 %v2854
        %v2919 = vunpack.c.l.b16 %v2855
        %v2920 = vunpack.c.l.b16 %v2856
        %v2921 = vunpack.c.l.b16 %v2857
        %v2922 = vunpack.c.l.b16 %v2858
        %v2923 = vunpack.c.l.b16 %v2859
        %v2924 = vunpack.c.l.b16 %v2860
        %v2925 = vunpack.c.l.b16 %v2861
        %v2926 = vunpack.c.l.b16 %v2862
        %v2927 = vunpack.c.l.b16 %v2863
        %v2928 = vunpack.c.l.b16 %v2864
        %v2929 = vunpack.c.l.b16 %v2865
        %v2930 = vunpack.c.l.b16 %v2866
        %v2931 = vunpack.c.l.b16 %v2867
        %v2932 = vunpack.c.l.b16 %v2868
        %v2933 = vunpack.c.l.b16 %v2869
        %v2934 = vunpack.c.l.b16 %v2870
        %v2935 = vunpack.c.l.b16 %v2871
        %v2936 = vunpack.c.l.b16 %v2872
        %v2937 = vunpack.c.l.b16 %v2873
        %v2938 = vunpack.c.l.b16 %v2874
        %v2939 = vunpack.c.l.b16 %v2875
        %v2940 = vunpack.c.l.b16 %v2876
        %v2941 = vunpack.c.l.b16 %v2877
        %v2942 = vunpack.c.l.b16 %v2878
        %v2943 = vunpack.c.l.b16 %v2879
        %v2944 = vunpack.c.l.b16 %v2880
        %v2945 = vunpack.c.l.b16 %v2881
        %v2946 = vunpack.c.l.b16 %v2882
        %v2947 = vunpack.c.l.b16 %v2883
        %v2948 = vpack.c.b16 %v2917, %v2916
        %v2949 = vpack.c.b16 %v2919, %v2918
        %v2950 = vpack.c.b16 %v2921, %v2920
        %v2951 = vpack.c.b16 %v2923, %v2922
        %v2952 = vpack.c.b16 %v2925, %v2924
        %v2953 = vpack.c.b16 %v2927, %v2926
        %v2954 = vpack.c.b16 %v2929, %v2928
        %v2955 = vpack.c.b16 %v2931, %v2930
        %v2956 = vpack.c.b16 %v2933, %v2932
        %v2957 = vpack.c.b16 %v2935, %v2934
        %v2958 = vpack.c.b16 %v2937, %v2936
        %v2959 = vpack.c.b16 %v2939, %v2938
        %v2960 = vpack.c.b16 %v2941, %v2940
        %v2961 = vpack.c.b16 %v2943, %v2942
        %v2962 = vpack.c.b16 %v2945, %v2944
        %v2963 = vpack.c.b16 %v2947, %v2946
        %2980 = vmatprep.subr.bf16.mxu0 0
        %2981 = vmatpush1.bf16.msra.mxu0 %v2948
        %2982 = vmatprep.subr.bf16.mxu0 0
        %2983 = vmatpush1.bf16.msra.mxu0 %v2949
        %2984 = vmatprep.subr.bf16.mxu0 0
        %2985 = vmatpush1.bf16.msra.mxu0 %v2950
        %2986 = vmatprep.subr.bf16.mxu0 0
        %2987 = vmatpush1.bf16.msra.mxu0 %v2951
        %2988 = vmatprep.subr.bf16.mxu0 0
        %2989 = vmatpush1.bf16.msra.mxu0 %v2952
        %2990 = vmatprep.subr.bf16.mxu0 0
        %2991 = vmatpush1.bf16.msra.mxu0 %v2953
        %2992 = vmatprep.subr.bf16.mxu0 0
        %2993 = vmatpush1.bf16.msra.mxu0 %v2954
        %2994 = vmatprep.subr.bf16.mxu0 0
        %2995 = vmatpush1.bf16.msra.mxu0 %v2955
        %2996 = vmatprep.subr.bf16.mxu0 0
        %2997 = vmatpush1.bf16.msra.mxu0 %v2956
        %2998 = vmatprep.subr.bf16.mxu0 0
        %2999 = vmatpush1.bf16.msra.mxu0 %v2957
        %3000 = vmatprep.subr.bf16.mxu0 0
        %3001 = vmatpush1.bf16.msra.mxu0 %v2958
        %3002 = vmatprep.subr.bf16.mxu0 0
        %3003 = vmatpush1.bf16.msra.mxu0 %v2959
        %3004 = vmatprep.subr.bf16.mxu0 0
        %3005 = vmatpush1.bf16.msra.mxu0 %v2960
        %3006 = vmatprep.subr.bf16.mxu0 0
        %3007 = vmatpush1.bf16.msra.mxu0 %v2961
        %3008 = vmatprep.subr.bf16.mxu0 0
        %3009 = vmatpush1.bf16.msra.mxu0 %v2962
        %3010 = vmatprep.subr.bf16.mxu0 0
        %3011 = vmatpush1.bf16.msra.mxu0 %v2963
        %3012 = vmatprep.mubr.bf16.mxu0 %v2837
        %3013 = vmatmul.mubr.bf16.gmra.mrb[0].mxu0 %v2836
        %v3014 = vpop.f32.mrb[0].mxu0
        %v3015 = vadd.f32 %v2339, %v3014
        %v3016 = vpop.f32.mrb[0].mxu0
        %v3017 = vpop.f32.mrb[0].mxu0
        %v3018 = vadd.f32 %v2340, %v3017
        %v3019 = vpop.f32.mrb[0].mxu0
        %3020 = vmatprep.mubr.bf16.mxu0 %v2839
        %3021 = vmatmul.mubr.bf16.gmra.mrb[0].mxu0 %v2838
        %v3022 = vpop.f32.mrb[0].mxu0
        %v3023 = vadd.f32 %v2341, %v3022
        %v3024 = vpop.f32.mrb[0].mxu0
        %v3025 = vpop.f32.mrb[0].mxu0
        %v3026 = vadd.f32 %v2342, %v3025
        %v3027 = vpop.f32.mrb[0].mxu0
        %3028 = vmatprep.mubr.bf16.mxu0 %v2841
        %3029 = vmatmul.mubr.bf16.gmra.mrb[0].mxu0 %v2840
        %v3030 = vpop.f32.mrb[0].mxu0
        %v3031 = vadd.f32 %v2343, %v3030
        %v3032 = vpop.f32.mrb[0].mxu0
        %v3033 = vpop.f32.mrb[0].mxu0
        %v3034 = vadd.f32 %v2344, %v3033
        %v3035 = vpop.f32.mrb[0].mxu0
        %3036 = vmatprep.mubr.bf16.mxu0 %v2843
        %3037 = vmatmul.mubr.bf16.gmra.mrb[0].mxu0 %v2842
        %v3038 = vpop.f32.mrb[0].mxu0
        %v3039 = vadd.f32 %v2345, %v3038
        %v3040 = vpop.f32.mrb[0].mxu0
        %v3041 = vpop.f32.mrb[0].mxu0
        %v3042 = vadd.f32 %v2346, %v3041
        %v3043 = vpop.f32.mrb[0].mxu0
        %3044 = vmatprep.mubr.bf16.mxu0 %v2845
        %3045 = vmatmul.mubr.bf16.gmra.mrb[0].mxu0 %v2844
        %v3046 = vpop.f32.mrb[0].mxu0
        %v3047 = vadd.f32 %v2347, %v3046
        %v3048 = vpop.f32.mrb[0].mxu0
        %v3049 = vpop.f32.mrb[0].mxu0
        %v3050 = vadd.f32 %v2348, %v3049
        %v3051 = vpop.f32.mrb[0].mxu0
        %3052 = vmatprep.mubr.bf16.mxu0 %v2847
        %3053 = vmatmul.mubr.bf16.gmra.mrb[0].mxu0 %v2846
        %v3054 = vpop.f32.mrb[0].mxu0
        %v3055 = vadd.f32 %v2349, %v3054
        %v3056 = vpop.f32.mrb[0].mxu0
        %v3057 = vpop.f32.mrb[0].mxu0
        %v3058 = vadd.f32 %v2350, %v3057
        %v3059 = vpop.f32.mrb[0].mxu0
        %3060 = vmatprep.mubr.bf16.mxu0 %v2849
        %3061 = vmatmul.mubr.bf16.gmra.mrb[0].mxu0 %v2848
        %v3062 = vpop.f32.mrb[0].mxu0
        %v3063 = vadd.f32 %v2351, %v3062
        %v3064 = vpop.f32.mrb[0].mxu0
        %v3065 = vpop.f32.mrb[0].mxu0
        %v3066 = vadd.f32 %v2352, %v3065
        %v3067 = vpop.f32.mrb[0].mxu0
        %3068 = vmatprep.mubr.bf16.mxu0 %v2851
        %3069 = vmatmul.mubr.bf16.gmra.mrb[0].mxu0 %v2850
        %v3070 = vpop.f32.mrb[0].mxu0
        %v3071 = vadd.f32 %v2353, %v3070
        %v3072 = vpop.f32.mrb[0].mxu0
        %v3073 = vpop.f32.mrb[0].mxu0
        %v3074 = vadd.f32 %v2354, %v3073
        %v3075 = vpop.f32.mrb[0].mxu0
        %3076 = vdwg.mxu0
        %s3077 = scalar_lea.vmem %s2, 1
        %v3078 = vld [vmem:[%s3077] sm:$0x1]
        %s3079 = scalar_lea.vmem %s3, 1
        %v3080 = vld [vmem:[%s3079] sm:$0x1]
        %v3081 = vsel %vm485, %v3015, 0.0
        %3082 = vadd.xlane.f32.xlu0 %v3081
        %v3083 = vpop.xlane.xlu0 %3082
        %v3084 = vsel %vm485, %v3018, 0.0
        %3085 = vadd.xlane.f32.xlu0 %v3084
        %v3086 = vpop.xlane.xlu0 %3085
        %v3087 = vsel %vm485, %v3023, 0.0
        %3088 = vadd.xlane.f32.xlu0 %v3087
        %v3089 = vpop.xlane.xlu0 %3088
        %v3090 = vsel %vm485, %v3026, 0.0
        %3091 = vadd.xlane.f32.xlu0 %v3090
        %v3092 = vpop.xlane.xlu0 %3091
        %v3093 = vsel %vm485, %v3031, 0.0
        %3094 = vadd.xlane.f32.xlu0 %v3093
        %v3095 = vpop.xlane.xlu0 %3094
        %v3096 = vsel %vm485, %v3034, 0.0
        %3097 = vadd.xlane.f32.xlu0 %v3096
        %v3098 = vpop.xlane.xlu0 %3097
        %v3099 = vsel %vm485, %v3039, 0.0
        %3100 = vadd.xlane.f32.xlu0 %v3099
        %v3101 = vpop.xlane.xlu0 %3100
        %v3102 = vsel %vm485, %v3042, 0.0
        %3103 = vadd.xlane.f32.xlu0 %v3102
        %v3104 = vpop.xlane.xlu0 %3103
        %v3105 = vsel %vm485, %v3047, 0.0
        %3106 = vadd.xlane.f32.xlu0 %v3105
        %v3107 = vpop.xlane.xlu0 %3106
        %v3108 = vsel %vm485, %v3050, 0.0
        %3109 = vadd.xlane.f32.xlu0 %v3108
        %v3110 = vpop.xlane.xlu0 %3109
        %v3111 = vsel %vm485, %v3055, 0.0
        %3112 = vadd.xlane.f32.xlu0 %v3111
        %v3113 = vpop.xlane.xlu0 %3112
        %v3114 = vsel %vm485, %v3058, 0.0
        %3115 = vadd.xlane.f32.xlu0 %v3114
        %v3116 = vpop.xlane.xlu0 %3115
        %v3117 = vsel %vm485, %v3063, 0.0
        %3118 = vadd.xlane.f32.xlu0 %v3117
        %v3119 = vpop.xlane.xlu0 %3118
        %v3120 = vsel %vm485, %v3066, 0.0
        %3121 = vadd.xlane.f32.xlu0 %v3120
        %v3122 = vpop.xlane.xlu0 %3121
        %v3123 = vsel %vm485, %v3071, 0.0
        %3124 = vadd.xlane.f32.xlu0 %v3123
        %v3125 = vpop.xlane.xlu0 %3124
        %v3126 = vsel %vm485, %v3074, 0.0
        %3127 = vadd.xlane.f32.xlu0 %v3126
        %v3128 = vpop.xlane.xlu0 %3127
        %v3129 = vmul.f32 %v3083, %v534
        %v3130 = vmul.f32 %v3086, %v534
        %v3131 = vmul.f32 %v3089, %v534
        %v3132 = vmul.f32 %v3092, %v534
        %v3133 = vmul.f32 %v3095, %v534
        %v3134 = vmul.f32 %v3098, %v534
        %v3135 = vmul.f32 %v3101, %v534
        %v3136 = vmul.f32 %v3104, %v534
        %v3137 = vmul.f32 %v3107, %v534
        %v3138 = vmul.f32 %v3110, %v534
        %v3139 = vmul.f32 %v3113, %v534
        %v3140 = vmul.f32 %v3116, %v534
        %v3141 = vmul.f32 %v3119, %v534
        %v3142 = vmul.f32 %v3122, %v534
        %v3143 = vmul.f32 %v3125, %v534
        %v3144 = vmul.f32 %v3128, %v534
        %v3145 = vsub.f32 %v3015, %v3129
        %v3146 = vsub.f32 %v3018, %v3130
        %v3147 = vsub.f32 %v3023, %v3131
        %v3148 = vsub.f32 %v3026, %v3132
        %v3149 = vsub.f32 %v3031, %v3133
        %v3150 = vsub.f32 %v3034, %v3134
        %v3151 = vsub.f32 %v3039, %v3135
        %v3152 = vsub.f32 %v3042, %v3136
        %v3153 = vsub.f32 %v3047, %v3137
        %v3154 = vsub.f32 %v3050, %v3138
        %v3155 = vsub.f32 %v3055, %v3139
        %v3156 = vsub.f32 %v3058, %v3140
        %v3157 = vsub.f32 %v3063, %v3141
        %v3158 = vsub.f32 %v3066, %v3142
        %v3159 = vsub.f32 %v3071, %v3143
        %v3160 = vsub.f32 %v3074, %v3144
        %v3161 = vmul.f32 %v3145, %v3145
        %v3162 = vmul.f32 %v3146, %v3146
        %v3163 = vmul.f32 %v3147, %v3147
        %v3164 = vmul.f32 %v3148, %v3148
        %v3165 = vmul.f32 %v3149, %v3149
        %v3166 = vmul.f32 %v3150, %v3150
        %v3167 = vmul.f32 %v3151, %v3151
        %v3168 = vmul.f32 %v3152, %v3152
        %v3169 = vmul.f32 %v3153, %v3153
        %v3170 = vmul.f32 %v3154, %v3154
        %v3171 = vmul.f32 %v3155, %v3155
        %v3172 = vmul.f32 %v3156, %v3156
        %v3173 = vmul.f32 %v3157, %v3157
        %v3174 = vmul.f32 %v3158, %v3158
        %v3175 = vmul.f32 %v3159, %v3159
        %v3176 = vmul.f32 %v3160, %v3160
        %v3177 = vsel %vm485, %v3161, 0.0
        %3178 = vadd.xlane.f32.xlu0 %v3177
        %v3179 = vpop.xlane.xlu0 %3178
        %v3180 = vsel %vm485, %v3162, 0.0
        %3181 = vadd.xlane.f32.xlu0 %v3180
        %v3182 = vpop.xlane.xlu0 %3181
        %v3183 = vsel %vm485, %v3163, 0.0
        %3184 = vadd.xlane.f32.xlu0 %v3183
        %v3185 = vpop.xlane.xlu0 %3184
        %v3186 = vsel %vm485, %v3164, 0.0
        %3187 = vadd.xlane.f32.xlu0 %v3186
        %v3188 = vpop.xlane.xlu0 %3187
        %v3189 = vsel %vm485, %v3165, 0.0
        %3190 = vadd.xlane.f32.xlu0 %v3189
        %v3191 = vpop.xlane.xlu0 %3190
        %v3192 = vsel %vm485, %v3166, 0.0
        %3193 = vadd.xlane.f32.xlu0 %v3192
        %v3194 = vpop.xlane.xlu0 %3193
        %v3195 = vsel %vm485, %v3167, 0.0
        %3196 = vadd.xlane.f32.xlu0 %v3195
        %v3197 = vpop.xlane.xlu0 %3196
        %v3198 = vsel %vm485, %v3168, 0.0
        %3199 = vadd.xlane.f32.xlu0 %v3198
        %v3200 = vpop.xlane.xlu0 %3199
        %v3201 = vsel %vm485, %v3169, 0.0
        %3202 = vadd.xlane.f32.xlu0 %v3201
        %v3203 = vpop.xlane.xlu0 %3202
        %v3204 = vsel %vm485, %v3170, 0.0
        %3205 = vadd.xlane.f32.xlu0 %v3204
        %v3206 = vpop.xlane.xlu0 %3205
        %v3207 = vsel %vm485, %v3171, 0.0
        %3208 = vadd.xlane.f32.xlu0 %v3207
        %v3209 = vpop.xlane.xlu0 %3208
        %v3210 = vsel %vm485, %v3172, 0.0
        %3211 = vadd.xlane.f32.xlu0 %v3210
        %v3212 = vpop.xlane.xlu0 %3211
        %v3213 = vsel %vm485, %v3173, 0.0
        %3214 = vadd.xlane.f32.xlu0 %v3213
        %v3215 = vpop.xlane.xlu0 %3214
        %v3216 = vsel %vm485, %v3174, 0.0
        %3217 = vadd.xlane.f32.xlu0 %v3216
        %v3218 = vpop.xlane.xlu0 %3217
        %v3219 = vsel %vm485, %v3175, 0.0
        %3220 = vadd.xlane.f32.xlu0 %v3219
        %v3221 = vpop.xlane.xlu0 %3220
        %v3222 = vsel %vm485, %v3176, 0.0
        %3223 = vadd.xlane.f32.xlu0 %v3222
        %v3224 = vpop.xlane.xlu0 %3223
        %v3225 = vmul.f32 %v3179, %v534
        %v3226 = vmul.f32 %v3182, %v534
        %v3227 = vmul.f32 %v3185, %v534
        %v3228 = vmul.f32 %v3188, %v534
        %v3229 = vmul.f32 %v3191, %v534
        %v3230 = vmul.f32 %v3194, %v534
        %v3231 = vmul.f32 %v3197, %v534
        %v3232 = vmul.f32 %v3200, %v534
        %v3233 = vmul.f32 %v3203, %v534
        %v3234 = vmul.f32 %v3206, %v534
        %v3235 = vmul.f32 %v3209, %v534
        %v3236 = vmul.f32 %v3212, %v534
        %v3237 = vmul.f32 %v3215, %v534
        %v3238 = vmul.f32 %v3218, %v534
        %v3239 = vmul.f32 %v3221, %v534
        %v3240 = vmul.f32 %v3224, %v534
        %v3241 = vadd.f32 %v3225, 1e-05
        %v3242 = vadd.f32 %v3226, 1e-05
        %v3243 = vadd.f32 %v3227, 1e-05
        %v3244 = vadd.f32 %v3228, 1e-05
        %v3245 = vadd.f32 %v3229, 1e-05
        %v3246 = vadd.f32 %v3230, 1e-05
        %v3247 = vadd.f32 %v3231, 1e-05
        %v3248 = vadd.f32 %v3232, 1e-05
        %v3249 = vadd.f32 %v3233, 1e-05
        %v3250 = vadd.f32 %v3234, 1e-05
        %v3251 = vadd.f32 %v3235, 1e-05
        %v3252 = vadd.f32 %v3236, 1e-05
        %v3253 = vadd.f32 %v3237, 1e-05
        %v3254 = vadd.f32 %v3238, 1e-05
        %v3255 = vadd.f32 %v3239, 1e-05
        %v3256 = vadd.f32 %v3240, 1e-05
        %v3257 = vrsqrt.pop %v3241
        %v3258 = vrsqrt.pop %v3242
        %v3259 = vrsqrt.pop %v3243
        %v3260 = vrsqrt.pop %v3244
        %v3261 = vrsqrt.pop %v3245
        %v3262 = vrsqrt.pop %v3246
        %v3263 = vrsqrt.pop %v3247
        %v3264 = vrsqrt.pop %v3248
        %v3265 = vrsqrt.pop %v3249
        %v3266 = vrsqrt.pop %v3250
        %v3267 = vrsqrt.pop %v3251
        %v3268 = vrsqrt.pop %v3252
        %v3269 = vrsqrt.pop %v3253
        %v3270 = vrsqrt.pop %v3254
        %v3271 = vrsqrt.pop %v3255
        %v3272 = vrsqrt.pop %v3256
        %v3273 = vmul.f32 %v3145, %v3257
        %v3274 = vmul.f32 %v3146, %v3258
        %v3275 = vmul.f32 %v3147, %v3259
        %v3276 = vmul.f32 %v3148, %v3260
        %v3277 = vmul.f32 %v3149, %v3261
        %v3278 = vmul.f32 %v3150, %v3262
        %v3279 = vmul.f32 %v3151, %v3263
        %v3280 = vmul.f32 %v3152, %v3264
        %v3281 = vmul.f32 %v3153, %v3265
        %v3282 = vmul.f32 %v3154, %v3266
        %v3283 = vmul.f32 %v3155, %v3267
        %v3284 = vmul.f32 %v3156, %v3268
        %v3285 = vmul.f32 %v3157, %v3269
        %v3286 = vmul.f32 %v3158, %v3270
        %v3287 = vmul.f32 %v3159, %v3271
        %v3288 = vmul.f32 %v3160, %v3272
        %v3290 = vlaneseq
        %v3291 = vshrl.u32 %v3290, 7
        %v3292 = vsub.s32 0, %v3291
        %v3293 = vrot.slane %v3078, %v3292
        %v3295 = vmul.f32 %v3273, %v3293
        %v3296 = vmul.f32 %v3274, %v3293
        %v3297 = vmul.f32 %v3275, %v3293
        %v3298 = vmul.f32 %v3276, %v3293
        %v3299 = vmul.f32 %v3277, %v3293
        %v3300 = vmul.f32 %v3278, %v3293
        %v3301 = vmul.f32 %v3279, %v3293
        %v3302 = vmul.f32 %v3280, %v3293
        %v3303 = vmul.f32 %v3281, %v3293
        %v3304 = vmul.f32 %v3282, %v3293
        %v3305 = vmul.f32 %v3283, %v3293
        %v3306 = vmul.f32 %v3284, %v3293
        %v3307 = vmul.f32 %v3285, %v3293
        %v3308 = vmul.f32 %v3286, %v3293
        %v3309 = vmul.f32 %v3287, %v3293
        %v3310 = vmul.f32 %v3288, %v3293
        %v3312 = vlaneseq
        %v3313 = vshrl.u32 %v3312, 7
        %v3314 = vsub.s32 0, %v3313
        %v3315 = vrot.slane %v3080, %v3314
        %v3317 = vadd.f32 %v3295, %v3315
        %v3318 = vadd.f32 %v3296, %v3315
        %v3319 = vadd.f32 %v3297, %v3315
        %v3320 = vadd.f32 %v3298, %v3315
        %v3321 = vadd.f32 %v3299, %v3315
        %v3322 = vadd.f32 %v3300, %v3315
        %v3323 = vadd.f32 %v3301, %v3315
        %v3324 = vadd.f32 %v3302, %v3315
        %v3325 = vadd.f32 %v3303, %v3315
        %v3326 = vadd.f32 %v3304, %v3315
        %v3327 = vadd.f32 %v3305, %v3315
        %v3328 = vadd.f32 %v3306, %v3315
        %v3329 = vadd.f32 %v3307, %v3315
        %v3330 = vadd.f32 %v3308, %v3315
        %v3331 = vadd.f32 %v3309, %v3315
        %v3332 = vadd.f32 %v3310, %v3315
        %v3333 = vpack.c.bf16 %v3318, %v3317
        %v3334 = vpack.c.bf16 %v3320, %v3319
        %v3335 = vpack.c.bf16 %v3322, %v3321
        %v3336 = vpack.c.bf16 %v3324, %v3323
        %v3337 = vpack.c.bf16 %v3326, %v3325
        %v3338 = vpack.c.bf16 %v3328, %v3327
        %v3339 = vpack.c.bf16 %v3330, %v3329
        %v3340 = vpack.c.bf16 %v3332, %v3331
        %s3341 = scalar_lea.vmem %s4, 64
        %v3342 = vld [vmem:[%s3341] sm:$0xff]
        %v3343 = vld [vmem:[%s3341 + $0x8] sm:$0xff]
        %v3344 = vld [vmem:[%s3341 + $0x10] sm:$0xff]
        %v3345 = vld [vmem:[%s3341 + $0x18] sm:$0xff]
        %v3346 = vld [vmem:[%s3341 + $0x20] sm:$0xff]
        %v3347 = vld [vmem:[%s3341 + $0x28] sm:$0xff]
        %v3348 = vld [vmem:[%s3341 + $0x30] sm:$0xff]
        %v3349 = vld [vmem:[%s3341 + $0x38] sm:$0xff]
        %s3350 = scalar_lea.vmem %s5, 2
        %v3351 = vld [vmem:[%s3350] sm:$0x3]
        %v3353 = vlaneseq
        %v3354 = vshrl.u32 %v3353, 7
        %v3355 = vsub.s32 0, %v3354
        %v3356 = vrot.slane %v3351, %v3355
        %v3357 = vlaneseq
        %v3358 = vshrl.u32 %v3357, 7
        %v3359 = vsub.s32 1, %v3358
        %v3360 = vrot.slane %v3351, %v3359
        %v3371 = vunpack.c.l.b16 %v3342
        %v3372 = vunpack.c.h.b16 %v3342
        %v3373 = vunpack.c.l.b16 %v3343
        %v3374 = vunpack.c.h.b16 %v3343
        %v3375 = vunpack.c.l.b16 %v3344
        %v3376 = vunpack.c.h.b16 %v3344
        %v3377 = vunpack.c.l.b16 %v3345
        %v3378 = vunpack.c.h.b16 %v3345
        %v3379 = vunpack.c.l.b16 %v3346
        %v3380 = vunpack.c.h.b16 %v3346
        %v3381 = vunpack.c.l.b16 %v3347
        %v3382 = vunpack.c.h.b16 %v3347
        %v3383 = vunpack.c.l.b16 %v3348
        %v3384 = vunpack.c.h.b16 %v3348
        %v3385 = vunpack.c.l.b16 %v3349
        %v3386 = vunpack.c.h.b16 %v3349
        %v3387 = vpack.c.b16 %v3373, %v3371
        %v3388 = vpack.c.b16 %v3374, %v3372
        %v3389 = vpack.c.b16 %v3377, %v3375
        %v3390 = vpack.c.b16 %v3378, %v3376
        %v3391 = vpack.c.b16 %v3381, %v3379
        %v3392 = vpack.c.b16 %v3382, %v3380
        %v3393 = vpack.c.b16 %v3385, %v3383
        %v3394 = vpack.c.b16 %v3386, %v3384
        %v3404 = vsel %vm485, %v3333, 0
        %v3407 = vsel %vm485, %v3334, 0
        %v3410 = vsel %vm485, %v3335, 0
        %v3413 = vsel %vm485, %v3336, 0
        %v3416 = vsel %vm485, %v3337, 0
        %v3419 = vsel %vm485, %v3338, 0
        %v3422 = vsel %vm485, %v3339, 0
        %v3425 = vsel %vm485, %v3340, 0
        %3427 = vmatprep.subr.bf16.mxu0 %v3388
        %3428 = vmatpush1.bf16.msra.mxu0 %v3387
        %3429 = vmatprep.subr.bf16.mxu0 %v3390
        %3430 = vmatpush1.bf16.msra.mxu0 %v3389
        %3431 = vmatprep.subr.bf16.mxu0 %v3392
        %3432 = vmatpush1.bf16.msra.mxu0 %v3391
        %3433 = vmatprep.subr.bf16.mxu0 %v3394
        %3434 = vmatpush1.bf16.msra.mxu0 %v3393
        %3435 = vmatprep.subr.bf16.mxu0 0
        %3436 = vmatpush1.bf16.msra.mxu0 0
        %3437 = vmatprep.subr.bf16.mxu0 0
        %3438 = vmatpush1.bf16.msra.mxu0 0
        %3439 = vmatprep.subr.bf16.mxu0 0
        %3440 = vmatpush1.bf16.msra.mxu0 0
        %3441 = vmatprep.subr.bf16.mxu0 0
        %3442 = vmatpush1.bf16.msra.mxu0 0
        %3443 = vmatprep.subr.bf16.mxu0 0
        %3444 = vmatpush1.bf16.msra.mxu0 0
        %3445 = vmatprep.subr.bf16.mxu0 0
        %3446 = vmatpush1.bf16.msra.mxu0 0
        %3447 = vmatprep.subr.bf16.mxu0 0
        %3448 = vmatpush1.bf16.msra.mxu0 0
        %3449 = vmatprep.subr.bf16.mxu0 0
        %3450 = vmatpush1.bf16.msra.mxu0 0
        %3451 = vmatprep.subr.bf16.mxu0 0
        %3452 = vmatpush1.bf16.msra.mxu0 0
        %3453 = vmatprep.subr.bf16.mxu0 0
        %3454 = vmatpush1.bf16.msra.mxu0 0
        %3455 = vmatprep.subr.bf16.mxu0 0
        %3456 = vmatpush1.bf16.msra.mxu0 0
        %3457 = vmatprep.subr.bf16.mxu0 0
        %3458 = vmatpush1.bf16.msra.mxu0 0
        %3459 = vmatprep.mubr.bf16.mxu0 0
        %3460 = vmatmul.mubr.bf16.gmra.mrb[0].mxu0 %v3404
        %v3461 = vpop.f32.mrb[0].mxu0
        %v3462 = vadd.f32 %v3356, %v3461
        %v3463 = vpop.f32.mrb[0].mxu0
        %v3464 = vadd.f32 %v3360, %v3463
        %v3465 = vpop.f32.mrb[0].mxu0
        %v3466 = vadd.f32 %v3356, %v3465
        %v3467 = vpop.f32.mrb[0].mxu0
        %v3468 = vadd.f32 %v3360, %v3467
        %3469 = vmatprep.mubr.bf16.mxu0 0
        %3470 = vmatmul.mubr.bf16.gmra.mrb[0].mxu0 %v3407
        %v3471 = vpop.f32.mrb[0].mxu0
        %v3472 = vadd.f32 %v3356, %v3471
        %v3473 = vpop.f32.mrb[0].mxu0
        %v3474 = vadd.f32 %v3360, %v3473
        %v3475 = vpop.f32.mrb[0].mxu0
        %v3476 = vadd.f32 %v3356, %v3475
        %v3477 = vpop.f32.mrb[0].mxu0
        %v3478 = vadd.f32 %v3360, %v3477
        %3479 = vmatprep.mubr.bf16.mxu0 0
        %3480 = vmatmul.mubr.bf16.gmra.mrb[0].mxu0 %v3410
        %v3481 = vpop.f32.mrb[0].mxu0
        %v3482 = vadd.f32 %v3356, %v3481
        %v3483 = vpop.f32.mrb[0].mxu0
        %v3484 = vadd.f32 %v3360, %v3483
        %v3485 = vpop.f32.mrb[0].mxu0
        %v3486 = vadd.f32 %v3356, %v3485
        %v3487 = vpop.f32.mrb[0].mxu0
        %v3488 = vadd.f32 %v3360, %v3487
        %3489 = vmatprep.mubr.bf16.mxu0 0
        %3490 = vmatmul.mubr.bf16.gmra.mrb[0].mxu0 %v3413
        %v3491 = vpop.f32.mrb[0].mxu0
        %v3492 = vadd.f32 %v3356, %v3491
        %v3493 = vpop.f32.mrb[0].mxu0
        %v3494 = vadd.f32 %v3360, %v3493
        %v3495 = vpop.f32.mrb[0].mxu0
        %v3496 = vadd.f32 %v3356, %v3495
        %v3497 = vpop.f32.mrb[0].mxu0
        %v3498 = vadd.f32 %v3360, %v3497
        %3499 = vmatprep.mubr.bf16.mxu0 0
        %3500 = vmatmul.mubr.bf16.gmra.mrb[0].mxu0 %v3416
        %v3501 = vpop.f32.mrb[0].mxu0
        %v3502 = vadd.f32 %v3356, %v3501
        %v3503 = vpop.f32.mrb[0].mxu0
        %v3504 = vadd.f32 %v3360, %v3503
        %v3505 = vpop.f32.mrb[0].mxu0
        %v3506 = vadd.f32 %v3356, %v3505
        %v3507 = vpop.f32.mrb[0].mxu0
        %v3508 = vadd.f32 %v3360, %v3507
        %3509 = vmatprep.mubr.bf16.mxu0 0
        %3510 = vmatmul.mubr.bf16.gmra.mrb[0].mxu0 %v3419
        %v3511 = vpop.f32.mrb[0].mxu0
        %v3512 = vadd.f32 %v3356, %v3511
        %v3513 = vpop.f32.mrb[0].mxu0
        %v3514 = vadd.f32 %v3360, %v3513
        %v3515 = vpop.f32.mrb[0].mxu0
        %v3516 = vadd.f32 %v3356, %v3515
        %v3517 = vpop.f32.mrb[0].mxu0
        %v3518 = vadd.f32 %v3360, %v3517
        %3519 = vmatprep.mubr.bf16.mxu0 0
        %3520 = vmatmul.mubr.bf16.gmra.mrb[0].mxu0 %v3422
        %v3521 = vpop.f32.mrb[0].mxu0
        %v3522 = vadd.f32 %v3356, %v3521
        %v3523 = vpop.f32.mrb[0].mxu0
        %v3524 = vadd.f32 %v3360, %v3523
        %v3525 = vpop.f32.mrb[0].mxu0
        %v3526 = vadd.f32 %v3356, %v3525
        %v3527 = vpop.f32.mrb[0].mxu0
        %v3528 = vadd.f32 %v3360, %v3527
        %3529 = vmatprep.mubr.bf16.mxu0 0
        %3530 = vmatmul.mubr.bf16.gmra.mrb[0].mxu0 %v3425
        %v3531 = vpop.f32.mrb[0].mxu0
        %v3532 = vadd.f32 %v3356, %v3531
        %v3533 = vpop.f32.mrb[0].mxu0
        %v3534 = vadd.f32 %v3360, %v3533
        %v3535 = vpop.f32.mrb[0].mxu0
        %v3536 = vadd.f32 %v3356, %v3535
        %v3537 = vpop.f32.mrb[0].mxu0
        %v3538 = vadd.f32 %v3360, %v3537
        %3539 = vdwg.mxu0
        %v3540 = vpack.c.bf16 %v3466, %v3462
        %v3541 = vpack.c.bf16 %v3468, %v3464
        %v3542 = vpack.c.bf16 %v3476, %v3472
        %v3543 = vpack.c.bf16 %v3478, %v3474
        %v3544 = vpack.c.bf16 %v3486, %v3482
        %v3545 = vpack.c.bf16 %v3488, %v3484
        %v3546 = vpack.c.bf16 %v3496, %v3492
        %v3547 = vpack.c.bf16 %v3498, %v3494
        %v3548 = vpack.c.bf16 %v3506, %v3502
        %v3549 = vpack.c.bf16 %v3508, %v3504
        %v3550 = vpack.c.bf16 %v3516, %v3512
        %v3551 = vpack.c.bf16 %v3518, %v3514
        %v3552 = vpack.c.bf16 %v3526, %v3522
        %v3553 = vpack.c.bf16 %v3528, %v3524
        %v3554 = vpack.c.bf16 %v3536, %v3532
        %v3555 = vpack.c.bf16 %v3538, %v3534
        %v3556 = vld [vmem:[%s1] sm:$0xff]
        %v3557 = vld [vmem:[%s1 + $0x8] sm:$0xff]
        %v3558 = vld [vmem:[%s1 + $0x10] sm:$0xff]
        %v3559 = vld [vmem:[%s1 + $0x18] sm:$0xff]
        %v3560 = vld [vmem:[%s1 + $0x20] sm:$0xff]
        %v3561 = vld [vmem:[%s1 + $0x28] sm:$0xff]
        %v3562 = vld [vmem:[%s1 + $0x30] sm:$0xff]
        %v3563 = vld [vmem:[%s1 + $0x38] sm:$0xff]
        %v3564 = vld [vmem:[%s1 + $0x40] sm:$0xff]
        %v3565 = vld [vmem:[%s1 + $0x48] sm:$0xff]
        %v3566 = vld [vmem:[%s1 + $0x50] sm:$0xff]
        %v3567 = vld [vmem:[%s1 + $0x58] sm:$0xff]
        %v3568 = vld [vmem:[%s1 + $0x60] sm:$0xff]
        %v3569 = vld [vmem:[%s1 + $0x68] sm:$0xff]
        %v3570 = vld [vmem:[%s1 + $0x70] sm:$0xff]
        %v3571 = vld [vmem:[%s1 + $0x78] sm:$0xff]
        %3580 = vrot.lane.b32.xlu0 %v3540, 64
        %v3581 = vpop.permute.xlu0 %3580
        %3582 = vrot.lane.b32.xlu0 %v3542, 64
        %v3583 = vpop.permute.xlu0 %3582
        %3584 = vrot.lane.b32.xlu0 %v3544, 64
        %v3585 = vpop.permute.xlu0 %3584
        %3586 = vrot.lane.b32.xlu0 %v3546, 64
        %v3587 = vpop.permute.xlu0 %3586
        %3588 = vrot.lane.b32.xlu0 %v3548, 64
        %v3589 = vpop.permute.xlu0 %3588
        %3590 = vrot.lane.b32.xlu0 %v3550, 64
        %v3591 = vpop.permute.xlu0 %3590
        %3592 = vrot.lane.b32.xlu0 %v3552, 64
        %v3593 = vpop.permute.xlu0 %3592
        %3594 = vrot.lane.b32.xlu0 %v3554, 64
        %v3595 = vpop.permute.xlu0 %3594
        %v3597 = vsel %vm984, %v3540, 0
        %v3600 = vsel %vm984, %v3542, 0
        %v3603 = vsel %vm984, %v3544, 0
        %v3606 = vsel %vm984, %v3546, 0
        %v3609 = vsel %vm984, %v3548, 0
        %v3612 = vsel %vm984, %v3550, 0
        %v3615 = vsel %vm984, %v3552, 0
        %v3618 = vsel %vm984, %v3554, 0
        %v3621 = vsel %vm984, %v3581, 0
        %v3624 = vsel %vm984, %v3583, 0
        %v3627 = vsel %vm984, %v3585, 0
        %v3630 = vsel %vm984, %v3587, 0
        %v3633 = vsel %vm984, %v3589, 0
        %v3636 = vsel %vm984, %v3591, 0
        %v3639 = vsel %vm984, %v3593, 0
        %v3642 = vsel %vm984, %v3595, 0
        %3644 = vmatprep.subr.bf16.mxu0 0
        %3645 = vmatpush1.bf16.xpose.msra.mxu0 %v3621
        %3646 = vmatprep.subr.bf16.mxu0 0
        %3647 = vmatpush1.bf16.xpose.msra.mxu0 %v3624
        %3648 = vmatprep.subr.bf16.mxu0 0
        %3649 = vmatpush1.bf16.xpose.msra.mxu0 %v3627
        %3650 = vmatprep.subr.bf16.mxu0 0
        %3651 = vmatpush1.bf16.xpose.msra.mxu0 %v3630
        %3652 = vmatprep.subr.bf16.mxu0 0
        %3653 = vmatpush1.bf16.xpose.msra.mxu0 %v3633
        %3654 = vmatprep.subr.bf16.mxu0 0
        %3655 = vmatpush1.bf16.xpose.msra.mxu0 %v3636
        %3656 = vmatprep.subr.bf16.mxu0 0
        %3657 = vmatpush1.bf16.xpose.msra.mxu0 %v3639
        %3658 = vmatprep.subr.bf16.mxu0 0
        %3659 = vmatpush1.bf16.xpose.msra.mxu0 %v3642
        %3660 = vmatprep.subr.bf16.mxu0 0
        %3661 = vmatpush1.bf16.xpose.msra.mxu0 0
        %3662 = vmatprep.subr.bf16.mxu0 0
        %3663 = vmatpush1.bf16.xpose.msra.mxu0 0
        %3664 = vmatprep.subr.bf16.mxu0 0
        %3665 = vmatpush1.bf16.xpose.msra.mxu0 0
        %3666 = vmatprep.subr.bf16.mxu0 0
        %3667 = vmatpush1.bf16.xpose.msra.mxu0 0
        %3668 = vmatprep.subr.bf16.mxu0 0
        %3669 = vmatpush1.bf16.xpose.msra.mxu0 0
        %3670 = vmatprep.subr.bf16.mxu0 0
        %3671 = vmatpush1.bf16.xpose.msra.mxu0 0
        %3672 = vmatprep.subr.bf16.mxu0 0
        %3673 = vmatpush1.bf16.xpose.msra.mxu0 0
        %3674 = vmatprep.subr.bf16.mxu0 0
        %3675 = vmatpush1.bf16.xpose.msra.mxu0 0
        %3676 = vmatprep.mubr.bf16.mxu0 0
        %3677 = vmatmul.mubr.bf16.gmra.mrb[0].mxu0 %v3597
        %v3678 = vpop.f32.mrb[0].mxu0
        %v3679 = vadd.f32 %v3556, %v3678
        %v3680 = vpop.f32.mrb[0].mxu0
        %v3681 = vpop.f32.mrb[0].mxu0
        %v3682 = vadd.f32 %v3557, %v3681
        %v3683 = vpop.f32.mrb[0].mxu0
        %3684 = vmatprep.mubr.bf16.mxu0 0
        %3685 = vmatmul.mubr.bf16.gmra.mrb[0].mxu0 %v3600
        %v3686 = vpop.f32.mrb[0].mxu0
        %v3687 = vadd.f32 %v3558, %v3686
        %v3688 = vpop.f32.mrb[0].mxu0
        %v3689 = vpop.f32.mrb[0].mxu0
        %v3690 = vadd.f32 %v3559, %v3689
        %v3691 = vpop.f32.mrb[0].mxu0
        %3692 = vmatprep.mubr.bf16.mxu0 0
        %3693 = vmatmul.mubr.bf16.gmra.mrb[0].mxu0 %v3603
        %v3694 = vpop.f32.mrb[0].mxu0
        %v3695 = vadd.f32 %v3560, %v3694
        %v3696 = vpop.f32.mrb[0].mxu0
        %v3697 = vpop.f32.mrb[0].mxu0
        %v3698 = vadd.f32 %v3561, %v3697
        %v3699 = vpop.f32.mrb[0].mxu0
        %3700 = vmatprep.mubr.bf16.mxu0 0
        %3701 = vmatmul.mubr.bf16.gmra.mrb[0].mxu0 %v3606
        %v3702 = vpop.f32.mrb[0].mxu0
        %v3703 = vadd.f32 %v3562, %v3702
        %v3704 = vpop.f32.mrb[0].mxu0
        %v3705 = vpop.f32.mrb[0].mxu0
        %v3706 = vadd.f32 %v3563, %v3705
        %v3707 = vpop.f32.mrb[0].mxu0
        %3708 = vmatprep.mubr.bf16.mxu0 0
        %3709 = vmatmul.mubr.bf16.gmra.mrb[0].mxu0 %v3609
        %v3710 = vpop.f32.mrb[0].mxu0
        %v3711 = vadd.f32 %v3564, %v3710
        %v3712 = vpop.f32.mrb[0].mxu0
        %v3713 = vpop.f32.mrb[0].mxu0
        %v3714 = vadd.f32 %v3565, %v3713
        %v3715 = vpop.f32.mrb[0].mxu0
        %3716 = vmatprep.mubr.bf16.mxu0 0
        %3717 = vmatmul.mubr.bf16.gmra.mrb[0].mxu0 %v3612
        %v3718 = vpop.f32.mrb[0].mxu0
        %v3719 = vadd.f32 %v3566, %v3718
        %v3720 = vpop.f32.mrb[0].mxu0
        %v3721 = vpop.f32.mrb[0].mxu0
        %v3722 = vadd.f32 %v3567, %v3721
        %v3723 = vpop.f32.mrb[0].mxu0
        %3724 = vmatprep.mubr.bf16.mxu0 0
        %3725 = vmatmul.mubr.bf16.gmra.mrb[0].mxu0 %v3615
        %v3726 = vpop.f32.mrb[0].mxu0
        %v3727 = vadd.f32 %v3568, %v3726
        %v3728 = vpop.f32.mrb[0].mxu0
        %v3729 = vpop.f32.mrb[0].mxu0
        %v3730 = vadd.f32 %v3569, %v3729
        %v3731 = vpop.f32.mrb[0].mxu0
        %3732 = vmatprep.mubr.bf16.mxu0 0
        %3733 = vmatmul.mubr.bf16.gmra.mrb[0].mxu0 %v3618
        %v3734 = vpop.f32.mrb[0].mxu0
        %v3735 = vadd.f32 %v3570, %v3734
        %v3736 = vpop.f32.mrb[0].mxu0
        %v3737 = vpop.f32.mrb[0].mxu0
        %v3738 = vadd.f32 %v3571, %v3737
        %v3739 = vpop.f32.mrb[0].mxu0
        %3740 = vdwg.mxu0
        %3741 = vmax.xlane.f32.xlu0 %v3679
        %v3742 = vpop.xlane.xlu0 %3741
        %3743 = vmax.xlane.f32.xlu0 %v3682
        %v3744 = vpop.xlane.xlu0 %3743
        %3745 = vmax.xlane.f32.xlu0 %v3687
        %v3746 = vpop.xlane.xlu0 %3745
        %3747 = vmax.xlane.f32.xlu0 %v3690
        %v3748 = vpop.xlane.xlu0 %3747
        %3749 = vmax.xlane.f32.xlu0 %v3695
        %v3750 = vpop.xlane.xlu0 %3749
        %3751 = vmax.xlane.f32.xlu0 %v3698
        %v3752 = vpop.xlane.xlu0 %3751
        %3753 = vmax.xlane.f32.xlu0 %v3703
        %v3754 = vpop.xlane.xlu0 %3753
        %3755 = vmax.xlane.f32.xlu0 %v3706
        %v3756 = vpop.xlane.xlu0 %3755
        %3757 = vmax.xlane.f32.xlu0 %v3711
        %v3758 = vpop.xlane.xlu0 %3757
        %3759 = vmax.xlane.f32.xlu0 %v3714
        %v3760 = vpop.xlane.xlu0 %3759
        %3761 = vmax.xlane.f32.xlu0 %v3719
        %v3762 = vpop.xlane.xlu0 %3761
        %3763 = vmax.xlane.f32.xlu0 %v3722
        %v3764 = vpop.xlane.xlu0 %3763
        %3765 = vmax.xlane.f32.xlu0 %v3727
        %v3766 = vpop.xlane.xlu0 %3765
        %3767 = vmax.xlane.f32.xlu0 %v3730
        %v3768 = vpop.xlane.xlu0 %3767
        %3769 = vmax.xlane.f32.xlu0 %v3735
        %v3770 = vpop.xlane.xlu0 %3769
        %3771 = vmax.xlane.f32.xlu0 %v3738
        %v3772 = vpop.xlane.xlu0 %3771
        %v3773 = vsub.f32 %v3679, %v3742
        %v3774 = vsub.f32 %v3682, %v3744
        %v3775 = vsub.f32 %v3687, %v3746
        %v3776 = vsub.f32 %v3690, %v3748
        %v3777 = vsub.f32 %v3695, %v3750
        %v3778 = vsub.f32 %v3698, %v3752
        %v3779 = vsub.f32 %v3703, %v3754
        %v3780 = vsub.f32 %v3706, %v3756
        %v3781 = vsub.f32 %v3711, %v3758
        %v3782 = vsub.f32 %v3714, %v3760
        %v3783 = vsub.f32 %v3719, %v3762
        %v3784 = vsub.f32 %v3722, %v3764
        %v3785 = vsub.f32 %v3727, %v3766
        %v3786 = vsub.f32 %v3730, %v3768
        %v3787 = vsub.f32 %v3735, %v3770
        %v3788 = vsub.f32 %v3738, %v3772
        %v3789 = vmul.f32 %v3773, 1.442695
        %v3790 = vpow.pop %v3789
        %v3791 = vmul.f32 %v3774, 1.442695
        %v3792 = vpow.pop %v3791
        %v3793 = vmul.f32 %v3775, 1.442695
        %v3794 = vpow.pop %v3793
        %v3795 = vmul.f32 %v3776, 1.442695
        %v3796 = vpow.pop %v3795
        %v3797 = vmul.f32 %v3777, 1.442695
        %v3798 = vpow.pop %v3797
        %v3799 = vmul.f32 %v3778, 1.442695
        %v3800 = vpow.pop %v3799
        %v3801 = vmul.f32 %v3779, 1.442695
        %v3802 = vpow.pop %v3801
        %v3803 = vmul.f32 %v3780, 1.442695
        %v3804 = vpow.pop %v3803
        %v3805 = vmul.f32 %v3781, 1.442695
        %v3806 = vpow.pop %v3805
        %v3807 = vmul.f32 %v3782, 1.442695
        %v3808 = vpow.pop %v3807
        %v3809 = vmul.f32 %v3783, 1.442695
        %v3810 = vpow.pop %v3809
        %v3811 = vmul.f32 %v3784, 1.442695
        %v3812 = vpow.pop %v3811
        %v3813 = vmul.f32 %v3785, 1.442695
        %v3814 = vpow.pop %v3813
        %v3815 = vmul.f32 %v3786, 1.442695
        %v3816 = vpow.pop %v3815
        %v3817 = vmul.f32 %v3787, 1.442695
        %v3818 = vpow.pop %v3817
        %v3819 = vmul.f32 %v3788, 1.442695
        %v3820 = vpow.pop %v3819
        %3821 = vadd.xlane.f32.xlu0 %v3790
        %v3822 = vpop.xlane.xlu0 %3821
        %3823 = vadd.xlane.f32.xlu0 %v3792
        %v3824 = vpop.xlane.xlu0 %3823
        %3825 = vadd.xlane.f32.xlu0 %v3794
        %v3826 = vpop.xlane.xlu0 %3825
        %3827 = vadd.xlane.f32.xlu0 %v3796
        %v3828 = vpop.xlane.xlu0 %3827
        %3829 = vadd.xlane.f32.xlu0 %v3798
        %v3830 = vpop.xlane.xlu0 %3829
        %3831 = vadd.xlane.f32.xlu0 %v3800
        %v3832 = vpop.xlane.xlu0 %3831
        %3833 = vadd.xlane.f32.xlu0 %v3802
        %v3834 = vpop.xlane.xlu0 %3833
        %3835 = vadd.xlane.f32.xlu0 %v3804
        %v3836 = vpop.xlane.xlu0 %3835
        %3837 = vadd.xlane.f32.xlu0 %v3806
        %v3838 = vpop.xlane.xlu0 %3837
        %3839 = vadd.xlane.f32.xlu0 %v3808
        %v3840 = vpop.xlane.xlu0 %3839
        %3841 = vadd.xlane.f32.xlu0 %v3810
        %v3842 = vpop.xlane.xlu0 %3841
        %3843 = vadd.xlane.f32.xlu0 %v3812
        %v3844 = vpop.xlane.xlu0 %3843
        %3845 = vadd.xlane.f32.xlu0 %v3814
        %v3846 = vpop.xlane.xlu0 %3845
        %3847 = vadd.xlane.f32.xlu0 %v3816
        %v3848 = vpop.xlane.xlu0 %3847
        %3849 = vadd.xlane.f32.xlu0 %v3818
        %v3850 = vpop.xlane.xlu0 %3849
        %3851 = vadd.xlane.f32.xlu0 %v3820
        %v3852 = vpop.xlane.xlu0 %3851
        %v3853 = vrcp.pop %v3822
        %v3854 = vrcp.pop %v3824
        %v3855 = vrcp.pop %v3826
        %v3856 = vrcp.pop %v3828
        %v3857 = vrcp.pop %v3830
        %v3858 = vrcp.pop %v3832
        %v3859 = vrcp.pop %v3834
        %v3860 = vrcp.pop %v3836
        %v3861 = vrcp.pop %v3838
        %v3862 = vrcp.pop %v3840
        %v3863 = vrcp.pop %v3842
        %v3864 = vrcp.pop %v3844
        %v3865 = vrcp.pop %v3846
        %v3866 = vrcp.pop %v3848
        %v3867 = vrcp.pop %v3850
        %v3868 = vrcp.pop %v3852
        %v3869 = vmul.f32 %v3790, %v3853
        %v3870 = vmul.f32 %v3792, %v3854
        %v3871 = vmul.f32 %v3794, %v3855
        %v3872 = vmul.f32 %v3796, %v3856
        %v3873 = vmul.f32 %v3798, %v3857
        %v3874 = vmul.f32 %v3800, %v3858
        %v3875 = vmul.f32 %v3802, %v3859
        %v3876 = vmul.f32 %v3804, %v3860
        %v3877 = vmul.f32 %v3806, %v3861
        %v3878 = vmul.f32 %v3808, %v3862
        %v3879 = vmul.f32 %v3810, %v3863
        %v3880 = vmul.f32 %v3812, %v3864
        %v3881 = vmul.f32 %v3814, %v3865
        %v3882 = vmul.f32 %v3816, %v3866
        %v3883 = vmul.f32 %v3818, %v3867
        %v3884 = vmul.f32 %v3820, %v3868
        %v3885 = vpack.c.bf16 %v3870, %v3869
        %v3886 = vpack.c.bf16 %v3872, %v3871
        %v3887 = vpack.c.bf16 %v3874, %v3873
        %v3888 = vpack.c.bf16 %v3876, %v3875
        %v3889 = vpack.c.bf16 %v3878, %v3877
        %v3890 = vpack.c.bf16 %v3880, %v3879
        %v3891 = vpack.c.bf16 %v3882, %v3881
        %v3892 = vpack.c.bf16 %v3884, %v3883
        %3893 = vmatprep.subr.bf16.mxu0 0
        %3894 = vmatpush1.bf16.msra.mxu0 %v3541
        %3895 = vmatprep.subr.bf16.mxu0 0
        %3896 = vmatpush1.bf16.msra.mxu0 %v3543
        %3897 = vmatprep.subr.bf16.mxu0 0
        %3898 = vmatpush1.bf16.msra.mxu0 %v3545
        %3899 = vmatprep.subr.bf16.mxu0 0
        %3900 = vmatpush1.bf16.msra.mxu0 %v3547
        %3901 = vmatprep.subr.bf16.mxu0 0
        %3902 = vmatpush1.bf16.msra.mxu0 %v3549
        %3903 = vmatprep.subr.bf16.mxu0 0
        %3904 = vmatpush1.bf16.msra.mxu0 %v3551
        %3905 = vmatprep.subr.bf16.mxu0 0
        %3906 = vmatpush1.bf16.msra.mxu0 %v3553
        %3907 = vmatprep.subr.bf16.mxu0 0
        %3908 = vmatpush1.bf16.msra.mxu0 %v3555
        %3909 = vmatprep.subr.bf16.mxu0 0
        %3910 = vmatpush1.bf16.msra.mxu0 0
        %3911 = vmatprep.subr.bf16.mxu0 0
        %3912 = vmatpush1.bf16.msra.mxu0 0
        %3913 = vmatprep.subr.bf16.mxu0 0
        %3914 = vmatpush1.bf16.msra.mxu0 0
        %3915 = vmatprep.subr.bf16.mxu0 0
        %3916 = vmatpush1.bf16.msra.mxu0 0
        %3917 = vmatprep.subr.bf16.mxu0 0
        %3918 = vmatpush1.bf16.msra.mxu0 0
        %3919 = vmatprep.subr.bf16.mxu0 0
        %3920 = vmatpush1.bf16.msra.mxu0 0
        %3921 = vmatprep.subr.bf16.mxu0 0
        %3922 = vmatpush1.bf16.msra.mxu0 0
        %3923 = vmatprep.subr.bf16.mxu0 0
        %3924 = vmatpush1.bf16.msra.mxu0 0
        %3925 = vmatprep.mubr.bf16.mxu0 0
        %3926 = vmatmul.mubr.bf16.gmra.mrb[0].mxu0 %v3885
        %v3927 = vpop.f32.mrb[0].mxu0
        %v3928 = vadd.f32 0.0, %v3927
        %v3929 = vpop.f32.mrb[0].mxu0
        %v3930 = vpop.f32.mrb[0].mxu0
        %v3931 = vadd.f32 0.0, %v3930
        %v3932 = vpop.f32.mrb[0].mxu0
        %3933 = vmatprep.mubr.bf16.mxu0 0
        %3934 = vmatmul.mubr.bf16.gmra.mrb[0].mxu0 %v3886
        %v3935 = vpop.f32.mrb[0].mxu0
        %v3936 = vadd.f32 0.0, %v3935
        %v3937 = vpop.f32.mrb[0].mxu0
        %v3938 = vpop.f32.mrb[0].mxu0
        %v3939 = vadd.f32 0.0, %v3938
        %v3940 = vpop.f32.mrb[0].mxu0
        %3941 = vmatprep.mubr.bf16.mxu0 0
        %3942 = vmatmul.mubr.bf16.gmra.mrb[0].mxu0 %v3887
        %v3943 = vpop.f32.mrb[0].mxu0
        %v3944 = vadd.f32 0.0, %v3943
        %v3945 = vpop.f32.mrb[0].mxu0
        %v3946 = vpop.f32.mrb[0].mxu0
        %v3947 = vadd.f32 0.0, %v3946
        %v3948 = vpop.f32.mrb[0].mxu0
        %3949 = vmatprep.mubr.bf16.mxu0 0
        %3950 = vmatmul.mubr.bf16.gmra.mrb[0].mxu0 %v3888
        %v3951 = vpop.f32.mrb[0].mxu0
        %v3952 = vadd.f32 0.0, %v3951
        %v3953 = vpop.f32.mrb[0].mxu0
        %v3954 = vpop.f32.mrb[0].mxu0
        %v3955 = vadd.f32 0.0, %v3954
        %v3956 = vpop.f32.mrb[0].mxu0
        %3957 = vmatprep.mubr.bf16.mxu0 0
        %3958 = vmatmul.mubr.bf16.gmra.mrb[0].mxu0 %v3889
        %v3959 = vpop.f32.mrb[0].mxu0
        %v3960 = vadd.f32 0.0, %v3959
        %v3961 = vpop.f32.mrb[0].mxu0
        %v3962 = vpop.f32.mrb[0].mxu0
        %v3963 = vadd.f32 0.0, %v3962
        %v3964 = vpop.f32.mrb[0].mxu0
        %3965 = vmatprep.mubr.bf16.mxu0 0
        %3966 = vmatmul.mubr.bf16.gmra.mrb[0].mxu0 %v3890
        %v3967 = vpop.f32.mrb[0].mxu0
        %v3968 = vadd.f32 0.0, %v3967
        %v3969 = vpop.f32.mrb[0].mxu0
        %v3970 = vpop.f32.mrb[0].mxu0
        %v3971 = vadd.f32 0.0, %v3970
        %v3972 = vpop.f32.mrb[0].mxu0
        %3973 = vmatprep.mubr.bf16.mxu0 0
        %3974 = vmatmul.mubr.bf16.gmra.mrb[0].mxu0 %v3891
        %v3975 = vpop.f32.mrb[0].mxu0
        %v3976 = vadd.f32 0.0, %v3975
        %v3977 = vpop.f32.mrb[0].mxu0
        %v3978 = vpop.f32.mrb[0].mxu0
        %v3979 = vadd.f32 0.0, %v3978
        %v3980 = vpop.f32.mrb[0].mxu0
        %3981 = vmatprep.mubr.bf16.mxu0 0
        %3982 = vmatmul.mubr.bf16.gmra.mrb[0].mxu0 %v3892
        %v3983 = vpop.f32.mrb[0].mxu0
        %v3984 = vadd.f32 0.0, %v3983
        %v3985 = vpop.f32.mrb[0].mxu0
        %v3986 = vpop.f32.mrb[0].mxu0
        %v3987 = vadd.f32 0.0, %v3986
        %v3988 = vpop.f32.mrb[0].mxu0
        %3989 = vdwg.mxu0
        %3990 = vrot.lane.b32.xlu0 %v3540, 96
        %v3991 = vpop.permute.xlu0 %3990
        %3992 = vrot.lane.b32.xlu0 %v3542, 96
        %v3993 = vpop.permute.xlu0 %3992
        %3994 = vrot.lane.b32.xlu0 %v3544, 96
        %v3995 = vpop.permute.xlu0 %3994
        %3996 = vrot.lane.b32.xlu0 %v3546, 96
        %v3997 = vpop.permute.xlu0 %3996
        %3998 = vrot.lane.b32.xlu0 %v3548, 96
        %v3999 = vpop.permute.xlu0 %3998
        %4000 = vrot.lane.b32.xlu0 %v3550, 96
        %v4001 = vpop.permute.xlu0 %4000
        %4002 = vrot.lane.b32.xlu0 %v3552, 96
        %v4003 = vpop.permute.xlu0 %4002
        %4004 = vrot.lane.b32.xlu0 %v3554, 96
        %v4005 = vpop.permute.xlu0 %4004
        %4006 = vrot.lane.b32.xlu0 %v3540, 32
        %v4007 = vpop.permute.xlu0 %4006
        %4008 = vrot.lane.b32.xlu0 %v3542, 32
        %v4009 = vpop.permute.xlu0 %4008
        %4010 = vrot.lane.b32.xlu0 %v3544, 32
        %v4011 = vpop.permute.xlu0 %4010
        %4012 = vrot.lane.b32.xlu0 %v3546, 32
        %v4013 = vpop.permute.xlu0 %4012
        %4014 = vrot.lane.b32.xlu0 %v3548, 32
        %v4015 = vpop.permute.xlu0 %4014
        %4016 = vrot.lane.b32.xlu0 %v3550, 32
        %v4017 = vpop.permute.xlu0 %4016
        %4018 = vrot.lane.b32.xlu0 %v3552, 32
        %v4019 = vpop.permute.xlu0 %4018
        %4020 = vrot.lane.b32.xlu0 %v3554, 32
        %v4021 = vpop.permute.xlu0 %4020
        %v4023 = vsel %vm984, %v3991, 0
        %v4026 = vsel %vm984, %v3993, 0
        %v4029 = vsel %vm984, %v3995, 0
        %v4032 = vsel %vm984, %v3997, 0
        %v4035 = vsel %vm984, %v3999, 0
        %v4038 = vsel %vm984, %v4001, 0
        %v4041 = vsel %vm984, %v4003, 0
        %v4044 = vsel %vm984, %v4005, 0
        %v4047 = vsel %vm984, %v4007, 0
        %v4050 = vsel %vm984, %v4009, 0
        %v4053 = vsel %vm984, %v4011, 0
        %v4056 = vsel %vm984, %v4013, 0
        %v4059 = vsel %vm984, %v4015, 0
        %v4062 = vsel %vm984, %v4017, 0
        %v4065 = vsel %vm984, %v4019, 0
        %v4068 = vsel %vm984, %v4021, 0
        %4070 = vmatprep.subr.bf16.mxu0 0
        %4071 = vmatpush1.bf16.xpose.msra.mxu0 %v4047
        %4072 = vmatprep.subr.bf16.mxu0 0
        %4073 = vmatpush1.bf16.xpose.msra.mxu0 %v4050
        %4074 = vmatprep.subr.bf16.mxu0 0
        %4075 = vmatpush1.bf16.xpose.msra.mxu0 %v4053
        %4076 = vmatprep.subr.bf16.mxu0 0
        %4077 = vmatpush1.bf16.xpose.msra.mxu0 %v4056
        %4078 = vmatprep.subr.bf16.mxu0 0
        %4079 = vmatpush1.bf16.xpose.msra.mxu0 %v4059
        %4080 = vmatprep.subr.bf16.mxu0 0
        %4081 = vmatpush1.bf16.xpose.msra.mxu0 %v4062
        %4082 = vmatprep.subr.bf16.mxu0 0
        %4083 = vmatpush1.bf16.xpose.msra.mxu0 %v4065
        %4084 = vmatprep.subr.bf16.mxu0 0
        %4085 = vmatpush1.bf16.xpose.msra.mxu0 %v4068
        %4086 = vmatprep.subr.bf16.mxu0 0
        %4087 = vmatpush1.bf16.xpose.msra.mxu0 0
        %4088 = vmatprep.subr.bf16.mxu0 0
        %4089 = vmatpush1.bf16.xpose.msra.mxu0 0
        %4090 = vmatprep.subr.bf16.mxu0 0
        %4091 = vmatpush1.bf16.xpose.msra.mxu0 0
        %4092 = vmatprep.subr.bf16.mxu0 0
        %4093 = vmatpush1.bf16.xpose.msra.mxu0 0
        %4094 = vmatprep.subr.bf16.mxu0 0
        %4095 = vmatpush1.bf16.xpose.msra.mxu0 0
        %4096 = vmatprep.subr.bf16.mxu0 0
        %4097 = vmatpush1.bf16.xpose.msra.mxu0 0
        %4098 = vmatprep.subr.bf16.mxu0 0
        %4099 = vmatpush1.bf16.xpose.msra.mxu0 0
        %4100 = vmatprep.subr.bf16.mxu0 0
        %4101 = vmatpush1.bf16.xpose.msra.mxu0 0
        %4102 = vmatprep.mubr.bf16.mxu0 0
        %4103 = vmatmul.mubr.bf16.gmra.mrb[0].mxu0 %v4023
        %v4104 = vpop.f32.mrb[0].mxu0
        %v4105 = vadd.f32 %v3556, %v4104
        %v4106 = vpop.f32.mrb[0].mxu0
        %v4107 = vpop.f32.mrb[0].mxu0
        %v4108 = vadd.f32 %v3557, %v4107
        %v4109 = vpop.f32.mrb[0].mxu0
        %4110 = vmatprep.mubr.bf16.mxu0 0
        %4111 = vmatmul.mubr.bf16.gmra.mrb[0].mxu0 %v4026
        %v4112 = vpop.f32.mrb[0].mxu0
        %v4113 = vadd.f32 %v3558, %v4112
        %v4114 = vpop.f32.mrb[0].mxu0
        %v4115 = vpop.f32.mrb[0].mxu0
        %v4116 = vadd.f32 %v3559, %v4115
        %v4117 = vpop.f32.mrb[0].mxu0
        %4118 = vmatprep.mubr.bf16.mxu0 0
        %4119 = vmatmul.mubr.bf16.gmra.mrb[0].mxu0 %v4029
        %v4120 = vpop.f32.mrb[0].mxu0
        %v4121 = vadd.f32 %v3560, %v4120
        %v4122 = vpop.f32.mrb[0].mxu0
        %v4123 = vpop.f32.mrb[0].mxu0
        %v4124 = vadd.f32 %v3561, %v4123
        %v4125 = vpop.f32.mrb[0].mxu0
        %4126 = vmatprep.mubr.bf16.mxu0 0
        %4127 = vmatmul.mubr.bf16.gmra.mrb[0].mxu0 %v4032
        %v4128 = vpop.f32.mrb[0].mxu0
        %v4129 = vadd.f32 %v3562, %v4128
        %v4130 = vpop.f32.mrb[0].mxu0
        %v4131 = vpop.f32.mrb[0].mxu0
        %v4132 = vadd.f32 %v3563, %v4131
        %v4133 = vpop.f32.mrb[0].mxu0
        %4134 = vmatprep.mubr.bf16.mxu0 0
        %4135 = vmatmul.mubr.bf16.gmra.mrb[0].mxu0 %v4035
        %v4136 = vpop.f32.mrb[0].mxu0
        %v4137 = vadd.f32 %v3564, %v4136
        %v4138 = vpop.f32.mrb[0].mxu0
        %v4139 = vpop.f32.mrb[0].mxu0
        %v4140 = vadd.f32 %v3565, %v4139
        %v4141 = vpop.f32.mrb[0].mxu0
        %4142 = vmatprep.mubr.bf16.mxu0 0
        %4143 = vmatmul.mubr.bf16.gmra.mrb[0].mxu0 %v4038
        %v4144 = vpop.f32.mrb[0].mxu0
        %v4145 = vadd.f32 %v3566, %v4144
        %v4146 = vpop.f32.mrb[0].mxu0
        %v4147 = vpop.f32.mrb[0].mxu0
        %v4148 = vadd.f32 %v3567, %v4147
        %v4149 = vpop.f32.mrb[0].mxu0
        %4150 = vmatprep.mubr.bf16.mxu0 0
        %4151 = vmatmul.mubr.bf16.gmra.mrb[0].mxu0 %v4041
        %v4152 = vpop.f32.mrb[0].mxu0
        %v4153 = vadd.f32 %v3568, %v4152
        %v4154 = vpop.f32.mrb[0].mxu0
        %v4155 = vpop.f32.mrb[0].mxu0
        %v4156 = vadd.f32 %v3569, %v4155
        %v4157 = vpop.f32.mrb[0].mxu0
        %4158 = vmatprep.mubr.bf16.mxu0 0
        %4159 = vmatmul.mubr.bf16.gmra.mrb[0].mxu0 %v4044
        %v4160 = vpop.f32.mrb[0].mxu0
        %v4161 = vadd.f32 %v3570, %v4160
        %v4162 = vpop.f32.mrb[0].mxu0
        %v4163 = vpop.f32.mrb[0].mxu0
        %v4164 = vadd.f32 %v3571, %v4163
        %v4165 = vpop.f32.mrb[0].mxu0
        %4166 = vdwg.mxu0
        %4167 = vmax.xlane.f32.xlu0 %v4105
        %v4168 = vpop.xlane.xlu0 %4167
        %4169 = vmax.xlane.f32.xlu0 %v4108
        %v4170 = vpop.xlane.xlu0 %4169
        %4171 = vmax.xlane.f32.xlu0 %v4113
        %v4172 = vpop.xlane.xlu0 %4171
        %4173 = vmax.xlane.f32.xlu0 %v4116
        %v4174 = vpop.xlane.xlu0 %4173
        %4175 = vmax.xlane.f32.xlu0 %v4121
        %v4176 = vpop.xlane.xlu0 %4175
        %4177 = vmax.xlane.f32.xlu0 %v4124
        %v4178 = vpop.xlane.xlu0 %4177
        %4179 = vmax.xlane.f32.xlu0 %v4129
        %v4180 = vpop.xlane.xlu0 %4179
        %4181 = vmax.xlane.f32.xlu0 %v4132
        %v4182 = vpop.xlane.xlu0 %4181
        %4183 = vmax.xlane.f32.xlu0 %v4137
        %v4184 = vpop.xlane.xlu0 %4183
        %4185 = vmax.xlane.f32.xlu0 %v4140
        %v4186 = vpop.xlane.xlu0 %4185
        %4187 = vmax.xlane.f32.xlu0 %v4145
        %v4188 = vpop.xlane.xlu0 %4187
        %4189 = vmax.xlane.f32.xlu0 %v4148
        %v4190 = vpop.xlane.xlu0 %4189
        %4191 = vmax.xlane.f32.xlu0 %v4153
        %v4192 = vpop.xlane.xlu0 %4191
        %4193 = vmax.xlane.f32.xlu0 %v4156
        %v4194 = vpop.xlane.xlu0 %4193
        %4195 = vmax.xlane.f32.xlu0 %v4161
        %v4196 = vpop.xlane.xlu0 %4195
        %4197 = vmax.xlane.f32.xlu0 %v4164
        %v4198 = vpop.xlane.xlu0 %4197
        %v4199 = vsub.f32 %v4105, %v4168
        %v4200 = vsub.f32 %v4108, %v4170
        %v4201 = vsub.f32 %v4113, %v4172
        %v4202 = vsub.f32 %v4116, %v4174
        %v4203 = vsub.f32 %v4121, %v4176
        %v4204 = vsub.f32 %v4124, %v4178
        %v4205 = vsub.f32 %v4129, %v4180
        %v4206 = vsub.f32 %v4132, %v4182
        %v4207 = vsub.f32 %v4137, %v4184
        %v4208 = vsub.f32 %v4140, %v4186
        %v4209 = vsub.f32 %v4145, %v4188
        %v4210 = vsub.f32 %v4148, %v4190
        %v4211 = vsub.f32 %v4153, %v4192
        %v4212 = vsub.f32 %v4156, %v4194
        %v4213 = vsub.f32 %v4161, %v4196
        %v4214 = vsub.f32 %v4164, %v4198
        %v4215 = vmul.f32 %v4199, 1.442695
        %v4216 = vpow.pop %v4215
        %v4217 = vmul.f32 %v4200, 1.442695
        %v4218 = vpow.pop %v4217
        %v4219 = vmul.f32 %v4201, 1.442695
        %v4220 = vpow.pop %v4219
        %v4221 = vmul.f32 %v4202, 1.442695
        %v4222 = vpow.pop %v4221
        %v4223 = vmul.f32 %v4203, 1.442695
        %v4224 = vpow.pop %v4223
        %v4225 = vmul.f32 %v4204, 1.442695
        %v4226 = vpow.pop %v4225
        %v4227 = vmul.f32 %v4205, 1.442695
        %v4228 = vpow.pop %v4227
        %v4229 = vmul.f32 %v4206, 1.442695
        %v4230 = vpow.pop %v4229
        %v4231 = vmul.f32 %v4207, 1.442695
        %v4232 = vpow.pop %v4231
        %v4233 = vmul.f32 %v4208, 1.442695
        %v4234 = vpow.pop %v4233
        %v4235 = vmul.f32 %v4209, 1.442695
        %v4236 = vpow.pop %v4235
        %v4237 = vmul.f32 %v4210, 1.442695
        %v4238 = vpow.pop %v4237
        %v4239 = vmul.f32 %v4211, 1.442695
        %v4240 = vpow.pop %v4239
        %v4241 = vmul.f32 %v4212, 1.442695
        %v4242 = vpow.pop %v4241
        %v4243 = vmul.f32 %v4213, 1.442695
        %v4244 = vpow.pop %v4243
        %v4245 = vmul.f32 %v4214, 1.442695
        %v4246 = vpow.pop %v4245
        %4247 = vadd.xlane.f32.xlu0 %v4216
        %v4248 = vpop.xlane.xlu0 %4247
        %4249 = vadd.xlane.f32.xlu0 %v4218
        %v4250 = vpop.xlane.xlu0 %4249
        %4251 = vadd.xlane.f32.xlu0 %v4220
        %v4252 = vpop.xlane.xlu0 %4251
        %4253 = vadd.xlane.f32.xlu0 %v4222
        %v4254 = vpop.xlane.xlu0 %4253
        %4255 = vadd.xlane.f32.xlu0 %v4224
        %v4256 = vpop.xlane.xlu0 %4255
        %4257 = vadd.xlane.f32.xlu0 %v4226
        %v4258 = vpop.xlane.xlu0 %4257
        %4259 = vadd.xlane.f32.xlu0 %v4228
        %v4260 = vpop.xlane.xlu0 %4259
        %4261 = vadd.xlane.f32.xlu0 %v4230
        %v4262 = vpop.xlane.xlu0 %4261
        %4263 = vadd.xlane.f32.xlu0 %v4232
        %v4264 = vpop.xlane.xlu0 %4263
        %4265 = vadd.xlane.f32.xlu0 %v4234
        %v4266 = vpop.xlane.xlu0 %4265
        %4267 = vadd.xlane.f32.xlu0 %v4236
        %v4268 = vpop.xlane.xlu0 %4267
        %4269 = vadd.xlane.f32.xlu0 %v4238
        %v4270 = vpop.xlane.xlu0 %4269
        %4271 = vadd.xlane.f32.xlu0 %v4240
        %v4272 = vpop.xlane.xlu0 %4271
        %4273 = vadd.xlane.f32.xlu0 %v4242
        %v4274 = vpop.xlane.xlu0 %4273
        %4275 = vadd.xlane.f32.xlu0 %v4244
        %v4276 = vpop.xlane.xlu0 %4275
        %4277 = vadd.xlane.f32.xlu0 %v4246
        %v4278 = vpop.xlane.xlu0 %4277
        %v4279 = vrcp.pop %v4248
        %v4280 = vrcp.pop %v4250
        %v4281 = vrcp.pop %v4252
        %v4282 = vrcp.pop %v4254
        %v4283 = vrcp.pop %v4256
        %v4284 = vrcp.pop %v4258
        %v4285 = vrcp.pop %v4260
        %v4286 = vrcp.pop %v4262
        %v4287 = vrcp.pop %v4264
        %v4288 = vrcp.pop %v4266
        %v4289 = vrcp.pop %v4268
        %v4290 = vrcp.pop %v4270
        %v4291 = vrcp.pop %v4272
        %v4292 = vrcp.pop %v4274
        %v4293 = vrcp.pop %v4276
        %v4294 = vrcp.pop %v4278
        %v4295 = vmul.f32 %v4216, %v4279
        %v4296 = vmul.f32 %v4218, %v4280
        %v4297 = vmul.f32 %v4220, %v4281
        %v4298 = vmul.f32 %v4222, %v4282
        %v4299 = vmul.f32 %v4224, %v4283
        %v4300 = vmul.f32 %v4226, %v4284
        %v4301 = vmul.f32 %v4228, %v4285
        %v4302 = vmul.f32 %v4230, %v4286
        %v4303 = vmul.f32 %v4232, %v4287
        %v4304 = vmul.f32 %v4234, %v4288
        %v4305 = vmul.f32 %v4236, %v4289
        %v4306 = vmul.f32 %v4238, %v4290
        %v4307 = vmul.f32 %v4240, %v4291
        %v4308 = vmul.f32 %v4242, %v4292
        %v4309 = vmul.f32 %v4244, %v4293
        %v4310 = vmul.f32 %v4246, %v4294
        %v4311 = vpack.c.bf16 %v4296, %v4295
        %v4312 = vpack.c.bf16 %v4298, %v4297
        %v4313 = vpack.c.bf16 %v4300, %v4299
        %v4314 = vpack.c.bf16 %v4302, %v4301
        %v4315 = vpack.c.bf16 %v4304, %v4303
        %v4316 = vpack.c.bf16 %v4306, %v4305
        %v4317 = vpack.c.bf16 %v4308, %v4307
        %v4318 = vpack.c.bf16 %v4310, %v4309
        %4327 = vrot.lane.b32.xlu0 %v3541, 96
        %v4328 = vpop.permute.xlu0 %4327
        %4329 = vrot.lane.b32.xlu0 %v3543, 96
        %v4330 = vpop.permute.xlu0 %4329
        %4331 = vrot.lane.b32.xlu0 %v3545, 96
        %v4332 = vpop.permute.xlu0 %4331
        %4333 = vrot.lane.b32.xlu0 %v3547, 96
        %v4334 = vpop.permute.xlu0 %4333
        %4335 = vrot.lane.b32.xlu0 %v3549, 96
        %v4336 = vpop.permute.xlu0 %4335
        %4337 = vrot.lane.b32.xlu0 %v3551, 96
        %v4338 = vpop.permute.xlu0 %4337
        %4339 = vrot.lane.b32.xlu0 %v3553, 96
        %v4340 = vpop.permute.xlu0 %4339
        %4341 = vrot.lane.b32.xlu0 %v3555, 96
        %v4342 = vpop.permute.xlu0 %4341
        %4351 = vmatprep.subr.bf16.mxu0 0
        %4352 = vmatpush1.bf16.msra.mxu0 %v4328
        %4353 = vmatprep.subr.bf16.mxu0 0
        %4354 = vmatpush1.bf16.msra.mxu0 %v4330
        %4355 = vmatprep.subr.bf16.mxu0 0
        %4356 = vmatpush1.bf16.msra.mxu0 %v4332
        %4357 = vmatprep.subr.bf16.mxu0 0
        %4358 = vmatpush1.bf16.msra.mxu0 %v4334
        %4359 = vmatprep.subr.bf16.mxu0 0
        %4360 = vmatpush1.bf16.msra.mxu0 %v4336
        %4361 = vmatprep.subr.bf16.mxu0 0
        %4362 = vmatpush1.bf16.msra.mxu0 %v4338
        %4363 = vmatprep.subr.bf16.mxu0 0
        %4364 = vmatpush1.bf16.msra.mxu0 %v4340
        %4365 = vmatprep.subr.bf16.mxu0 0
        %4366 = vmatpush1.bf16.msra.mxu0 %v4342
        %4367 = vmatprep.subr.bf16.mxu0 0
        %4368 = vmatpush1.bf16.msra.mxu0 0
        %4369 = vmatprep.subr.bf16.mxu0 0
        %4370 = vmatpush1.bf16.msra.mxu0 0
        %4371 = vmatprep.subr.bf16.mxu0 0
        %4372 = vmatpush1.bf16.msra.mxu0 0
        %4373 = vmatprep.subr.bf16.mxu0 0
        %4374 = vmatpush1.bf16.msra.mxu0 0
        %4375 = vmatprep.subr.bf16.mxu0 0
        %4376 = vmatpush1.bf16.msra.mxu0 0
        %4377 = vmatprep.subr.bf16.mxu0 0
        %4378 = vmatpush1.bf16.msra.mxu0 0
        %4379 = vmatprep.subr.bf16.mxu0 0
        %4380 = vmatpush1.bf16.msra.mxu0 0
        %4381 = vmatprep.subr.bf16.mxu0 0
        %4382 = vmatpush1.bf16.msra.mxu0 0
        %4383 = vmatprep.mubr.bf16.mxu0 0
        %4384 = vmatmul.mubr.bf16.gmra.mrb[0].mxu0 %v4311
        %v4385 = vpop.f32.mrb[0].mxu0
        %v4386 = vadd.f32 0.0, %v4385
        %v4387 = vpop.f32.mrb[0].mxu0
        %v4388 = vpop.f32.mrb[0].mxu0
        %v4389 = vadd.f32 0.0, %v4388
        %v4390 = vpop.f32.mrb[0].mxu0
        %4391 = vmatprep.mubr.bf16.mxu0 0
        %4392 = vmatmul.mubr.bf16.gmra.mrb[0].mxu0 %v4312
        %v4393 = vpop.f32.mrb[0].mxu0
        %v4394 = vadd.f32 0.0, %v4393
        %v4395 = vpop.f32.mrb[0].mxu0
        %v4396 = vpop.f32.mrb[0].mxu0
        %v4397 = vadd.f32 0.0, %v4396
        %v4398 = vpop.f32.mrb[0].mxu0
        %4399 = vmatprep.mubr.bf16.mxu0 0
        %4400 = vmatmul.mubr.bf16.gmra.mrb[0].mxu0 %v4313
        %v4401 = vpop.f32.mrb[0].mxu0
        %v4402 = vadd.f32 0.0, %v4401
        %v4403 = vpop.f32.mrb[0].mxu0
        %v4404 = vpop.f32.mrb[0].mxu0
        %v4405 = vadd.f32 0.0, %v4404
        %v4406 = vpop.f32.mrb[0].mxu0
        %4407 = vmatprep.mubr.bf16.mxu0 0
        %4408 = vmatmul.mubr.bf16.gmra.mrb[0].mxu0 %v4314
        %v4409 = vpop.f32.mrb[0].mxu0
        %v4410 = vadd.f32 0.0, %v4409
        %v4411 = vpop.f32.mrb[0].mxu0
        %v4412 = vpop.f32.mrb[0].mxu0
        %v4413 = vadd.f32 0.0, %v4412
        %v4414 = vpop.f32.mrb[0].mxu0
        %4415 = vmatprep.mubr.bf16.mxu0 0
        %4416 = vmatmul.mubr.bf16.gmra.mrb[0].mxu0 %v4315
        %v4417 = vpop.f32.mrb[0].mxu0
        %v4418 = vadd.f32 0.0, %v4417
        %v4419 = vpop.f32.mrb[0].mxu0
        %v4420 = vpop.f32.mrb[0].mxu0
        %v4421 = vadd.f32 0.0, %v4420
        %v4422 = vpop.f32.mrb[0].mxu0
        %4423 = vmatprep.mubr.bf16.mxu0 0
        %4424 = vmatmul.mubr.bf16.gmra.mrb[0].mxu0 %v4316
        %v4425 = vpop.f32.mrb[0].mxu0
        %v4426 = vadd.f32 0.0, %v4425
        %v4427 = vpop.f32.mrb[0].mxu0
        %v4428 = vpop.f32.mrb[0].mxu0
        %v4429 = vadd.f32 0.0, %v4428
        %v4430 = vpop.f32.mrb[0].mxu0
        %4431 = vmatprep.mubr.bf16.mxu0 0
        %4432 = vmatmul.mubr.bf16.gmra.mrb[0].mxu0 %v4317
        %v4433 = vpop.f32.mrb[0].mxu0
        %v4434 = vadd.f32 0.0, %v4433
        %v4435 = vpop.f32.mrb[0].mxu0
        %v4436 = vpop.f32.mrb[0].mxu0
        %v4437 = vadd.f32 0.0, %v4436
        %v4438 = vpop.f32.mrb[0].mxu0
        %4439 = vmatprep.mubr.bf16.mxu0 0
        %4440 = vmatmul.mubr.bf16.gmra.mrb[0].mxu0 %v4318
        %v4441 = vpop.f32.mrb[0].mxu0
        %v4442 = vadd.f32 0.0, %v4441
        %v4443 = vpop.f32.mrb[0].mxu0
        %v4444 = vpop.f32.mrb[0].mxu0
        %v4445 = vadd.f32 0.0, %v4444
        %v4446 = vpop.f32.mrb[0].mxu0
        %4447 = vdwg.mxu0
        %4464 = vrot.lane.b32.xlu0 %v4386, 32
        %v4465 = vpop.permute.xlu0 %4464
        %4466 = vrot.lane.b32.xlu0 %v4389, 32
        %v4467 = vpop.permute.xlu0 %4466
        %4468 = vrot.lane.b32.xlu0 %v4394, 32
        %v4469 = vpop.permute.xlu0 %4468
        %4470 = vrot.lane.b32.xlu0 %v4397, 32
        %v4471 = vpop.permute.xlu0 %4470
        %4472 = vrot.lane.b32.xlu0 %v4402, 32
        %v4473 = vpop.permute.xlu0 %4472
        %4474 = vrot.lane.b32.xlu0 %v4405, 32
        %v4475 = vpop.permute.xlu0 %4474
        %4476 = vrot.lane.b32.xlu0 %v4410, 32
        %v4477 = vpop.permute.xlu0 %4476
        %4478 = vrot.lane.b32.xlu0 %v4413, 32
        %v4479 = vpop.permute.xlu0 %4478
        %4480 = vrot.lane.b32.xlu0 %v4418, 32
        %v4481 = vpop.permute.xlu0 %4480
        %4482 = vrot.lane.b32.xlu0 %v4421, 32
        %v4483 = vpop.permute.xlu0 %4482
        %4484 = vrot.lane.b32.xlu0 %v4426, 32
        %v4485 = vpop.permute.xlu0 %4484
        %4486 = vrot.lane.b32.xlu0 %v4429, 32
        %v4487 = vpop.permute.xlu0 %4486
        %4488 = vrot.lane.b32.xlu0 %v4434, 32
        %v4489 = vpop.permute.xlu0 %4488
        %4490 = vrot.lane.b32.xlu0 %v4437, 32
        %v4491 = vpop.permute.xlu0 %4490
        %4492 = vrot.lane.b32.xlu0 %v4442, 32
        %v4493 = vpop.permute.xlu0 %4492
        %4494 = vrot.lane.b32.xlu0 %v4445, 32
        %v4495 = vpop.permute.xlu0 %4494
        %v4512 = vsel %vm984, %v3928, %v4465
        %v4513 = vsel %vm984, %v3931, %v4467
        %v4514 = vsel %vm984, %v3936, %v4469
        %v4515 = vsel %vm984, %v3939, %v4471
        %v4516 = vsel %vm984, %v3944, %v4473
        %v4517 = vsel %vm984, %v3947, %v4475
        %v4518 = vsel %vm984, %v3952, %v4477
        %v4519 = vsel %vm984, %v3955, %v4479
        %v4520 = vsel %vm984, %v3960, %v4481
        %v4521 = vsel %vm984, %v3963, %v4483
        %v4522 = vsel %vm984, %v3968, %v4485
        %v4523 = vsel %vm984, %v3971, %v4487
        %v4524 = vsel %vm984, %v3976, %v4489
        %v4525 = vsel %vm984, %v3979, %v4491
        %v4526 = vsel %vm984, %v3984, %v4493
        %v4527 = vsel %vm984, %v3987, %v4495
        %v4528 = vpack.c.bf16 %v4513, %v4512
        %v4529 = vpack.c.bf16 %v4515, %v4514
        %v4530 = vpack.c.bf16 %v4517, %v4516
        %v4531 = vpack.c.bf16 %v4519, %v4518
        %v4532 = vpack.c.bf16 %v4521, %v4520
        %v4533 = vpack.c.bf16 %v4523, %v4522
        %v4534 = vpack.c.bf16 %v4525, %v4524
        %v4535 = vpack.c.bf16 %v4527, %v4526
        %s4536 = scalar_lea.vmem %s6, 32
        %v4537 = vld [vmem:[%s4536] sm:$0xf]
        %v4538 = vld [vmem:[%s4536 + $0x4] sm:$0xf]
        %v4539 = vld [vmem:[%s4536 + $0x8] sm:$0xf]
        %v4540 = vld [vmem:[%s4536 + $0xc] sm:$0xf]
        %v4541 = vld [vmem:[%s4536 + $0x10] sm:$0xf]
        %v4542 = vld [vmem:[%s4536 + $0x14] sm:$0xf]
        %v4543 = vld [vmem:[%s4536 + $0x18] sm:$0xf]
        %v4544 = vld [vmem:[%s4536 + $0x1c] sm:$0xf]
        %s4545 = scalar_lea.vmem %s7, 1
        %v4546 = vld [vmem:[%s4545] sm:$0x1]
        %v4548 = vlaneseq
        %v4549 = vshrl.u32 %v4548, 7
        %v4550 = vsub.s32 0, %v4549
        %v4551 = vrot.slane %v4546, %v4550
        %v4561 = vunpack.c.l.b16 %v4537
        %v4562 = vunpack.c.l.b16 %v4538
        %v4563 = vunpack.c.l.b16 %v4539
        %v4564 = vunpack.c.l.b16 %v4540
        %v4565 = vunpack.c.l.b16 %v4541
        %v4566 = vunpack.c.l.b16 %v4542
        %v4567 = vunpack.c.l.b16 %v4543
        %v4568 = vunpack.c.l.b16 %v4544
        %v4569 = vpack.c.b16 %v4562, %v4561
        %v4570 = vpack.c.b16 %v4564, %v4563
        %v4571 = vpack.c.b16 %v4566, %v4565
        %v4572 = vpack.c.b16 %v4568, %v4567
        %v4578 = vsel %vm485, %v4528, 0
        %v4581 = vsel %vm485, %v4529, 0
        %v4584 = vsel %vm485, %v4530, 0
        %v4587 = vsel %vm485, %v4531, 0
        %v4590 = vsel %vm485, %v4532, 0
        %v4593 = vsel %vm485, %v4533, 0
        %v4596 = vsel %vm485, %v4534, 0
        %v4599 = vsel %vm485, %v4535, 0
        %4601 = vmatprep.subr.bf16.mxu0 0
        %4602 = vmatpush1.bf16.msra.mxu0 %v4569
        %4603 = vmatprep.subr.bf16.mxu0 0
        %4604 = vmatpush1.bf16.msra.mxu0 %v4570
        %4605 = vmatprep.subr.bf16.mxu0 0
        %4606 = vmatpush1.bf16.msra.mxu0 %v4571
        %4607 = vmatprep.subr.bf16.mxu0 0
        %4608 = vmatpush1.bf16.msra.mxu0 %v4572
        %4609 = vmatprep.subr.bf16.mxu0 0
        %4610 = vmatpush1.bf16.msra.mxu0 0
        %4611 = vmatprep.subr.bf16.mxu0 0
        %4612 = vmatpush1.bf16.msra.mxu0 0
        %4613 = vmatprep.subr.bf16.mxu0 0
        %4614 = vmatpush1.bf16.msra.mxu0 0
        %4615 = vmatprep.subr.bf16.mxu0 0
        %4616 = vmatpush1.bf16.msra.mxu0 0
        %4617 = vmatprep.subr.bf16.mxu0 0
        %4618 = vmatpush1.bf16.msra.mxu0 0
        %4619 = vmatprep.subr.bf16.mxu0 0
        %4620 = vmatpush1.bf16.msra.mxu0 0
        %4621 = vmatprep.subr.bf16.mxu0 0
        %4622 = vmatpush1.bf16.msra.mxu0 0
        %4623 = vmatprep.subr.bf16.mxu0 0
        %4624 = vmatpush1.bf16.msra.mxu0 0
        %4625 = vmatprep.subr.bf16.mxu0 0
        %4626 = vmatpush1.bf16.msra.mxu0 0
        %4627 = vmatprep.subr.bf16.mxu0 0
        %4628 = vmatpush1.bf16.msra.mxu0 0
        %4629 = vmatprep.subr.bf16.mxu0 0
        %4630 = vmatpush1.bf16.msra.mxu0 0
        %4631 = vmatprep.subr.bf16.mxu0 0
        %4632 = vmatpush1.bf16.msra.mxu0 0
        %4633 = vmatprep.mubr.bf16.mxu0 0
        %4634 = vmatmul.mubr.bf16.gmra.mrb[0].mxu0 %v4578
        %v4635 = vpop.f32.mrb[0].mxu0
        %v4636 = vadd.f32 %v4551, %v4635
        %v4637 = vpop.f32.mrb[0].mxu0
        %v4638 = vpop.f32.mrb[0].mxu0
        %v4639 = vadd.f32 %v4551, %v4638
        %v4640 = vpop.f32.mrb[0].mxu0
        %4641 = vmatprep.mubr.bf16.mxu0 0
        %4642 = vmatmul.mubr.bf16.gmra.mrb[0].mxu0 %v4581
        %v4643 = vpop.f32.mrb[0].mxu0
        %v4644 = vadd.f32 %v4551, %v4643
        %v4645 = vpop.f32.mrb[0].mxu0
        %v4646 = vpop.f32.mrb[0].mxu0
        %v4647 = vadd.f32 %v4551, %v4646
        %v4648 = vpop.f32.mrb[0].mxu0
        %4649 = vmatprep.mubr.bf16.mxu0 0
        %4650 = vmatmul.mubr.bf16.gmra.mrb[0].mxu0 %v4584
        %v4651 = vpop.f32.mrb[0].mxu0
        %v4652 = vadd.f32 %v4551, %v4651
        %v4653 = vpop.f32.mrb[0].mxu0
        %v4654 = vpop.f32.mrb[0].mxu0
        %v4655 = vadd.f32 %v4551, %v4654
        %v4656 = vpop.f32.mrb[0].mxu0
        %4657 = vmatprep.mubr.bf16.mxu0 0
        %4658 = vmatmul.mubr.bf16.gmra.mrb[0].mxu0 %v4587
        %v4659 = vpop.f32.mrb[0].mxu0
        %v4660 = vadd.f32 %v4551, %v4659
        %v4661 = vpop.f32.mrb[0].mxu0
        %v4662 = vpop.f32.mrb[0].mxu0
        %v4663 = vadd.f32 %v4551, %v4662
        %v4664 = vpop.f32.mrb[0].mxu0
        %4665 = vmatprep.mubr.bf16.mxu0 0
        %4666 = vmatmul.mubr.bf16.gmra.mrb[0].mxu0 %v4590
        %v4667 = vpop.f32.mrb[0].mxu0
        %v4668 = vadd.f32 %v4551, %v4667
        %v4669 = vpop.f32.mrb[0].mxu0
        %v4670 = vpop.f32.mrb[0].mxu0
        %v4671 = vadd.f32 %v4551, %v4670
        %v4672 = vpop.f32.mrb[0].mxu0
        %4673 = vmatprep.mubr.bf16.mxu0 0
        %4674 = vmatmul.mubr.bf16.gmra.mrb[0].mxu0 %v4593
        %v4675 = vpop.f32.mrb[0].mxu0
        %v4676 = vadd.f32 %v4551, %v4675
        %v4677 = vpop.f32.mrb[0].mxu0
        %v4678 = vpop.f32.mrb[0].mxu0
        %v4679 = vadd.f32 %v4551, %v4678
        %v4680 = vpop.f32.mrb[0].mxu0
        %4681 = vmatprep.mubr.bf16.mxu0 0
        %4682 = vmatmul.mubr.bf16.gmra.mrb[0].mxu0 %v4596
        %v4683 = vpop.f32.mrb[0].mxu0
        %v4684 = vadd.f32 %v4551, %v4683
        %v4685 = vpop.f32.mrb[0].mxu0
        %v4686 = vpop.f32.mrb[0].mxu0
        %v4687 = vadd.f32 %v4551, %v4686
        %v4688 = vpop.f32.mrb[0].mxu0
        %4689 = vmatprep.mubr.bf16.mxu0 0
        %4690 = vmatmul.mubr.bf16.gmra.mrb[0].mxu0 %v4599
        %v4691 = vpop.f32.mrb[0].mxu0
        %v4692 = vadd.f32 %v4551, %v4691
        %v4693 = vpop.f32.mrb[0].mxu0
        %v4694 = vpop.f32.mrb[0].mxu0
        %v4695 = vadd.f32 %v4551, %v4694
        %v4696 = vpop.f32.mrb[0].mxu0
        %4697 = vdwg.mxu0
        %v4698 = vadd.f32 %v4636, %v3317
        %v4699 = vadd.f32 %v4639, %v3318
        %v4700 = vadd.f32 %v4644, %v3319
        %v4701 = vadd.f32 %v4647, %v3320
        %v4702 = vadd.f32 %v4652, %v3321
        %v4703 = vadd.f32 %v4655, %v3322
        %v4704 = vadd.f32 %v4660, %v3323
        %v4705 = vadd.f32 %v4663, %v3324
        %v4706 = vadd.f32 %v4668, %v3325
        %v4707 = vadd.f32 %v4671, %v3326
        %v4708 = vadd.f32 %v4676, %v3327
        %v4709 = vadd.f32 %v4679, %v3328
        %v4710 = vadd.f32 %v4684, %v3329
        %v4711 = vadd.f32 %v4687, %v3330
        %v4712 = vadd.f32 %v4692, %v3331
        %v4713 = vadd.f32 %v4695, %v3332
        %s4714 = scalar_lea.vmem %s8, 1
        %v4715 = vld [vmem:[%s4714] sm:$0x1]
        %s4716 = scalar_lea.vmem %s9, 1
        %v4717 = vld [vmem:[%s4716] sm:$0x1]
        %v4718 = vsel %vm485, %v4698, 0.0
        %4719 = vadd.xlane.f32.xlu0 %v4718
        %v4720 = vpop.xlane.xlu0 %4719
        %v4721 = vsel %vm485, %v4699, 0.0
        %4722 = vadd.xlane.f32.xlu0 %v4721
        %v4723 = vpop.xlane.xlu0 %4722
        %v4724 = vsel %vm485, %v4700, 0.0
        %4725 = vadd.xlane.f32.xlu0 %v4724
        %v4726 = vpop.xlane.xlu0 %4725
        %v4727 = vsel %vm485, %v4701, 0.0
        %4728 = vadd.xlane.f32.xlu0 %v4727
        %v4729 = vpop.xlane.xlu0 %4728
        %v4730 = vsel %vm485, %v4702, 0.0
        %4731 = vadd.xlane.f32.xlu0 %v4730
        %v4732 = vpop.xlane.xlu0 %4731
        %v4733 = vsel %vm485, %v4703, 0.0
        %4734 = vadd.xlane.f32.xlu0 %v4733
        %v4735 = vpop.xlane.xlu0 %4734
        %v4736 = vsel %vm485, %v4704, 0.0
        %4737 = vadd.xlane.f32.xlu0 %v4736
        %v4738 = vpop.xlane.xlu0 %4737
        %v4739 = vsel %vm485, %v4705, 0.0
        %4740 = vadd.xlane.f32.xlu0 %v4739
        %v4741 = vpop.xlane.xlu0 %4740
        %v4742 = vsel %vm485, %v4706, 0.0
        %4743 = vadd.xlane.f32.xlu0 %v4742
        %v4744 = vpop.xlane.xlu0 %4743
        %v4745 = vsel %vm485, %v4707, 0.0
        %4746 = vadd.xlane.f32.xlu0 %v4745
        %v4747 = vpop.xlane.xlu0 %4746
        %v4748 = vsel %vm485, %v4708, 0.0
        %4749 = vadd.xlane.f32.xlu0 %v4748
        %v4750 = vpop.xlane.xlu0 %4749
        %v4751 = vsel %vm485, %v4709, 0.0
        %4752 = vadd.xlane.f32.xlu0 %v4751
        %v4753 = vpop.xlane.xlu0 %4752
        %v4754 = vsel %vm485, %v4710, 0.0
        %4755 = vadd.xlane.f32.xlu0 %v4754
        %v4756 = vpop.xlane.xlu0 %4755
        %v4757 = vsel %vm485, %v4711, 0.0
        %4758 = vadd.xlane.f32.xlu0 %v4757
        %v4759 = vpop.xlane.xlu0 %4758
        %v4760 = vsel %vm485, %v4712, 0.0
        %4761 = vadd.xlane.f32.xlu0 %v4760
        %v4762 = vpop.xlane.xlu0 %4761
        %v4763 = vsel %vm485, %v4713, 0.0
        %4764 = vadd.xlane.f32.xlu0 %v4763
        %v4765 = vpop.xlane.xlu0 %4764
        %v4766 = vmul.f32 %v4720, %v534
        %v4767 = vmul.f32 %v4723, %v534
        %v4768 = vmul.f32 %v4726, %v534
        %v4769 = vmul.f32 %v4729, %v534
        %v4770 = vmul.f32 %v4732, %v534
        %v4771 = vmul.f32 %v4735, %v534
        %v4772 = vmul.f32 %v4738, %v534
        %v4773 = vmul.f32 %v4741, %v534
        %v4774 = vmul.f32 %v4744, %v534
        %v4775 = vmul.f32 %v4747, %v534
        %v4776 = vmul.f32 %v4750, %v534
        %v4777 = vmul.f32 %v4753, %v534
        %v4778 = vmul.f32 %v4756, %v534
        %v4779 = vmul.f32 %v4759, %v534
        %v4780 = vmul.f32 %v4762, %v534
        %v4781 = vmul.f32 %v4765, %v534
        %v4782 = vsub.f32 %v4698, %v4766
        %v4783 = vsub.f32 %v4699, %v4767
        %v4784 = vsub.f32 %v4700, %v4768
        %v4785 = vsub.f32 %v4701, %v4769
        %v4786 = vsub.f32 %v4702, %v4770
        %v4787 = vsub.f32 %v4703, %v4771
        %v4788 = vsub.f32 %v4704, %v4772
        %v4789 = vsub.f32 %v4705, %v4773
        %v4790 = vsub.f32 %v4706, %v4774
        %v4791 = vsub.f32 %v4707, %v4775
        %v4792 = vsub.f32 %v4708, %v4776
        %v4793 = vsub.f32 %v4709, %v4777
        %v4794 = vsub.f32 %v4710, %v4778
        %v4795 = vsub.f32 %v4711, %v4779
        %v4796 = vsub.f32 %v4712, %v4780
        %v4797 = vsub.f32 %v4713, %v4781
        %v4798 = vmul.f32 %v4782, %v4782
        %v4799 = vmul.f32 %v4783, %v4783
        %v4800 = vmul.f32 %v4784, %v4784
        %v4801 = vmul.f32 %v4785, %v4785
        %v4802 = vmul.f32 %v4786, %v4786
        %v4803 = vmul.f32 %v4787, %v4787
        %v4804 = vmul.f32 %v4788, %v4788
        %v4805 = vmul.f32 %v4789, %v4789
        %v4806 = vmul.f32 %v4790, %v4790
        %v4807 = vmul.f32 %v4791, %v4791
        %v4808 = vmul.f32 %v4792, %v4792
        %v4809 = vmul.f32 %v4793, %v4793
        %v4810 = vmul.f32 %v4794, %v4794
        %v4811 = vmul.f32 %v4795, %v4795
        %v4812 = vmul.f32 %v4796, %v4796
        %v4813 = vmul.f32 %v4797, %v4797
        %v4814 = vsel %vm485, %v4798, 0.0
        %4815 = vadd.xlane.f32.xlu0 %v4814
        %v4816 = vpop.xlane.xlu0 %4815
        %v4817 = vsel %vm485, %v4799, 0.0
        %4818 = vadd.xlane.f32.xlu0 %v4817
        %v4819 = vpop.xlane.xlu0 %4818
        %v4820 = vsel %vm485, %v4800, 0.0
        %4821 = vadd.xlane.f32.xlu0 %v4820
        %v4822 = vpop.xlane.xlu0 %4821
        %v4823 = vsel %vm485, %v4801, 0.0
        %4824 = vadd.xlane.f32.xlu0 %v4823
        %v4825 = vpop.xlane.xlu0 %4824
        %v4826 = vsel %vm485, %v4802, 0.0
        %4827 = vadd.xlane.f32.xlu0 %v4826
        %v4828 = vpop.xlane.xlu0 %4827
        %v4829 = vsel %vm485, %v4803, 0.0
        %4830 = vadd.xlane.f32.xlu0 %v4829
        %v4831 = vpop.xlane.xlu0 %4830
        %v4832 = vsel %vm485, %v4804, 0.0
        %4833 = vadd.xlane.f32.xlu0 %v4832
        %v4834 = vpop.xlane.xlu0 %4833
        %v4835 = vsel %vm485, %v4805, 0.0
        %4836 = vadd.xlane.f32.xlu0 %v4835
        %v4837 = vpop.xlane.xlu0 %4836
        %v4838 = vsel %vm485, %v4806, 0.0
        %4839 = vadd.xlane.f32.xlu0 %v4838
        %v4840 = vpop.xlane.xlu0 %4839
        %v4841 = vsel %vm485, %v4807, 0.0
        %4842 = vadd.xlane.f32.xlu0 %v4841
        %v4843 = vpop.xlane.xlu0 %4842
        %v4844 = vsel %vm485, %v4808, 0.0
        %4845 = vadd.xlane.f32.xlu0 %v4844
        %v4846 = vpop.xlane.xlu0 %4845
        %v4847 = vsel %vm485, %v4809, 0.0
        %4848 = vadd.xlane.f32.xlu0 %v4847
        %v4849 = vpop.xlane.xlu0 %4848
        %v4850 = vsel %vm485, %v4810, 0.0
        %4851 = vadd.xlane.f32.xlu0 %v4850
        %v4852 = vpop.xlane.xlu0 %4851
        %v4853 = vsel %vm485, %v4811, 0.0
        %4854 = vadd.xlane.f32.xlu0 %v4853
        %v4855 = vpop.xlane.xlu0 %4854
        %v4856 = vsel %vm485, %v4812, 0.0
        %4857 = vadd.xlane.f32.xlu0 %v4856
        %v4858 = vpop.xlane.xlu0 %4857
        %v4859 = vsel %vm485, %v4813, 0.0
        %4860 = vadd.xlane.f32.xlu0 %v4859
        %v4861 = vpop.xlane.xlu0 %4860
        %v4862 = vmul.f32 %v4816, %v534
        %v4863 = vmul.f32 %v4819, %v534
        %v4864 = vmul.f32 %v4822, %v534
        %v4865 = vmul.f32 %v4825, %v534
        %v4866 = vmul.f32 %v4828, %v534
        %v4867 = vmul.f32 %v4831, %v534
        %v4868 = vmul.f32 %v4834, %v534
        %v4869 = vmul.f32 %v4837, %v534
        %v4870 = vmul.f32 %v4840, %v534
        %v4871 = vmul.f32 %v4843, %v534
        %v4872 = vmul.f32 %v4846, %v534
        %v4873 = vmul.f32 %v4849, %v534
        %v4874 = vmul.f32 %v4852, %v534
        %v4875 = vmul.f32 %v4855, %v534
        %v4876 = vmul.f32 %v4858, %v534
        %v4877 = vmul.f32 %v4861, %v534
        %v4878 = vadd.f32 %v4862, 1e-05
        %v4879 = vadd.f32 %v4863, 1e-05
        %v4880 = vadd.f32 %v4864, 1e-05
        %v4881 = vadd.f32 %v4865, 1e-05
        %v4882 = vadd.f32 %v4866, 1e-05
        %v4883 = vadd.f32 %v4867, 1e-05
        %v4884 = vadd.f32 %v4868, 1e-05
        %v4885 = vadd.f32 %v4869, 1e-05
        %v4886 = vadd.f32 %v4870, 1e-05
        %v4887 = vadd.f32 %v4871, 1e-05
        %v4888 = vadd.f32 %v4872, 1e-05
        %v4889 = vadd.f32 %v4873, 1e-05
        %v4890 = vadd.f32 %v4874, 1e-05
        %v4891 = vadd.f32 %v4875, 1e-05
        %v4892 = vadd.f32 %v4876, 1e-05
        %v4893 = vadd.f32 %v4877, 1e-05
        %v4894 = vrsqrt.pop %v4878
        %v4895 = vrsqrt.pop %v4879
        %v4896 = vrsqrt.pop %v4880
        %v4897 = vrsqrt.pop %v4881
        %v4898 = vrsqrt.pop %v4882
        %v4899 = vrsqrt.pop %v4883
        %v4900 = vrsqrt.pop %v4884
        %v4901 = vrsqrt.pop %v4885
        %v4902 = vrsqrt.pop %v4886
        %v4903 = vrsqrt.pop %v4887
        %v4904 = vrsqrt.pop %v4888
        %v4905 = vrsqrt.pop %v4889
        %v4906 = vrsqrt.pop %v4890
        %v4907 = vrsqrt.pop %v4891
        %v4908 = vrsqrt.pop %v4892
        %v4909 = vrsqrt.pop %v4893
        %v4910 = vmul.f32 %v4782, %v4894
        %v4911 = vmul.f32 %v4783, %v4895
        %v4912 = vmul.f32 %v4784, %v4896
        %v4913 = vmul.f32 %v4785, %v4897
        %v4914 = vmul.f32 %v4786, %v4898
        %v4915 = vmul.f32 %v4787, %v4899
        %v4916 = vmul.f32 %v4788, %v4900
        %v4917 = vmul.f32 %v4789, %v4901
        %v4918 = vmul.f32 %v4790, %v4902
        %v4919 = vmul.f32 %v4791, %v4903
        %v4920 = vmul.f32 %v4792, %v4904
        %v4921 = vmul.f32 %v4793, %v4905
        %v4922 = vmul.f32 %v4794, %v4906
        %v4923 = vmul.f32 %v4795, %v4907
        %v4924 = vmul.f32 %v4796, %v4908
        %v4925 = vmul.f32 %v4797, %v4909
        %v4927 = vlaneseq
        %v4928 = vshrl.u32 %v4927, 7
        %v4929 = vsub.s32 0, %v4928
        %v4930 = vrot.slane %v4715, %v4929
        %v4932 = vmul.f32 %v4910, %v4930
        %v4933 = vmul.f32 %v4911, %v4930
        %v4934 = vmul.f32 %v4912, %v4930
        %v4935 = vmul.f32 %v4913, %v4930
        %v4936 = vmul.f32 %v4914, %v4930
        %v4937 = vmul.f32 %v4915, %v4930
        %v4938 = vmul.f32 %v4916, %v4930
        %v4939 = vmul.f32 %v4917, %v4930
        %v4940 = vmul.f32 %v4918, %v4930
        %v4941 = vmul.f32 %v4919, %v4930
        %v4942 = vmul.f32 %v4920, %v4930
        %v4943 = vmul.f32 %v4921, %v4930
        %v4944 = vmul.f32 %v4922, %v4930
        %v4945 = vmul.f32 %v4923, %v4930
        %v4946 = vmul.f32 %v4924, %v4930
        %v4947 = vmul.f32 %v4925, %v4930
        %v4949 = vlaneseq
        %v4950 = vshrl.u32 %v4949, 7
        %v4951 = vsub.s32 0, %v4950
        %v4952 = vrot.slane %v4717, %v4951
        %v4954 = vadd.f32 %v4932, %v4952
        %v4955 = vadd.f32 %v4933, %v4952
        %v4956 = vadd.f32 %v4934, %v4952
        %v4957 = vadd.f32 %v4935, %v4952
        %v4958 = vadd.f32 %v4936, %v4952
        %v4959 = vadd.f32 %v4937, %v4952
        %v4960 = vadd.f32 %v4938, %v4952
        %v4961 = vadd.f32 %v4939, %v4952
        %v4962 = vadd.f32 %v4940, %v4952
        %v4963 = vadd.f32 %v4941, %v4952
        %v4964 = vadd.f32 %v4942, %v4952
        %v4965 = vadd.f32 %v4943, %v4952
        %v4966 = vadd.f32 %v4944, %v4952
        %v4967 = vadd.f32 %v4945, %v4952
        %v4968 = vadd.f32 %v4946, %v4952
        %v4969 = vadd.f32 %v4947, %v4952
        %v4970 = vpack.c.bf16 %v4955, %v4954
        %v4971 = vpack.c.bf16 %v4957, %v4956
        %v4972 = vpack.c.bf16 %v4959, %v4958
        %v4973 = vpack.c.bf16 %v4961, %v4960
        %v4974 = vpack.c.bf16 %v4963, %v4962
        %v4975 = vpack.c.bf16 %v4965, %v4964
        %v4976 = vpack.c.bf16 %v4967, %v4966
        %v4977 = vpack.c.bf16 %v4969, %v4968
        %s4978 = scalar_lea.vmem %s10, 64
        %v4979 = vld [vmem:[%s4978] sm:$0xff]
        %v4980 = vld [vmem:[%s4978 + $0x8] sm:$0xff]
        %v4981 = vld [vmem:[%s4978 + $0x10] sm:$0xff]
        %v4982 = vld [vmem:[%s4978 + $0x18] sm:$0xff]
        %v4983 = vld [vmem:[%s4978 + $0x20] sm:$0xff]
        %v4984 = vld [vmem:[%s4978 + $0x28] sm:$0xff]
        %v4985 = vld [vmem:[%s4978 + $0x30] sm:$0xff]
        %v4986 = vld [vmem:[%s4978 + $0x38] sm:$0xff]
        %v4995 = vunpack.c.l.b16 %v4979
        %v4996 = vunpack.c.h.b16 %v4979
        %v4997 = vunpack.c.l.b16 %v4980
        %v4998 = vunpack.c.h.b16 %v4980
        %v4999 = vunpack.c.l.b16 %v4981
        %v5000 = vunpack.c.h.b16 %v4981
        %v5001 = vunpack.c.l.b16 %v4982
        %v5002 = vunpack.c.h.b16 %v4982
        %v5003 = vunpack.c.l.b16 %v4983
        %v5004 = vunpack.c.h.b16 %v4983
        %v5005 = vunpack.c.l.b16 %v4984
        %v5006 = vunpack.c.h.b16 %v4984
        %v5007 = vunpack.c.l.b16 %v4985
        %v5008 = vunpack.c.h.b16 %v4985
        %v5009 = vunpack.c.l.b16 %v4986
        %v5010 = vunpack.c.h.b16 %v4986
        %v5011 = vpack.c.b16 %v4997, %v4995
        %v5012 = vpack.c.b16 %v4998, %v4996
        %v5013 = vpack.c.b16 %v5001, %v4999
        %v5014 = vpack.c.b16 %v5002, %v5000
        %v5015 = vpack.c.b16 %v5005, %v5003
        %v5016 = vpack.c.b16 %v5006, %v5004
        %v5017 = vpack.c.b16 %v5009, %v5007
        %v5018 = vpack.c.b16 %v5010, %v5008
        %v5028 = vsel %vm485, %v4970, 0
        %v5031 = vsel %vm485, %v4971, 0
        %v5034 = vsel %vm485, %v4972, 0
        %v5037 = vsel %vm485, %v4973, 0
        %v5040 = vsel %vm485, %v4974, 0
        %v5043 = vsel %vm485, %v4975, 0
        %v5046 = vsel %vm485, %v4976, 0
        %v5049 = vsel %vm485, %v4977, 0
        %5051 = vmatprep.subr.bf16.mxu0 %v5012
        %5052 = vmatpush1.bf16.msra.mxu0 %v5011
        %5053 = vmatprep.subr.bf16.mxu0 %v5014
        %5054 = vmatpush1.bf16.msra.mxu0 %v5013
        %5055 = vmatprep.subr.bf16.mxu0 %v5016
        %5056 = vmatpush1.bf16.msra.mxu0 %v5015
        %5057 = vmatprep.subr.bf16.mxu0 %v5018
        %5058 = vmatpush1.bf16.msra.mxu0 %v5017
        %5059 = vmatprep.subr.bf16.mxu0 0
        %5060 = vmatpush1.bf16.msra.mxu0 0
        %5061 = vmatprep.subr.bf16.mxu0 0
        %5062 = vmatpush1.bf16.msra.mxu0 0
        %5063 = vmatprep.subr.bf16.mxu0 0
        %5064 = vmatpush1.bf16.msra.mxu0 0
        %5065 = vmatprep.subr.bf16.mxu0 0
        %5066 = vmatpush1.bf16.msra.mxu0 0
        %5067 = vmatprep.subr.bf16.mxu0 0
        %5068 = vmatpush1.bf16.msra.mxu0 0
        %5069 = vmatprep.subr.bf16.mxu0 0
        %5070 = vmatpush1.bf16.msra.mxu0 0
        %5071 = vmatprep.subr.bf16.mxu0 0
        %5072 = vmatpush1.bf16.msra.mxu0 0
        %5073 = vmatprep.subr.bf16.mxu0 0
        %5074 = vmatpush1.bf16.msra.mxu0 0
        %5075 = vmatprep.subr.bf16.mxu0 0
        %5076 = vmatpush1.bf16.msra.mxu0 0
        %5077 = vmatprep.subr.bf16.mxu0 0
        %5078 = vmatpush1.bf16.msra.mxu0 0
        %5079 = vmatprep.subr.bf16.mxu0 0
        %5080 = vmatpush1.bf16.msra.mxu0 0
        %5081 = vmatprep.subr.bf16.mxu0 0
        %5082 = vmatpush1.bf16.msra.mxu0 0
        %5083 = vmatprep.mubr.bf16.mxu0 0
        %5084 = vmatmul.mubr.bf16.gmra.mrb[0].mxu0 %v5028
        %v5085 = vpop.f32.mrb[0].mxu0
        %v5086 = vadd.f32 0.0, %v5085
        %v5087 = vpop.f32.mrb[0].mxu0
        %v5088 = vadd.f32 0.0, %v5087
        %v5089 = vpop.f32.mrb[0].mxu0
        %v5090 = vadd.f32 0.0, %v5089
        %v5091 = vpop.f32.mrb[0].mxu0
        %v5092 = vadd.f32 0.0, %v5091
        %5093 = vmatprep.mubr.bf16.mxu0 0
        %5094 = vmatmul.mubr.bf16.gmra.mrb[0].mxu0 %v5031
        %v5095 = vpop.f32.mrb[0].mxu0
        %v5096 = vadd.f32 0.0, %v5095
        %v5097 = vpop.f32.mrb[0].mxu0
        %v5098 = vadd.f32 0.0, %v5097
        %v5099 = vpop.f32.mrb[0].mxu0
        %v5100 = vadd.f32 0.0, %v5099
        %v5101 = vpop.f32.mrb[0].mxu0
        %v5102 = vadd.f32 0.0, %v5101
        %5103 = vmatprep.mubr.bf16.mxu0 0
        %5104 = vmatmul.mubr.bf16.gmra.mrb[0].mxu0 %v5034
        %v5105 = vpop.f32.mrb[0].mxu0
        %v5106 = vadd.f32 0.0, %v5105
        %v5107 = vpop.f32.mrb[0].mxu0
        %v5108 = vadd.f32 0.0, %v5107
        %v5109 = vpop.f32.mrb[0].mxu0
        %v5110 = vadd.f32 0.0, %v5109
        %v5111 = vpop.f32.mrb[0].mxu0
        %v5112 = vadd.f32 0.0, %v5111
        %5113 = vmatprep.mubr.bf16.mxu0 0
        %5114 = vmatmul.mubr.bf16.gmra.mrb[0].mxu0 %v5037
        %v5115 = vpop.f32.mrb[0].mxu0
        %v5116 = vadd.f32 0.0, %v5115
        %v5117 = vpop.f32.mrb[0].mxu0
        %v5118 = vadd.f32 0.0, %v5117
        %v5119 = vpop.f32.mrb[0].mxu0
        %v5120 = vadd.f32 0.0, %v5119
        %v5121 = vpop.f32.mrb[0].mxu0
        %v5122 = vadd.f32 0.0, %v5121
        %5123 = vmatprep.mubr.bf16.mxu0 0
        %5124 = vmatmul.mubr.bf16.gmra.mrb[0].mxu0 %v5040
        %v5125 = vpop.f32.mrb[0].mxu0
        %v5126 = vadd.f32 0.0, %v5125
        %v5127 = vpop.f32.mrb[0].mxu0
        %v5128 = vadd.f32 0.0, %v5127
        %v5129 = vpop.f32.mrb[0].mxu0
        %v5130 = vadd.f32 0.0, %v5129
        %v5131 = vpop.f32.mrb[0].mxu0
        %v5132 = vadd.f32 0.0, %v5131
        %5133 = vmatprep.mubr.bf16.mxu0 0
        %5134 = vmatmul.mubr.bf16.gmra.mrb[0].mxu0 %v5043
        %v5135 = vpop.f32.mrb[0].mxu0
        %v5136 = vadd.f32 0.0, %v5135
        %v5137 = vpop.f32.mrb[0].mxu0
        %v5138 = vadd.f32 0.0, %v5137
        %v5139 = vpop.f32.mrb[0].mxu0
        %v5140 = vadd.f32 0.0, %v5139
        %v5141 = vpop.f32.mrb[0].mxu0
        %v5142 = vadd.f32 0.0, %v5141
        %5143 = vmatprep.mubr.bf16.mxu0 0
        %5144 = vmatmul.mubr.bf16.gmra.mrb[0].mxu0 %v5046
        %v5145 = vpop.f32.mrb[0].mxu0
        %v5146 = vadd.f32 0.0, %v5145
        %v5147 = vpop.f32.mrb[0].mxu0
        %v5148 = vadd.f32 0.0, %v5147
        %v5149 = vpop.f32.mrb[0].mxu0
        %v5150 = vadd.f32 0.0, %v5149
        %v5151 = vpop.f32.mrb[0].mxu0
        %v5152 = vadd.f32 0.0, %v5151
        %5153 = vmatprep.mubr.bf16.mxu0 0
        %5154 = vmatmul.mubr.bf16.gmra.mrb[0].mxu0 %v5049
        %v5155 = vpop.f32.mrb[0].mxu0
        %v5156 = vadd.f32 0.0, %v5155
        %v5157 = vpop.f32.mrb[0].mxu0
        %v5158 = vadd.f32 0.0, %v5157
        %v5159 = vpop.f32.mrb[0].mxu0
        %v5160 = vadd.f32 0.0, %v5159
        %v5161 = vpop.f32.mrb[0].mxu0
        %v5162 = vadd.f32 0.0, %v5161
        %5163 = vdwg.mxu0
        %v5164 = vmul.f32 %v5086, %v5086
        %v5165 = vmul.f32 %v5088, %v5088
        %v5166 = vmul.f32 %v5090, %v5090
        %v5167 = vmul.f32 %v5092, %v5092
        %v5168 = vmul.f32 %v5096, %v5096
        %v5169 = vmul.f32 %v5098, %v5098
        %v5170 = vmul.f32 %v5100, %v5100
        %v5171 = vmul.f32 %v5102, %v5102
        %v5172 = vmul.f32 %v5106, %v5106
        %v5173 = vmul.f32 %v5108, %v5108
        %v5174 = vmul.f32 %v5110, %v5110
        %v5175 = vmul.f32 %v5112, %v5112
        %v5176 = vmul.f32 %v5116, %v5116
        %v5177 = vmul.f32 %v5118, %v5118
        %v5178 = vmul.f32 %v5120, %v5120
        %v5179 = vmul.f32 %v5122, %v5122
        %v5180 = vmul.f32 %v5126, %v5126
        %v5181 = vmul.f32 %v5128, %v5128
        %v5182 = vmul.f32 %v5130, %v5130
        %v5183 = vmul.f32 %v5132, %v5132
        %v5184 = vmul.f32 %v5136, %v5136
        %v5185 = vmul.f32 %v5138, %v5138
        %v5186 = vmul.f32 %v5140, %v5140
        %v5187 = vmul.f32 %v5142, %v5142
        %v5188 = vmul.f32 %v5146, %v5146
        %v5189 = vmul.f32 %v5148, %v5148
        %v5190 = vmul.f32 %v5150, %v5150
        %v5191 = vmul.f32 %v5152, %v5152
        %v5192 = vmul.f32 %v5156, %v5156
        %v5193 = vmul.f32 %v5158, %v5158
        %v5194 = vmul.f32 %v5160, %v5160
        %v5195 = vmul.f32 %v5162, %v5162
        %v5196 = vmul.f32 %v5086, %v5164
        %v5197 = vmul.f32 %v5088, %v5165
        %v5198 = vmul.f32 %v5090, %v5166
        %v5199 = vmul.f32 %v5092, %v5167
        %v5200 = vmul.f32 %v5096, %v5168
        %v5201 = vmul.f32 %v5098, %v5169
        %v5202 = vmul.f32 %v5100, %v5170
        %v5203 = vmul.f32 %v5102, %v5171
        %v5204 = vmul.f32 %v5106, %v5172
        %v5205 = vmul.f32 %v5108, %v5173
        %v5206 = vmul.f32 %v5110, %v5174
        %v5207 = vmul.f32 %v5112, %v5175
        %v5208 = vmul.f32 %v5116, %v5176
        %v5209 = vmul.f32 %v5118, %v5177
        %v5210 = vmul.f32 %v5120, %v5178
        %v5211 = vmul.f32 %v5122, %v5179
        %v5212 = vmul.f32 %v5126, %v5180
        %v5213 = vmul.f32 %v5128, %v5181
        %v5214 = vmul.f32 %v5130, %v5182
        %v5215 = vmul.f32 %v5132, %v5183
        %v5216 = vmul.f32 %v5136, %v5184
        %v5217 = vmul.f32 %v5138, %v5185
        %v5218 = vmul.f32 %v5140, %v5186
        %v5219 = vmul.f32 %v5142, %v5187
        %v5220 = vmul.f32 %v5146, %v5188
        %v5221 = vmul.f32 %v5148, %v5189
        %v5222 = vmul.f32 %v5150, %v5190
        %v5223 = vmul.f32 %v5152, %v5191
        %v5224 = vmul.f32 %v5156, %v5192
        %v5225 = vmul.f32 %v5158, %v5193
        %v5226 = vmul.f32 %v5160, %v5194
        %v5227 = vmul.f32 %v5162, %v5195
        %v5228 = vmul.f32 %v5196, 0.044715
        %v5229 = vmul.f32 %v5197, 0.044715
        %v5230 = vmul.f32 %v5198, 0.044715
        %v5231 = vmul.f32 %v5199, 0.044715
        %v5232 = vmul.f32 %v5200, 0.044715
        %v5233 = vmul.f32 %v5201, 0.044715
        %v5234 = vmul.f32 %v5202, 0.044715
        %v5235 = vmul.f32 %v5203, 0.044715
        %v5236 = vmul.f32 %v5204, 0.044715
        %v5237 = vmul.f32 %v5205, 0.044715
        %v5238 = vmul.f32 %v5206, 0.044715
        %v5239 = vmul.f32 %v5207, 0.044715
        %v5240 = vmul.f32 %v5208, 0.044715
        %v5241 = vmul.f32 %v5209, 0.044715
        %v5242 = vmul.f32 %v5210, 0.044715
        %v5243 = vmul.f32 %v5211, 0.044715
        %v5244 = vmul.f32 %v5212, 0.044715
        %v5245 = vmul.f32 %v5213, 0.044715
        %v5246 = vmul.f32 %v5214, 0.044715
        %v5247 = vmul.f32 %v5215, 0.044715
        %v5248 = vmul.f32 %v5216, 0.044715
        %v5249 = vmul.f32 %v5217, 0.044715
        %v5250 = vmul.f32 %v5218, 0.044715
        %v5251 = vmul.f32 %v5219, 0.044715
        %v5252 = vmul.f32 %v5220, 0.044715
        %v5253 = vmul.f32 %v5221, 0.044715
        %v5254 = vmul.f32 %v5222, 0.044715
        %v5255 = vmul.f32 %v5223, 0.044715
        %v5256 = vmul.f32 %v5224, 0.044715
        %v5257 = vmul.f32 %v5225, 0.044715
        %v5258 = vmul.f32 %v5226, 0.044715
        %v5259 = vmul.f32 %v5227, 0.044715
        %v5260 = vadd.f32 %v5086, %v5228
        %v5261 = vadd.f32 %v5088, %v5229
        %v5262 = vadd.f32 %v5090, %v5230
        %v5263 = vadd.f32 %v5092, %v5231
        %v5264 = vadd.f32 %v5096, %v5232
        %v5265 = vadd.f32 %v5098, %v5233
        %v5266 = vadd.f32 %v5100, %v5234
        %v5267 = vadd.f32 %v5102, %v5235
        %v5268 = vadd.f32 %v5106, %v5236
        %v5269 = vadd.f32 %v5108, %v5237
        %v5270 = vadd.f32 %v5110, %v5238
        %v5271 = vadd.f32 %v5112, %v5239
        %v5272 = vadd.f32 %v5116, %v5240
        %v5273 = vadd.f32 %v5118, %v5241
        %v5274 = vadd.f32 %v5120, %v5242
        %v5275 = vadd.f32 %v5122, %v5243
        %v5276 = vadd.f32 %v5126, %v5244
        %v5277 = vadd.f32 %v5128, %v5245
        %v5278 = vadd.f32 %v5130, %v5246
        %v5279 = vadd.f32 %v5132, %v5247
        %v5280 = vadd.f32 %v5136, %v5248
        %v5281 = vadd.f32 %v5138, %v5249
        %v5282 = vadd.f32 %v5140, %v5250
        %v5283 = vadd.f32 %v5142, %v5251
        %v5284 = vadd.f32 %v5146, %v5252
        %v5285 = vadd.f32 %v5148, %v5253
        %v5286 = vadd.f32 %v5150, %v5254
        %v5287 = vadd.f32 %v5152, %v5255
        %v5288 = vadd.f32 %v5156, %v5256
        %v5289 = vadd.f32 %v5158, %v5257
        %v5290 = vadd.f32 %v5160, %v5258
        %v5291 = vadd.f32 %v5162, %v5259
        %v5292 = vmul.f32 %v5260, 0.7978846
        %v5293 = vmul.f32 %v5261, 0.7978846
        %v5294 = vmul.f32 %v5262, 0.7978846
        %v5295 = vmul.f32 %v5263, 0.7978846
        %v5296 = vmul.f32 %v5264, 0.7978846
        %v5297 = vmul.f32 %v5265, 0.7978846
        %v5298 = vmul.f32 %v5266, 0.7978846
        %v5299 = vmul.f32 %v5267, 0.7978846
        %v5300 = vmul.f32 %v5268, 0.7978846
        %v5301 = vmul.f32 %v5269, 0.7978846
        %v5302 = vmul.f32 %v5270, 0.7978846
        %v5303 = vmul.f32 %v5271, 0.7978846
        %v5304 = vmul.f32 %v5272, 0.7978846
        %v5305 = vmul.f32 %v5273, 0.7978846
        %v5306 = vmul.f32 %v5274, 0.7978846
        %v5307 = vmul.f32 %v5275, 0.7978846
        %v5308 = vmul.f32 %v5276, 0.7978846
        %v5309 = vmul.f32 %v5277, 0.7978846
        %v5310 = vmul.f32 %v5278, 0.7978846
        %v5311 = vmul.f32 %v5279, 0.7978846
        %v5312 = vmul.f32 %v5280, 0.7978846
        %v5313 = vmul.f32 %v5281, 0.7978846
        %v5314 = vmul.f32 %v5282, 0.7978846
        %v5315 = vmul.f32 %v5283, 0.7978846
        %v5316 = vmul.f32 %v5284, 0.7978846
        %v5317 = vmul.f32 %v5285, 0.7978846
        %v5318 = vmul.f32 %v5286, 0.7978846
        %v5319 = vmul.f32 %v5287, 0.7978846
        %v5320 = vmul.f32 %v5288, 0.7978846
        %v5321 = vmul.f32 %v5289, 0.7978846
        %v5322 = vmul.f32 %v5290, 0.7978846
        %v5323 = vmul.f32 %v5291, 0.7978846
        %v5324 = vtanh.pop %v5292
        %v5325 = vtanh.pop %v5293
        %v5326 = vtanh.pop %v5294
        %v5327 = vtanh.pop %v5295
        %v5328 = vtanh.pop %v5296
        %v5329 = vtanh.pop %v5297
        %v5330 = vtanh.pop %v5298
        %v5331 = vtanh.pop %v5299
        %v5332 = vtanh.pop %v5300
        %v5333 = vtanh.pop %v5301
        %v5334 = vtanh.pop %v5302
        %v5335 = vtanh.pop %v5303
        %v5336 = vtanh.pop %v5304
        %v5337 = vtanh.pop %v5305
        %v5338 = vtanh.pop %v5306
        %v5339 = vtanh.pop %v5307
        %v5340 = vtanh.pop %v5308
        %v5341 = vtanh.pop %v5309
        %v5342 = vtanh.pop %v5310
        %v5343 = vtanh.pop %v5311
        %v5344 = vtanh.pop %v5312
        %v5345 = vtanh.pop %v5313
        %v5346 = vtanh.pop %v5314
        %v5347 = vtanh.pop %v5315
        %v5348 = vtanh.pop %v5316
        %v5349 = vtanh.pop %v5317
        %v5350 = vtanh.pop %v5318
        %v5351 = vtanh.pop %v5319
        %v5352 = vtanh.pop %v5320
        %v5353 = vtanh.pop %v5321
        %v5354 = vtanh.pop %v5322
        %v5355 = vtanh.pop %v5323
        %v5356 = vadd.f32 %v5324, 1.0
        %v5357 = vadd.f32 %v5325, 1.0
        %v5358 = vadd.f32 %v5326, 1.0
        %v5359 = vadd.f32 %v5327, 1.0
        %v5360 = vadd.f32 %v5328, 1.0
        %v5361 = vadd.f32 %v5329, 1.0
        %v5362 = vadd.f32 %v5330, 1.0
        %v5363 = vadd.f32 %v5331, 1.0
        %v5364 = vadd.f32 %v5332, 1.0
        %v5365 = vadd.f32 %v5333, 1.0
        %v5366 = vadd.f32 %v5334, 1.0
        %v5367 = vadd.f32 %v5335, 1.0
        %v5368 = vadd.f32 %v5336, 1.0
        %v5369 = vadd.f32 %v5337, 1.0
        %v5370 = vadd.f32 %v5338, 1.0
        %v5371 = vadd.f32 %v5339, 1.0
        %v5372 = vadd.f32 %v5340, 1.0
        %v5373 = vadd.f32 %v5341, 1.0
        %v5374 = vadd.f32 %v5342, 1.0
        %v5375 = vadd.f32 %v5343, 1.0
        %v5376 = vadd.f32 %v5344, 1.0
        %v5377 = vadd.f32 %v5345, 1.0
        %v5378 = vadd.f32 %v5346, 1.0
        %v5379 = vadd.f32 %v5347, 1.0
        %v5380 = vadd.f32 %v5348, 1.0
        %v5381 = vadd.f32 %v5349, 1.0
        %v5382 = vadd.f32 %v5350, 1.0
        %v5383 = vadd.f32 %v5351, 1.0
        %v5384 = vadd.f32 %v5352, 1.0
        %v5385 = vadd.f32 %v5353, 1.0
        %v5386 = vadd.f32 %v5354, 1.0
        %v5387 = vadd.f32 %v5355, 1.0
        %v5388 = vmul.f32 %v5356, 0.5
        %v5389 = vmul.f32 %v5357, 0.5
        %v5390 = vmul.f32 %v5358, 0.5
        %v5391 = vmul.f32 %v5359, 0.5
        %v5392 = vmul.f32 %v5360, 0.5
        %v5393 = vmul.f32 %v5361, 0.5
        %v5394 = vmul.f32 %v5362, 0.5
        %v5395 = vmul.f32 %v5363, 0.5
        %v5396 = vmul.f32 %v5364, 0.5
        %v5397 = vmul.f32 %v5365, 0.5
        %v5398 = vmul.f32 %v5366, 0.5
        %v5399 = vmul.f32 %v5367, 0.5
        %v5400 = vmul.f32 %v5368, 0.5
        %v5401 = vmul.f32 %v5369, 0.5
        %v5402 = vmul.f32 %v5370, 0.5
        %v5403 = vmul.f32 %v5371, 0.5
        %v5404 = vmul.f32 %v5372, 0.5
        %v5405 = vmul.f32 %v5373, 0.5
        %v5406 = vmul.f32 %v5374, 0.5
        %v5407 = vmul.f32 %v5375, 0.5
        %v5408 = vmul.f32 %v5376, 0.5
        %v5409 = vmul.f32 %v5377, 0.5
        %v5410 = vmul.f32 %v5378, 0.5
        %v5411 = vmul.f32 %v5379, 0.5
        %v5412 = vmul.f32 %v5380, 0.5
        %v5413 = vmul.f32 %v5381, 0.5
        %v5414 = vmul.f32 %v5382, 0.5
        %v5415 = vmul.f32 %v5383, 0.5
        %v5416 = vmul.f32 %v5384, 0.5
        %v5417 = vmul.f32 %v5385, 0.5
        %v5418 = vmul.f32 %v5386, 0.5
        %v5419 = vmul.f32 %v5387, 0.5
        %v5420 = vmul.f32 %v5086, %v5388
        %v5421 = vmul.f32 %v5088, %v5389
        %v5422 = vmul.f32 %v5090, %v5390
        %v5423 = vmul.f32 %v5092, %v5391
        %v5424 = vmul.f32 %v5096, %v5392
        %v5425 = vmul.f32 %v5098, %v5393
        %v5426 = vmul.f32 %v5100, %v5394
        %v5427 = vmul.f32 %v5102, %v5395
        %v5428 = vmul.f32 %v5106, %v5396
        %v5429 = vmul.f32 %v5108, %v5397
        %v5430 = vmul.f32 %v5110, %v5398
        %v5431 = vmul.f32 %v5112, %v5399
        %v5432 = vmul.f32 %v5116, %v5400
        %v5433 = vmul.f32 %v5118, %v5401
        %v5434 = vmul.f32 %v5120, %v5402
        %v5435 = vmul.f32 %v5122, %v5403
        %v5436 = vmul.f32 %v5126, %v5404
        %v5437 = vmul.f32 %v5128, %v5405
        %v5438 = vmul.f32 %v5130, %v5406
        %v5439 = vmul.f32 %v5132, %v5407
        %v5440 = vmul.f32 %v5136, %v5408
        %v5441 = vmul.f32 %v5138, %v5409
        %v5442 = vmul.f32 %v5140, %v5410
        %v5443 = vmul.f32 %v5142, %v5411
        %v5444 = vmul.f32 %v5146, %v5412
        %v5445 = vmul.f32 %v5148, %v5413
        %v5446 = vmul.f32 %v5150, %v5414
        %v5447 = vmul.f32 %v5152, %v5415
        %v5448 = vmul.f32 %v5156, %v5416
        %v5449 = vmul.f32 %v5158, %v5417
        %v5450 = vmul.f32 %v5160, %v5418
        %v5451 = vmul.f32 %v5162, %v5419
        %v5452 = vpack.c.bf16 %v5422, %v5420
        %v5453 = vpack.c.bf16 %v5423, %v5421
        %v5454 = vpack.c.bf16 %v5426, %v5424
        %v5455 = vpack.c.bf16 %v5427, %v5425
        %v5456 = vpack.c.bf16 %v5430, %v5428
        %v5457 = vpack.c.bf16 %v5431, %v5429
        %v5458 = vpack.c.bf16 %v5434, %v5432
        %v5459 = vpack.c.bf16 %v5435, %v5433
        %v5460 = vpack.c.bf16 %v5438, %v5436
        %v5461 = vpack.c.bf16 %v5439, %v5437
        %v5462 = vpack.c.bf16 %v5442, %v5440
        %v5463 = vpack.c.bf16 %v5443, %v5441
        %v5464 = vpack.c.bf16 %v5446, %v5444
        %v5465 = vpack.c.bf16 %v5447, %v5445
        %v5466 = vpack.c.bf16 %v5450, %v5448
        %v5467 = vpack.c.bf16 %v5451, %v5449
        %s5468 = scalar_lea.vmem %s11, 128
        %v5469 = vld [vmem:[%s5468] sm:$0xf]
        %v5470 = vld [vmem:[%s5468 + $0x4] sm:$0xf]
        %v5471 = vld [vmem:[%s5468 + $0x8] sm:$0xf]
        %v5472 = vld [vmem:[%s5468 + $0xc] sm:$0xf]
        %v5473 = vld [vmem:[%s5468 + $0x10] sm:$0xf]
        %v5474 = vld [vmem:[%s5468 + $0x14] sm:$0xf]
        %v5475 = vld [vmem:[%s5468 + $0x18] sm:$0xf]
        %v5476 = vld [vmem:[%s5468 + $0x1c] sm:$0xf]
        %v5477 = vld [vmem:[%s5468 + $0x20] sm:$0xf]
        %v5478 = vld [vmem:[%s5468 + $0x24] sm:$0xf]
        %v5479 = vld [vmem:[%s5468 + $0x28] sm:$0xf]
        %v5480 = vld [vmem:[%s5468 + $0x2c] sm:$0xf]
        %v5481 = vld [vmem:[%s5468 + $0x30] sm:$0xf]
        %v5482 = vld [vmem:[%s5468 + $0x34] sm:$0xf]
        %v5483 = vld [vmem:[%s5468 + $0x38] sm:$0xf]
        %v5484 = vld [vmem:[%s5468 + $0x3c] sm:$0xf]
        %v5485 = vld [vmem:[%s5468 + $0x40] sm:$0xf]
        %v5486 = vld [vmem:[%s5468 + $0x44] sm:$0xf]
        %v5487 = vld [vmem:[%s5468 + $0x48] sm:$0xf]
        %v5488 = vld [vmem:[%s5468 + $0x4c] sm:$0xf]
        %v5489 = vld [vmem:[%s5468 + $0x50] sm:$0xf]
        %v5490 = vld [vmem:[%s5468 + $0x54] sm:$0xf]
        %v5491 = vld [vmem:[%s5468 + $0x58] sm:$0xf]
        %v5492 = vld [vmem:[%s5468 + $0x5c] sm:$0xf]
        %v5493 = vld [vmem:[%s5468 + $0x60] sm:$0xf]
        %v5494 = vld [vmem:[%s5468 + $0x64] sm:$0xf]
        %v5495 = vld [vmem:[%s5468 + $0x68] sm:$0xf]
        %v5496 = vld [vmem:[%s5468 + $0x6c] sm:$0xf]
        %v5497 = vld [vmem:[%s5468 + $0x70] sm:$0xf]
        %v5498 = vld [vmem:[%s5468 + $0x74] sm:$0xf]
        %v5499 = vld [vmem:[%s5468 + $0x78] sm:$0xf]
        %v5500 = vld [vmem:[%s5468 + $0x7c] sm:$0xf]
        %v5533 = vunpack.c.l.b16 %v5469
        %v5534 = vunpack.c.l.b16 %v5470
        %v5535 = vunpack.c.l.b16 %v5471
        %v5536 = vunpack.c.l.b16 %v5472
        %v5537 = vunpack.c.l.b16 %v5473
        %v5538 = vunpack.c.l.b16 %v5474
        %v5539 = vunpack.c.l.b16 %v5475
        %v5540 = vunpack.c.l.b16 %v5476
        %v5541 = vunpack.c.l.b16 %v5477
        %v5542 = vunpack.c.l.b16 %v5478
        %v5543 = vunpack.c.l.b16 %v5479
        %v5544 = vunpack.c.l.b16 %v5480
        %v5545 = vunpack.c.l.b16 %v5481
        %v5546 = vunpack.c.l.b16 %v5482
        %v5547 = vunpack.c.l.b16 %v5483
        %v5548 = vunpack.c.l.b16 %v5484
        %v5549 = vunpack.c.l.b16 %v5485
        %v5550 = vunpack.c.l.b16 %v5486
        %v5551 = vunpack.c.l.b16 %v5487
        %v5552 = vunpack.c.l.b16 %v5488
        %v5553 = vunpack.c.l.b16 %v5489
        %v5554 = vunpack.c.l.b16 %v5490
        %v5555 = vunpack.c.l.b16 %v5491
        %v5556 = vunpack.c.l.b16 %v5492
        %v5557 = vunpack.c.l.b16 %v5493
        %v5558 = vunpack.c.l.b16 %v5494
        %v5559 = vunpack.c.l.b16 %v5495
        %v5560 = vunpack.c.l.b16 %v5496
        %v5561 = vunpack.c.l.b16 %v5497
        %v5562 = vunpack.c.l.b16 %v5498
        %v5563 = vunpack.c.l.b16 %v5499
        %v5564 = vunpack.c.l.b16 %v5500
        %v5565 = vpack.c.b16 %v5534, %v5533
        %v5566 = vpack.c.b16 %v5536, %v5535
        %v5567 = vpack.c.b16 %v5538, %v5537
        %v5568 = vpack.c.b16 %v5540, %v5539
        %v5569 = vpack.c.b16 %v5542, %v5541
        %v5570 = vpack.c.b16 %v5544, %v5543
        %v5571 = vpack.c.b16 %v5546, %v5545
        %v5572 = vpack.c.b16 %v5548, %v5547
        %v5573 = vpack.c.b16 %v5550, %v5549
        %v5574 = vpack.c.b16 %v5552, %v5551
        %v5575 = vpack.c.b16 %v5554, %v5553
        %v5576 = vpack.c.b16 %v5556, %v5555
        %v5577 = vpack.c.b16 %v5558, %v5557
        %v5578 = vpack.c.b16 %v5560, %v5559
        %v5579 = vpack.c.b16 %v5562, %v5561
        %v5580 = vpack.c.b16 %v5564, %v5563
        %5597 = vmatprep.subr.bf16.mxu0 0
        %5598 = vmatpush1.bf16.msra.mxu0 %v5565
        %5599 = vmatprep.subr.bf16.mxu0 0
        %5600 = vmatpush1.bf16.msra.mxu0 %v5566
        %5601 = vmatprep.subr.bf16.mxu0 0
        %5602 = vmatpush1.bf16.msra.mxu0 %v5567
        %5603 = vmatprep.subr.bf16.mxu0 0
        %5604 = vmatpush1.bf16.msra.mxu0 %v5568
        %5605 = vmatprep.subr.bf16.mxu0 0
        %5606 = vmatpush1.bf16.msra.mxu0 %v5569
        %5607 = vmatprep.subr.bf16.mxu0 0
        %5608 = vmatpush1.bf16.msra.mxu0 %v5570
        %5609 = vmatprep.subr.bf16.mxu0 0
        %5610 = vmatpush1.bf16.msra.mxu0 %v5571
        %5611 = vmatprep.subr.bf16.mxu0 0
        %5612 = vmatpush1.bf16.msra.mxu0 %v5572
        %5613 = vmatprep.subr.bf16.mxu0 0
        %5614 = vmatpush1.bf16.msra.mxu0 %v5573
        %5615 = vmatprep.subr.bf16.mxu0 0
        %5616 = vmatpush1.bf16.msra.mxu0 %v5574
        %5617 = vmatprep.subr.bf16.mxu0 0
        %5618 = vmatpush1.bf16.msra.mxu0 %v5575
        %5619 = vmatprep.subr.bf16.mxu0 0
        %5620 = vmatpush1.bf16.msra.mxu0 %v5576
        %5621 = vmatprep.subr.bf16.mxu0 0
        %5622 = vmatpush1.bf16.msra.mxu0 %v5577
        %5623 = vmatprep.subr.bf16.mxu0 0
        %5624 = vmatpush1.bf16.msra.mxu0 %v5578
        %5625 = vmatprep.subr.bf16.mxu0 0
        %5626 = vmatpush1.bf16.msra.mxu0 %v5579
        %5627 = vmatprep.subr.bf16.mxu0 0
        %5628 = vmatpush1.bf16.msra.mxu0 %v5580
        %5629 = vmatprep.mubr.bf16.mxu0 %v5453
        %5630 = vmatmul.mubr.bf16.gmra.mrb[0].mxu0 %v5452
        %v5631 = vpop.f32.mrb[0].mxu0
        %v5632 = vadd.f32 %v4954, %v5631
        %v5633 = vpop.f32.mrb[0].mxu0
        %v5634 = vpop.f32.mrb[0].mxu0
        %v5635 = vadd.f32 %v4955, %v5634
        %v5636 = vpop.f32.mrb[0].mxu0
        %5637 = vmatprep.mubr.bf16.mxu0 %v5455
        %5638 = vmatmul.mubr.bf16.gmra.mrb[0].mxu0 %v5454
        %v5639 = vpop.f32.mrb[0].mxu0
        %v5640 = vadd.f32 %v4956, %v5639
        %v5641 = vpop.f32.mrb[0].mxu0
        %v5642 = vpop.f32.mrb[0].mxu0
        %v5643 = vadd.f32 %v4957, %v5642
        %v5644 = vpop.f32.mrb[0].mxu0
        %5645 = vmatprep.mubr.bf16.mxu0 %v5457
        %5646 = vmatmul.mubr.bf16.gmra.mrb[0].mxu0 %v5456
        %v5647 = vpop.f32.mrb[0].mxu0
        %v5648 = vadd.f32 %v4958, %v5647
        %v5649 = vpop.f32.mrb[0].mxu0
        %v5650 = vpop.f32.mrb[0].mxu0
        %v5651 = vadd.f32 %v4959, %v5650
        %v5652 = vpop.f32.mrb[0].mxu0
        %5653 = vmatprep.mubr.bf16.mxu0 %v5459
        %5654 = vmatmul.mubr.bf16.gmra.mrb[0].mxu0 %v5458
        %v5655 = vpop.f32.mrb[0].mxu0
        %v5656 = vadd.f32 %v4960, %v5655
        %v5657 = vpop.f32.mrb[0].mxu0
        %v5658 = vpop.f32.mrb[0].mxu0
        %v5659 = vadd.f32 %v4961, %v5658
        %v5660 = vpop.f32.mrb[0].mxu0
        %5661 = vmatprep.mubr.bf16.mxu0 %v5461
        %5662 = vmatmul.mubr.bf16.gmra.mrb[0].mxu0 %v5460
        %v5663 = vpop.f32.mrb[0].mxu0
        %v5664 = vadd.f32 %v4962, %v5663
        %v5665 = vpop.f32.mrb[0].mxu0
        %v5666 = vpop.f32.mrb[0].mxu0
        %v5667 = vadd.f32 %v4963, %v5666
        %v5668 = vpop.f32.mrb[0].mxu0
        %5669 = vmatprep.mubr.bf16.mxu0 %v5463
        %5670 = vmatmul.mubr.bf16.gmra.mrb[0].mxu0 %v5462
        %v5671 = vpop.f32.mrb[0].mxu0
        %v5672 = vadd.f32 %v4964, %v5671
        %v5673 = vpop.f32.mrb[0].mxu0
        %v5674 = vpop.f32.mrb[0].mxu0
        %v5675 = vadd.f32 %v4965, %v5674
        %v5676 = vpop.f32.mrb[0].mxu0
        %5677 = vmatprep.mubr.bf16.mxu0 %v5465
        %5678 = vmatmul.mubr.bf16.gmra.mrb[0].mxu0 %v5464
        %v5679 = vpop.f32.mrb[0].mxu0
        %v5680 = vadd.f32 %v4966, %v5679
        %v5681 = vpop.f32.mrb[0].mxu0
        %v5682 = vpop.f32.mrb[0].mxu0
        %v5683 = vadd.f32 %v4967, %v5682
        %v5684 = vpop.f32.mrb[0].mxu0
        %5685 = vmatprep.mubr.bf16.mxu0 %v5467
        %5686 = vmatmul.mubr.bf16.gmra.mrb[0].mxu0 %v5466
        %v5687 = vpop.f32.mrb[0].mxu0
        %v5688 = vadd.f32 %v4968, %v5687
        %v5689 = vpop.f32.mrb[0].mxu0
        %v5690 = vpop.f32.mrb[0].mxu0
        %v5691 = vadd.f32 %v4969, %v5690
        %v5692 = vpop.f32.mrb[0].mxu0
        %5693 = vdwg.mxu0
        %v5694 = vsel %vm485, %v5632, 0.0
        %v5695 = vrot.slane %v5694, 4
        %v5696 = vadd.f32 %v5694, %v5695
        %v5697 = vrot.slane %v5696, 2
        %v5698 = vadd.f32 %v5696, %v5697
        %v5699 = vrot.slane %v5698, 1
        %v5700 = vadd.f32 %v5698, %v5699
        %v5701 = vsel %vm485, %v5635, 0.0
        %v5702 = vrot.slane %v5701, 4
        %v5703 = vadd.f32 %v5701, %v5702
        %v5704 = vrot.slane %v5703, 2
        %v5705 = vadd.f32 %v5703, %v5704
        %v5706 = vrot.slane %v5705, 1
        %v5707 = vadd.f32 %v5705, %v5706
        %v5708 = vsel %vm485, %v5640, 0.0
        %v5709 = vrot.slane %v5708, 4
        %v5710 = vadd.f32 %v5708, %v5709
        %v5711 = vrot.slane %v5710, 2
        %v5712 = vadd.f32 %v5710, %v5711
        %v5713 = vrot.slane %v5712, 1
        %v5714 = vadd.f32 %v5712, %v5713
        %v5715 = vsel %vm485, %v5643, 0.0
        %v5716 = vrot.slane %v5715, 4
        %v5717 = vadd.f32 %v5715, %v5716
        %v5718 = vrot.slane %v5717, 2
        %v5719 = vadd.f32 %v5717, %v5718
        %v5720 = vrot.slane %v5719, 1
        %v5721 = vadd.f32 %v5719, %v5720
        %v5722 = vsel %vm485, %v5648, 0.0
        %v5723 = vrot.slane %v5722, 4
        %v5724 = vadd.f32 %v5722, %v5723
        %v5725 = vrot.slane %v5724, 2
        %v5726 = vadd.f32 %v5724, %v5725
        %v5727 = vrot.slane %v5726, 1
        %v5728 = vadd.f32 %v5726, %v5727
        %v5729 = vsel %vm485, %v5651, 0.0
        %v5730 = vrot.slane %v5729, 4
        %v5731 = vadd.f32 %v5729, %v5730
        %v5732 = vrot.slane %v5731, 2
        %v5733 = vadd.f32 %v5731, %v5732
        %v5734 = vrot.slane %v5733, 1
        %v5735 = vadd.f32 %v5733, %v5734
        %v5736 = vsel %vm485, %v5656, 0.0
        %v5737 = vrot.slane %v5736, 4
        %v5738 = vadd.f32 %v5736, %v5737
        %v5739 = vrot.slane %v5738, 2
        %v5740 = vadd.f32 %v5738, %v5739
        %v5741 = vrot.slane %v5740, 1
        %v5742 = vadd.f32 %v5740, %v5741
        %v5743 = vsel %vm485, %v5659, 0.0
        %v5744 = vrot.slane %v5743, 4
        %v5745 = vadd.f32 %v5743, %v5744
        %v5746 = vrot.slane %v5745, 2
        %v5747 = vadd.f32 %v5745, %v5746
        %v5748 = vrot.slane %v5747, 1
        %v5749 = vadd.f32 %v5747, %v5748
        %v5750 = vsel %vm485, %v5664, 0.0
        %v5751 = vrot.slane %v5750, 4
        %v5752 = vadd.f32 %v5750, %v5751
        %v5753 = vrot.slane %v5752, 2
        %v5754 = vadd.f32 %v5752, %v5753
        %v5755 = vrot.slane %v5754, 1
        %v5756 = vadd.f32 %v5754, %v5755
        %v5757 = vsel %vm485, %v5667, 0.0
        %v5758 = vrot.slane %v5757, 4
        %v5759 = vadd.f32 %v5757, %v5758
        %v5760 = vrot.slane %v5759, 2
        %v5761 = vadd.f32 %v5759, %v5760
        %v5762 = vrot.slane %v5761, 1
        %v5763 = vadd.f32 %v5761, %v5762
        %v5764 = vsel %vm485, %v5672, 0.0
        %v5765 = vrot.slane %v5764, 4
        %v5766 = vadd.f32 %v5764, %v5765
        %v5767 = vrot.slane %v5766, 2
        %v5768 = vadd.f32 %v5766, %v5767
        %v5769 = vrot.slane %v5768, 1
        %v5770 = vadd.f32 %v5768, %v5769
        %v5771 = vsel %vm485, %v5675, 0.0
        %v5772 = vrot.slane %v5771, 4
        %v5773 = vadd.f32 %v5771, %v5772
        %v5774 = vrot.slane %v5773, 2
        %v5775 = vadd.f32 %v5773, %v5774
        %v5776 = vrot.slane %v5775, 1
        %v5777 = vadd.f32 %v5775, %v5776
        %v5778 = vsel %vm485, %v5680, 0.0
        %v5779 = vrot.slane %v5778, 4
        %v5780 = vadd.f32 %v5778, %v5779
        %v5781 = vrot.slane %v5780, 2
        %v5782 = vadd.f32 %v5780, %v5781
        %v5783 = vrot.slane %v5782, 1
        %v5784 = vadd.f32 %v5782, %v5783
        %v5785 = vsel %vm485, %v5683, 0.0
        %v5786 = vrot.slane %v5785, 4
        %v5787 = vadd.f32 %v5785, %v5786
        %v5788 = vrot.slane %v5787, 2
        %v5789 = vadd.f32 %v5787, %v5788
        %v5790 = vrot.slane %v5789, 1
        %v5791 = vadd.f32 %v5789, %v5790
        %v5792 = vsel %vm485, %v5688, 0.0
        %v5793 = vrot.slane %v5792, 4
        %v5794 = vadd.f32 %v5792, %v5793
        %v5795 = vrot.slane %v5794, 2
        %v5796 = vadd.f32 %v5794, %v5795
        %v5797 = vrot.slane %v5796, 1
        %v5798 = vadd.f32 %v5796, %v5797
        %v5799 = vsel %vm485, %v5691, 0.0
        %v5800 = vrot.slane %v5799, 4
        %v5801 = vadd.f32 %v5799, %v5800
        %v5802 = vrot.slane %v5801, 2
        %v5803 = vadd.f32 %v5801, %v5802
        %v5804 = vrot.slane %v5803, 1
        %v5805 = vadd.f32 %v5803, %v5804
        %v5806 = vrcp.pop 8.0
        %v5807 = vmul.f32 %v5700, %v5806
        %v5808 = vmul.f32 %v5707, %v5806
        %v5809 = vmul.f32 %v5714, %v5806
        %v5810 = vmul.f32 %v5721, %v5806
        %v5811 = vmul.f32 %v5728, %v5806
        %v5812 = vmul.f32 %v5735, %v5806
        %v5813 = vmul.f32 %v5742, %v5806
        %v5814 = vmul.f32 %v5749, %v5806
        %v5815 = vmul.f32 %v5756, %v5806
        %v5816 = vmul.f32 %v5763, %v5806
        %v5817 = vmul.f32 %v5770, %v5806
        %v5818 = vmul.f32 %v5777, %v5806
        %v5819 = vmul.f32 %v5784, %v5806
        %v5820 = vmul.f32 %v5791, %v5806
        %v5821 = vmul.f32 %v5798, %v5806
        %v5822 = vmul.f32 %v5805, %v5806
        %v5823 = vpack.c.bf16 %v5807, %v5807
        %v5824 = vpack.c.bf16 %v5808, %v5808
        %v5825 = vpack.c.bf16 %v5809, %v5809
        %v5826 = vpack.c.bf16 %v5810, %v5810
        %v5827 = vpack.c.bf16 %v5811, %v5811
        %v5828 = vpack.c.bf16 %v5812, %v5812
        %v5829 = vpack.c.bf16 %v5813, %v5813
        %v5830 = vpack.c.bf16 %v5814, %v5814
        %v5831 = vpack.c.bf16 %v5815, %v5815
        %v5832 = vpack.c.bf16 %v5816, %v5816
        %v5833 = vpack.c.bf16 %v5817, %v5817
        %v5834 = vpack.c.bf16 %v5818, %v5818
        %v5835 = vpack.c.bf16 %v5819, %v5819
        %v5836 = vpack.c.bf16 %v5820, %v5820
        %v5837 = vpack.c.bf16 %v5821, %v5821
        %v5838 = vpack.c.bf16 %v5822, %v5822
        %v5839 = vld [vmem:[%s12] sm:$0xf]
        %v5840 = vld [vmem:[%s12 + $0x4] sm:$0xf]
        %v5841 = vld [vmem:[%s12 + $0x8] sm:$0xf]
        %v5842 = vld [vmem:[%s12 + $0xc] sm:$0xf]
        %v5843 = vld [vmem:[%s12 + $0x10] sm:$0xf]
        %v5844 = vld [vmem:[%s12 + $0x14] sm:$0xf]
        %v5845 = vld [vmem:[%s12 + $0x18] sm:$0xf]
        %v5846 = vld [vmem:[%s12 + $0x1c] sm:$0xf]
        %v5847 = vld [vmem:[%s13] sm:$0x1]
        %v5849 = vlaneseq
        %v5850 = vshrl.u32 %v5849, 7
        %v5851 = vsub.s32 0, %v5850
        %v5852 = vrot.slane %v5847, %v5851
        %v5870 = vunpack.c.l.b16 %v5823
        %v5871 = vunpack.c.l.b16 %v5824
        %v5872 = vunpack.c.l.b16 %v5825
        %v5873 = vunpack.c.l.b16 %v5826
        %v5874 = vunpack.c.l.b16 %v5827
        %v5875 = vunpack.c.l.b16 %v5828
        %v5876 = vunpack.c.l.b16 %v5829
        %v5877 = vunpack.c.l.b16 %v5830
        %v5878 = vunpack.c.l.b16 %v5831
        %v5879 = vunpack.c.l.b16 %v5832
        %v5880 = vunpack.c.l.b16 %v5833
        %v5881 = vunpack.c.l.b16 %v5834
        %v5882 = vunpack.c.l.b16 %v5835
        %v5883 = vunpack.c.l.b16 %v5836
        %v5884 = vunpack.c.l.b16 %v5837
        %v5885 = vunpack.c.l.b16 %v5838
        %vm5886 = vcmask 1041409
        %v5887 = vsel %vm5886, %v5871, %v5870
        %vm5888 = vcmask 1042434
        %v5889 = vsel %vm5888, %v5872, %v5887
        %vm5890 = vcmask 1043459
        %v5891 = vsel %vm5890, %v5873, %v5889
        %vm5892 = vcmask 1044484
        %v5893 = vsel %vm5892, %v5874, %v5891
        %vm5894 = vcmask 1045509
        %v5895 = vsel %vm5894, %v5875, %v5893
        %vm5896 = vcmask 1046534
        %v5897 = vsel %vm5896, %v5876, %v5895
        %vm5898 = vcmask 1047559
        %v5899 = vsel %vm5898, %v5877, %v5897
        %v5900 = vsel %vm5886, %v5879, %v5878
        %v5901 = vsel %vm5888, %v5880, %v5900
        %v5902 = vsel %vm5890, %v5881, %v5901
        %v5903 = vsel %vm5892, %v5882, %v5902
        %v5904 = vsel %vm5894, %v5883, %v5903
        %v5905 = vsel %vm5896, %v5884, %v5904
        %v5906 = vsel %vm5898, %v5885, %v5905
        %v5907 = vpack.c.b16 %v5906, %v5899
        %v5916 = vunpack.c.l.b16 %v5839
        %v5917 = vunpack.c.l.b16 %v5840
        %v5918 = vunpack.c.l.b16 %v5841
        %v5919 = vunpack.c.l.b16 %v5842
        %v5920 = vunpack.c.l.b16 %v5843
        %v5921 = vunpack.c.l.b16 %v5844
        %v5922 = vunpack.c.l.b16 %v5845
        %v5923 = vunpack.c.l.b16 %v5846
        %v5924 = vpack.c.b16 %v5917, %v5916
        %v5925 = vpack.c.b16 %v5919, %v5918
        %v5926 = vpack.c.b16 %v5921, %v5920
        %v5927 = vpack.c.b16 %v5923, %v5922
        %v5933 = vsel %vm485, %v5907, 0
        %5935 = vmatprep.subr.bf16.mxu0 0
        %5936 = vmatpush1.bf16.msra.mxu0 %v5924
        %5937 = vmatprep.subr.bf16.mxu0 0
        %5938 = vmatpush1.bf16.msra.mxu0 %v5925
        %5939 = vmatprep.subr.bf16.mxu0 0
        %5940 = vmatpush1.bf16.msra.mxu0 %v5926
        %5941 = vmatprep.subr.bf16.mxu0 0
        %5942 = vmatpush1.bf16.msra.mxu0 %v5927
        %5943 = vmatprep.subr.bf16.mxu0 0
        %5944 = vmatpush1.bf16.msra.mxu0 0
        %5945 = vmatprep.subr.bf16.mxu0 0
        %5946 = vmatpush1.bf16.msra.mxu0 0
        %5947 = vmatprep.subr.bf16.mxu0 0
        %5948 = vmatpush1.bf16.msra.mxu0 0
        %5949 = vmatprep.subr.bf16.mxu0 0
        %5950 = vmatpush1.bf16.msra.mxu0 0
        %5951 = vmatprep.subr.bf16.mxu0 0
        %5952 = vmatpush1.bf16.msra.mxu0 0
        %5953 = vmatprep.subr.bf16.mxu0 0
        %5954 = vmatpush1.bf16.msra.mxu0 0
        %5955 = vmatprep.subr.bf16.mxu0 0
        %5956 = vmatpush1.bf16.msra.mxu0 0
        %5957 = vmatprep.subr.bf16.mxu0 0
        %5958 = vmatpush1.bf16.msra.mxu0 0
        %5959 = vmatprep.subr.bf16.mxu0 0
        %5960 = vmatpush1.bf16.msra.mxu0 0
        %5961 = vmatprep.subr.bf16.mxu0 0
        %5962 = vmatpush1.bf16.msra.mxu0 0
        %5963 = vmatprep.subr.bf16.mxu0 0
        %5964 = vmatpush1.bf16.msra.mxu0 0
        %5965 = vmatprep.subr.bf16.mxu0 0
        %5966 = vmatpush1.bf16.msra.mxu0 0
        %5967 = vmatprep.mubr.bf16.mxu0 0
        %5968 = vmatmul.mubr.bf16.gmra.mrb[0].mxu0 %v5933
        %v5969 = vpop.f32.mrb[0].mxu0
        %v5970 = vadd.f32 %v5852, %v5969
        %v5971 = vpop.f32.mrb[0].mxu0
        %v5972 = vpop.f32.mrb[0].mxu0
        %v5973 = vadd.f32 %v5852, %v5972
        %v5974 = vpop.f32.mrb[0].mxu0
        %5975 = vdwg.mxu0
        %v5976 = vmul.f32 %v5970, %v5970
        %v5977 = vmul.f32 %v5973, %v5973
        %v5978 = vmul.f32 %v5970, %v5976
        %v5979 = vmul.f32 %v5973, %v5977
        %v5980 = vmul.f32 %v5978, 0.044715
        %v5981 = vmul.f32 %v5979, 0.044715
        %v5982 = vadd.f32 %v5970, %v5980
        %v5983 = vadd.f32 %v5973, %v5981
        %v5984 = vmul.f32 %v5982, 0.7978846
        %v5985 = vmul.f32 %v5983, 0.7978846
        %v5986 = vtanh.pop %v5984
        %v5987 = vtanh.pop %v5985
        %v5988 = vadd.f32 %v5986, 1.0
        %v5989 = vadd.f32 %v5987, 1.0
        %v5990 = vmul.f32 %v5988, 0.5
        %v5991 = vmul.f32 %v5989, 0.5
        %v5992 = vmul.f32 %v5970, %v5990
        %v5993 = vmul.f32 %v5973, %v5991
        %5994 = vst [vmem:[%s460] sm:$0xff] %v5992
        %5995 = vst [vmem:[%s460 + $0x8] sm:$0xff] %v5993
        %s5996 = sand.u32 %s335, 1
        %s5997 = scalar_lea.sflag [#allocation3], %s5996
        %s5998 = sand.u32 %s335, 1
        %s5999 = smul.addr %s5998, 16
        %s6000 = scalar_lea.vmem [#allocation2], %s5999
        // Predicated region
        $region77: #{tpu_custom_call.1} parent=75 // pred_check
          %p6001 = pneg %p345
        $region78: #{tpu_custom_call.1} parent=75 // pred_check_branch
          %6003 = sbr.rel (%p6001) target = $region80
        $region79: #{tpu_custom_call.1} parent=75 // pred_region
          %s6005 = ssub.s32 256, 256
          %6006 = vsyncadd %s5997, %s6005
          %s6007 = smul.addr %s28, 2
          %s6008 = smul.addr %s6007, 128
          %s6009 = scalar_lea.hbm %s14, %s6008
          %s6010 = sshll.u32 %s6000, 4
          %s6011 = int_to_ptr.vmem [resolvable:$true] %s6010
          %6016 = dma.vmem_to_hbm [thread:$0]  %s6011, 256, %s6009, %s5997, 128, 128, 8
        $region80: #{tpu_custom_call.1} parent=75 // pred_fallthru
          _
      $region76: #{tpu_custom_call.1} parent=5 // pred_fallthru
        _
      %p6017 = scmp.le.s32.totalorder 2, %s23
      // Predicated region
      $region81: #{tpu_custom_call.1} parent=5 // pred_check
        %p6018 = pneg %p6017
      $region82: #{tpu_custom_call.1} parent=5 // pred_check_branch
        %6020 = sbr.rel (%p6018) target = $region84
      $region83: #{tpu_custom_call.1} parent=5 // pred_region
        %s6021 = ssub.s32 %s23, 2
        // Predicated region
        $region85: #{tpu_custom_call.1} parent=83 // pred_check
          %p6022 = pneg %p351
        $region86: #{tpu_custom_call.1} parent=83 // pred_check_branch
          %6024 = sbr.rel (%p6022) target = $region88
        $region87: #{tpu_custom_call.1} parent=83 // pred_region
          %s6025 = sand.u32 %s336, 1
          %s6026 = scalar_lea.sflag [#allocation3], %s6025
          %s6027 = sand.u32 %s336, 1
          %s6028 = smul.addr %s6027, 16
          %s6029 = scalar_lea.vmem [#allocation2], %s6028
          %6030 = dma.done %s6026, 256
        $region88: #{tpu_custom_call.1} parent=83 // pred_fallthru
          _
      $region84: #{tpu_custom_call.1} parent=5 // pred_fallthru
        _
    $region6: #{tpu_custom_call.1} parent=1 // loop_footer
      %s27 = sadd.s32 1, %s23
    $region7: #{tpu_custom_call.1} parent=1 // loop_footer_branch
      %22 = sbr.rel target = $region3
    $region8: #{tpu_custom_call.1} parent=1 // loop_exit
      _
    %6031 = vsyncpa [#allocation3], 1
    %s6032 = scalar_lea.sflag [#allocation3], 1
    %6033 = vsyncpa %s6032, 1

</llo_original>
